<compile_context>
chip_gen: v7x
topology: tpu7x:2x2x1
jax: 0.10.0
libtpu: 0.0.40
codegen_flags: <defaults>
</compile_context>

<pallas_src>
import functools

import jax
import jax.numpy as jnp
from jax.experimental import pallas as pl
from jax.experimental.pallas import tpu as pltpu


# ----------------------------- Pallas kernel ------------------------------ #
def _eges_kernel(*refs, feature_lens, l_max, num_nodes, with_context):
    """Fused embedding gather + (pre-folded) attention reduction [+ ctx gather].

    refs (with_context=True):
        idx_ref     : (TB, F+1) i32   raw indices, col F = context index
        slab_ref    : (FLpad, D) bf16 attention-scaled, zero-padded table slab
        node_ref    : (NPpad, D) f32  zero-padded node-embedding table
        out_ref     : (TB, D)   f32   node embeddings
        ctx_out_ref : (TB, D)   f32   context embeddings
    refs (with_context=False): idx_ref (TB, F), slab_ref, out_ref.
    """
    if with_context:
        idx_ref, slab_ref, node_ref, out_ref, ctx_out_ref = refs
    else:
        idx_ref, slab_ref, out_ref = refs

    tb = out_ref.shape[0]
    nf = len(feature_lens)
    flpad = slab_ref.shape[0]

    cols = jax.lax.broadcasted_iota(jnp.int32, (tb, flpad), 1)   # (TB, FLpad)

    # Per-feature clamp (torch.clamp semantics) + globalize into the slab,
    # then OR the per-feature one-hot masks (feature row-ranges are disjoint,
    # so OR == sum and the combined mask is an exact 0/1 selector).
    mask = None
    for f in range(nf):
        g = jnp.clip(idx_ref[:, f:f + 1], 0, feature_lens[f] - 1) + f * l_max
        sel = cols == g
        mask = sel if mask is None else jnp.logical_or(mask, sel)
    onehot = jnp.where(mask, 1.0, 0.0).astype(jnp.bfloat16)       # exact 0/1

    # Attention is already folded into the bf16 slab -> single bf16 MXU pass.
    out_ref[...] = jnp.dot(onehot, slab_ref[...],
                           preferred_element_type=jnp.float32)

    if with_context:
        npad = node_ref.shape[0]
        ccols = jax.lax.broadcasted_iota(jnp.int32, (tb, npad), 1)
        cg = jnp.clip(idx_ref[:, nf:nf + 1], 0, num_nodes - 1)
        csel = jnp.where(ccols == cg, 1.0, 0.0)                   # exact 0/1 f32
        # HIGHEST with an exact 0/1 LHS reproduces the f32 table rows exactly
        # (pure row gather); the matmul is tiny so the extra passes are free.
        ctx_out_ref[...] = jnp.dot(csel, node_ref[...],
                                   preferred_element_type=jnp.float32,
                                   precision=jax.lax.Precision.HIGHEST)


def _eges_pallas(idx, slab, node_slab, *, feature_lens, l_max, num_nodes,
                 tile_b, with_context):
    bp, idx_w = idx.shape
    flpad, d = slab.shape
    grid = (bp // tile_b,)

    kern = functools.partial(_eges_kernel,
                             feature_lens=tuple(feature_lens),
                             l_max=l_max, num_nodes=num_nodes,
                             with_context=with_context)

    in_specs = [
        pl.BlockSpec((tile_b, idx_w), lambda i: (i, 0)),   # raw indices
        pl.BlockSpec((flpad, d), lambda i: (0, 0)),        # table slab (const)
    ]
    operands = [idx, slab]
    if with_context:
        in_specs.append(pl.BlockSpec(node_slab.shape, lambda i: (0, 0)))
        operands.append(node_slab)
        out_shape = (jax.ShapeDtypeStruct((bp, d), jnp.float32),
                     jax.ShapeDtypeStruct((bp, d), jnp.float32))
        out_specs = [pl.BlockSpec((tile_b, d), lambda i: (i, 0)),
                     pl.BlockSpec((tile_b, d), lambda i: (i, 0))]
    else:
        out_shape = jax.ShapeDtypeStruct((bp, d), jnp.float32)
        out_specs = pl.BlockSpec((tile_b, d), lambda i: (i, 0))

    return pl.pallas_call(
        kern,
        out_shape=out_shape,
        grid_spec=pltpu.PrefetchScalarGridSpec(
            num_scalar_prefetch=0,
            grid=grid,
            in_specs=in_specs,
            out_specs=out_specs,
        ),
        compiler_params=pltpu.CompilerParams(
            dimension_semantics=("parallel",)),
    )(*operands)


# ------------------------- Tile-size selection ----------------------------- #
def _pick_tile_b(batch):
    """>= 2 grid steps on v7x (2 TensorCores); one big tile on v5e/v6e."""
    bp = pl.cdiv(batch, 128) * 128
    try:
        kind = jax.devices()[0].device_kind.lower()
    except Exception:  # pragma: no cover - defensive
        kind = ""
    two_tc = ("v7" in kind) or ("7x" in kind)
    if two_tc and bp >= 256:
        return min(((bp // 2 + 127) // 128) * 128, 2048)
    return min(bp, 1024)


# --------------------------- Parameter creation ---------------------------- #
def init_eges_params(key, num_nodes, num_feat, feature_lens, embedding_dim):
    keys = jax.random.split(key, num_feat + 5)
    params = {}
    tables = []
    for i in range(num_feat):
        bound = (6.0 / (feature_lens[i] + embedding_dim)) ** 0.5
        tables.append(jax.random.uniform(
            keys[i], (feature_lens[i], embedding_dim),
            minval=-bound, maxval=bound, dtype=jnp.float32))
    params["embed_tables"] = tables

    # Attention MLP: Linear(F, F) -> ReLU -> Linear(F, F) -> Softmax.
    bound = (1.0 / num_feat) ** 0.5
    params["w1"] = jax.random.uniform(keys[num_feat], (num_feat, num_feat),
                                      minval=-bound, maxval=bound,
                                      dtype=jnp.float32)
    params["b1"] = jax.random.uniform(keys[num_feat + 1], (1, num_feat),
                                      minval=-bound, maxval=bound,
                                      dtype=jnp.float32)
    params["w2"] = jax.random.uniform(keys[num_feat + 2], (num_feat, num_feat),
                                      minval=-bound, maxval=bound,
                                      dtype=jnp.float32)
    params["b2"] = jax.random.uniform(keys[num_feat + 3], (1, num_feat),
                                      minval=-bound, maxval=bound,
                                      dtype=jnp.float32)

    bound = (6.0 / (num_nodes + embedding_dim)) ** 0.5
    params["node_table"] = jax.random.uniform(
        keys[num_feat + 4], (num_nodes, embedding_dim),
        minval=-bound, maxval=bound, dtype=jnp.float32)
    return params


# --------------------- One-time per-parameter-set prep ---------------------- #
def prepare_eges(params, feature_lens):
    """Build cached kernel operands (call once per parameter set).

    * attn: the attention MLP input is arange(F) broadcast over the batch, so
      the softmax weights are identical for every row -> compute once here.
    * slab: per-feature tables scaled by attn[f], row-stacked with each
      feature padded to l_max rows, zero-padded to a multiple of 128 rows,
      stored in bf16 (the MXU operand dtype).
    * node_slab: node-embedding table zero-padded to a multiple of 128 rows,
      kept in f32 (context gather must be exact).
    """
    tables = params["embed_tables"]
    nf = len(tables)

    feat_ids = jnp.arange(nf, dtype=jnp.float32)[None, :]           # (1, F)
    h = jnp.maximum(feat_ids @ params["w1"] + params["b1"], 0.0)
    attn = jax.nn.softmax(h @ params["w2"] + params["b2"], axis=1)  # (1, F)

    l_max = max(feature_lens)
    fl = nf * l_max
    fl_pad = max(128, pl.cdiv(fl, 128) * 128)
    slabs = []
    for f in range(nf):
        t = tables[f] * attn[0, f]               # fold attention into the rows
        slabs.append(jnp.pad(t, ((0, l_max - t.shape[0]), (0, 0))))
    slab = jnp.concatenate(slabs, axis=0)
    slab = jnp.pad(slab, ((0, fl_pad - fl), (0, 0))).astype(jnp.bfloat16)

    node_table = params["node_table"]
    num_nodes = node_table.shape[0]
    n_pad = max(128, pl.cdiv(num_nodes, 128) * 128)
    node_slab = jnp.pad(node_table,
                        ((0, n_pad - num_nodes), (0, 0))).astype(jnp.float32)

    return {"slab": slab, "node_slab": node_slab}


# ------------------------------ Forward pass ------------------------------- #
@functools.partial(jax.jit, static_argnames=("feature_lens", "num_nodes",
                                              "with_context", "tile_b"))
def eges_forward(prepared, inputs, context_indices=None, *,
                 feature_lens, num_nodes, with_context=False, tile_b=None):
    """inputs: list of num_feat int32 arrays, each (B,)."""
    nf = len(feature_lens)
    l_max = max(feature_lens)
    b = inputs[0].shape[0]

    if tile_b is None:
        tile_b = _pick_tile_b(b)

    # Single (B, F[+1]) int32 index slab; clamp/offset happen in the kernel.
    idx = jnp.stack([x.astype(jnp.int32) for x in inputs], axis=1)    # (B, F)
    if with_context:
        idx = jnp.concatenate(
            [idx, context_indices.astype(jnp.int32)[:, None]], axis=1)

    # Pad the batch to a whole number of tiles (ragged-safe; sliced off below).
    bp = pl.cdiv(b, tile_b) * tile_b
    if bp != b:
        idx = jnp.pad(idx, ((0, bp - b), (0, 0)))

    outs = _eges_pallas(idx, prepared["slab"], prepared["node_slab"],
                        feature_lens=feature_lens, l_max=l_max,
                        num_nodes=num_nodes, tile_b=tile_b,
                        with_context=with_context)
    if with_context:
        node, ctx = outs
        return node[:b], ctx[:b]
    return outs[:b]


# --------------------------- Reference (pure JAX) -------------------------- #
def eges_forward_ref(params, inputs, context_indices=None):
    tables = params["embed_tables"]
    nf = len(tables)
    b = inputs[0].shape[0]
    embeds = [tables[f][jnp.clip(inputs[f], 0, tables[f].shape[0] - 1)]
              for f in range(nf)]
    stacked = jnp.stack(embeds, axis=2)                        # (B, D, F)
    feat_ids = jnp.broadcast_to(jnp.arange(nf, dtype=jnp.float32), (b, nf))
    h = jnp.maximum(feat_ids @ params["w1"] + params["b1"], 0.0)
    attn = jax.nn.softmax(h @ params["w2"] + params["b2"], axis=1)   # (B, F)
    node = (stacked * attn[:, None, :]).sum(axis=2)            # exact f32 VPU
    if context_indices is not None:
        node_table = params["node_table"]
        ctx = node_table[jnp.clip(context_indices, 0, node_table.shape[0] - 1)]
        return node, ctx
    return node


# ----------------------------------- Main ---------------------------------- #
if __name__ == "__main__":
    num_nodes = 50
    num_feat = 4
    feature_lens = (11, 7, 5, 13)
    embedding_dim = 128      # module default; lane-dense output width
    batch = 200              # non-multiple of 128 -> exercises ragged padding

    key = jax.random.PRNGKey(0)
    pkey, ikey, ckey = jax.random.split(key, 3)
    params = init_eges_params(pkey, num_nodes, num_feat, list(feature_lens),
                              embedding_dim)

    # One-time, per-parameter-set cache of the kernel operands.
    prepared = prepare_eges(params, feature_lens)

    ikeys = jax.random.split(ikey, num_feat)
    # Allow slightly out-of-range indices to exercise the clamping path.
    inputs = [
        jax.random.randint(ikeys[i], (batch,), -1, feature_lens[i] + 2,
                           dtype=jnp.int32)
        for i in range(num_feat)
    ]
    context_indices = jax.random.randint(ckey, (batch,), -1, num_nodes + 3,
                                         dtype=jnp.int32)

    node_emb, ctx_emb = eges_forward(prepared, inputs, context_indices,
                                     feature_lens=feature_lens,
                                     num_nodes=num_nodes, with_context=True)
    node_emb = jax.block_until_ready(node_emb)
    ctx_emb = jax.block_until_ready(ctx_emb)

    node_only = eges_forward(prepared, inputs,
                             feature_lens=feature_lens, num_nodes=num_nodes,
                             with_context=False)
    node_only = jax.block_until_ready(node_only)

    ref_node, ref_ctx = eges_forward_ref(params, inputs, context_indices)
    assert node_emb.shape == (batch, embedding_dim)
    assert ctx_emb.shape == (batch, embedding_dim)
    assert jnp.allclose(node_emb, ref_node, atol=1e-3, rtol=1e-3)
    assert jnp.allclose(node_only, ref_node, atol=1e-3, rtol=1e-3)
    assert jnp.allclose(ctx_emb, ref_ctx, atol=1e-5, rtol=1e-5)

    print("KERNEL_OK")
</pallas_src>

<mosaic_0001>
module attributes {stable_mosaic.version = 11 : i64} {
  func.func @_eges_kernel(%arg0: i32, %arg1: memref<256x5xi32, #tpu.memory_space<vmem>>, %arg2: memref<128x128xbf16, #tpu.memory_space<vmem>>, %arg3: memref<128x128xf32, #tpu.memory_space<vmem>>, %arg4: memref<256x128xf32, #tpu.memory_space<vmem>>, %arg5: memref<256x128xf32, #tpu.memory_space<vmem>>) attributes {dimension_semantics = [#tpu.dimension_semantics<parallel>], iteration_bounds = array<i64: 1>, scalar_prefetch = 0 : i64, scratch_operands = 0 : i64, tpu.core_type = #tpu.core_type<tc>, window_params = [{transform_indices = @transform_0, window_bounds = array<i64: 256, 5>}, {pipeline_mode = #tpu.pipeline_mode<synchronous>, transform_indices = @transform_1, window_bounds = array<i64: 128, 128>}, {pipeline_mode = #tpu.pipeline_mode<synchronous>, transform_indices = @transform_2, window_bounds = array<i64: 128, 128>}, {transform_indices = @transform_3, window_bounds = array<i64: 256, 128>}, {transform_indices = @transform_4, window_bounds = array<i64: 256, 128>}]} {
    %0 = tpu.iota {dimensions = array<i32: 1>} : vector<256x128xi32>
    %c0 = arith.constant 0 : index
    %c0_0 = arith.constant 0 : index
    %1 = vector.load %arg1[%c0, %c0_0] : memref<256x5xi32, #tpu.memory_space<vmem>>, vector<256x1xi32>
    %c0_i32 = arith.constant 0 : i32
    %c10_i32 = arith.constant 10 : i32
    %2 = vector.broadcast %c0_i32 : i32 to vector<256x1xi32>
    %3 = arith.maxsi %2, %1 : vector<256x1xi32>
    %4 = vector.broadcast %c10_i32 : i32 to vector<256x1xi32>
    %5 = arith.minsi %4, %3 : vector<256x1xi32>
    %c0_i32_1 = arith.constant 0 : i32
    %6 = vector.broadcast %c0_i32_1 : i32 to vector<256x1xi32>
    %7 = arith.addi %5, %6 : vector<256x1xi32>
    %8 = vector.broadcast %7 : vector<256x1xi32> to vector<256x128xi32>
    %9 = arith.cmpi eq, %0, %8 : vector<256x128xi32>
    %c0_2 = arith.constant 0 : index
    %c1 = arith.constant 1 : index
    %10 = vector.load %arg1[%c0_2, %c1] : memref<256x5xi32, #tpu.memory_space<vmem>>, vector<256x1xi32>
    %c0_i32_3 = arith.constant 0 : i32
    %c6_i32 = arith.constant 6 : i32
    %11 = vector.broadcast %c0_i32_3 : i32 to vector<256x1xi32>
    %12 = arith.maxsi %11, %10 : vector<256x1xi32>
    %13 = vector.broadcast %c6_i32 : i32 to vector<256x1xi32>
    %14 = arith.minsi %13, %12 : vector<256x1xi32>
    %c13_i32 = arith.constant 13 : i32
    %15 = vector.broadcast %c13_i32 : i32 to vector<256x1xi32>
    %16 = arith.addi %14, %15 : vector<256x1xi32>
    %17 = vector.broadcast %16 : vector<256x1xi32> to vector<256x128xi32>
    %18 = arith.cmpi eq, %0, %17 : vector<256x128xi32>
    %19 = arith.ori %9, %18 : vector<256x128xi1>
    %c0_4 = arith.constant 0 : index
    %c2 = arith.constant 2 : index
    %20 = vector.load %arg1[%c0_4, %c2] : memref<256x5xi32, #tpu.memory_space<vmem>>, vector<256x1xi32>
    %c0_i32_5 = arith.constant 0 : i32
    %c4_i32 = arith.constant 4 : i32
    %21 = vector.broadcast %c0_i32_5 : i32 to vector<256x1xi32>
    %22 = arith.maxsi %21, %20 : vector<256x1xi32>
    %23 = vector.broadcast %c4_i32 : i32 to vector<256x1xi32>
    %24 = arith.minsi %23, %22 : vector<256x1xi32>
    %c26_i32 = arith.constant 26 : i32
    %25 = vector.broadcast %c26_i32 : i32 to vector<256x1xi32>
    %26 = arith.addi %24, %25 : vector<256x1xi32>
    %27 = vector.broadcast %26 : vector<256x1xi32> to vector<256x128xi32>
    %28 = arith.cmpi eq, %0, %27 : vector<256x128xi32>
    %29 = arith.ori %19, %28 : vector<256x128xi1>
    %c0_6 = arith.constant 0 : index
    %c3 = arith.constant 3 : index
    %30 = vector.load %arg1[%c0_6, %c3] : memref<256x5xi32, #tpu.memory_space<vmem>>, vector<256x1xi32>
    %c0_i32_7 = arith.constant 0 : i32
    %c12_i32 = arith.constant 12 : i32
    %31 = vector.broadcast %c0_i32_7 : i32 to vector<256x1xi32>
    %32 = arith.maxsi %31, %30 : vector<256x1xi32>
    %33 = vector.broadcast %c12_i32 : i32 to vector<256x1xi32>
    %34 = arith.minsi %33, %32 : vector<256x1xi32>
    %c39_i32 = arith.constant 39 : i32
    %35 = vector.broadcast %c39_i32 : i32 to vector<256x1xi32>
    %36 = arith.addi %34, %35 : vector<256x1xi32>
    %37 = vector.broadcast %36 : vector<256x1xi32> to vector<256x128xi32>
    %38 = arith.cmpi eq, %0, %37 : vector<256x128xi32>
    %39 = arith.ori %29, %38 : vector<256x128xi1>
    %cst = arith.constant 1.000000e+00 : f32
    %cst_8 = arith.constant 0.000000e+00 : f32
    %40 = vector.broadcast %cst : f32 to vector<256x128xf32>
    %41 = vector.broadcast %cst_8 : f32 to vector<256x128xf32>
    %42 = arith.select %39, %40, %41 : vector<256x128xi1>, vector<256x128xf32>
    %43 = arith.truncf %42 : vector<256x128xf32> to vector<256x128xbf16>
    %c0_9 = arith.constant 0 : index
    %c0_10 = arith.constant 0 : index
    %44 = vector.load %arg2[%c0_9, %c0_10] : memref<128x128xbf16, #tpu.memory_space<vmem>>, vector<128x128xbf16>
    %cst_11 = arith.constant dense<0.000000e+00> : vector<256x128xf32>
    %45 = tpu.matmul %43, %44, %cst_11 {dimension_numbers = #tpu.dot_dimension_numbers<[1], [0], [0], [1], [0, 0, 1, 1], [], []>} : vector<256x128xbf16>, vector<128x128xbf16>, vector<256x128xf32> -> vector<256x128xf32>
    %c0_12 = arith.constant 0 : index
    %c0_13 = arith.constant 0 : index
    %46 = vector.load %arg4[%c0_12, %c0_13] : memref<256x128xf32, #tpu.memory_space<vmem>>, vector<256x128xf32>
    tpu.vector_store %arg4[%c0_12, %c0_13], %45 {strides = array<i32>} : memref<256x128xf32, #tpu.memory_space<vmem>>, vector<256x128xf32>,
    %47 = tpu.iota {dimensions = array<i32: 1>} : vector<256x128xi32>
    %c0_14 = arith.constant 0 : index
    %c4 = arith.constant 4 : index
    %48 = vector.load %arg1[%c0_14, %c4] : memref<256x5xi32, #tpu.memory_space<vmem>>, vector<256x1xi32>
    %c0_i32_15 = arith.constant 0 : i32
    %c49_i32 = arith.constant 49 : i32
    %49 = vector.broadcast %c0_i32_15 : i32 to vector<256x1xi32>
    %50 = arith.maxsi %49, %48 : vector<256x1xi32>
    %51 = vector.broadcast %c49_i32 : i32 to vector<256x1xi32>
    %52 = arith.minsi %51, %50 : vector<256x1xi32>
    %53 = vector.broadcast %52 : vector<256x1xi32> to vector<256x128xi32>
    %54 = arith.cmpi eq, %47, %53 : vector<256x128xi32>
    %cst_16 = arith.constant 1.000000e+00 : f32
    %cst_17 = arith.constant 0.000000e+00 : f32
    %55 = vector.broadcast %cst_16 : f32 to vector<256x128xf32>
    %56 = vector.broadcast %cst_17 : f32 to vector<256x128xf32>
    %57 = arith.select %54, %55, %56 : vector<256x128xi1>, vector<256x128xf32>
    %c0_18 = arith.constant 0 : index
    %c0_19 = arith.constant 0 : index
    %58 = vector.load %arg3[%c0_18, %c0_19] : memref<128x128xf32, #tpu.memory_space<vmem>>, vector<128x128xf32>
    %cst_20 = arith.constant dense<0.000000e+00> : vector<256x128xf32>
    %59 = tpu.matmul %57, %58, %cst_20 {dimension_numbers = #tpu.dot_dimension_numbers<[1], [0], [0], [1], [0, 0, 1, 1], [], []>, precision = #tpu.contract_precision<fp32>} : vector<256x128xf32>, vector<128x128xf32>, vector<256x128xf32> -> vector<256x128xf32>
    %c0_21 = arith.constant 0 : index
    %c0_22 = arith.constant 0 : index
    %60 = vector.load %arg5[%c0_21, %c0_22] : memref<256x128xf32, #tpu.memory_space<vmem>>, vector<256x128xf32>
    tpu.vector_store %arg5[%c0_21, %c0_22], %59 {strides = array<i32>} : memref<256x128xf32, #tpu.memory_space<vmem>>, vector<256x128xf32>,
    return
  }
  func.func @transform_0(%arg0: i32) -> (i32, i32) {
    %c0_i32 = arith.constant 0 : i32
    %c0_i32_0 = arith.constant 0 : i32
    return %arg0, %c0_i32 : i32, i32
  }
  func.func @transform_1(%arg0: i32) -> (i32, i32) {
    %c0_i32 = arith.constant 0 : i32
    %c0_i32_0 = arith.constant 0 : i32
    %c0_i32_1 = arith.constant 0 : i32
    return %c0_i32, %c0_i32_0 : i32, i32
  }
  func.func @transform_2(%arg0: i32) -> (i32, i32) {
    %c0_i32 = arith.constant 0 : i32
    %c0_i32_0 = arith.constant 0 : i32
    %c0_i32_1 = arith.constant 0 : i32
    return %c0_i32, %c0_i32_0 : i32, i32
  }
  func.func @transform_3(%arg0: i32) -> (i32, i32) {
    %c0_i32 = arith.constant 0 : i32
    %c0_i32_0 = arith.constant 0 : i32
    return %arg0, %c0_i32 : i32, i32
  }
  func.func @transform_4(%arg0: i32) -> (i32, i32) {
    %c0_i32 = arith.constant 0 : i32
    %c0_i32_0 = arith.constant 0 : i32
    return %arg0, %c0_i32 : i32, i32
  }
}

</mosaic_0001>

<llo_original>
// kernel: eges_forward.1
$region0: #{eges_forward.1}
  #allocation0 [shape = 'u32[]', space=smem, size = 0x4, offset = 0x4, fixed_abs, tag = 'smem constant byte address 0x4 - core index']
  #allocation1 [shape = 'u32[144,128]{1,0:T(1,128)}', space=vmem, size = 0x12000, scoped, tag = 'internal scratch']
  %s0 = inlined_call_operand.vmem [shape: s32[256,5], index: 0, kind: input, shape index: {}]
  %s1 = inlined_call_operand.vmem [shape: bf16[128,128], index: 1, kind: input, shape index: {}]
  %s2 = inlined_call_operand.vmem [shape: f32[128,128], index: 2, kind: input, shape index: {}]
  %s3 = inlined_call_operand.vmem [shape: f32[256,128], index: 3, kind: output, shape index: {0}]
  %s4 = inlined_call_operand.vmem [shape: f32[256,128], index: 4, kind: output, shape index: {1}]
  %5 = xla_tuple %s3, %s4
  %s6 = sld [smem:[#allocation0]]
  $region30: #{eges_forward.1} parent=0
    _
  %s8 = ssub.s32 1, %s6
  %s9 = scalar_select 0, %s8, %s6
  // Predicated region
  $region2: #{eges_forward.1} parent=0 // pred_check
    _
  $region3: #{eges_forward.1} parent=0 // pred_check_branch
    %11 = sbr.rel (0) target = $region5
  $region4: #{eges_forward.1} parent=0 // pred_region
    _
  $region5: #{eges_forward.1} parent=0 // pred_fallthru
    _
  // Predicated region
  $region6: #{eges_forward.1} parent=0 // pred_check
    _
  $region7: #{eges_forward.1} parent=0 // pred_check_branch
    %13 = sbr.rel (0) target = $region9
  $region8: #{eges_forward.1} parent=0 // pred_region
    _
  $region9: #{eges_forward.1} parent=0 // pred_fallthru
    _
  // Predicated region
  $region10: #{eges_forward.1} parent=0 // pred_check
    _
  $region11: #{eges_forward.1} parent=0 // pred_check_branch
    %15 = sbr.rel (0) target = $region13
  $region12: #{eges_forward.1} parent=0 // pred_region
    _
  $region13: #{eges_forward.1} parent=0 // pred_fallthru
    _
  %v17 = vlaneseq
  %v18 = vand.u32 %v17, 127
  %v19 = vld [vmem:[%s0] sm:$0xff]
  %v20 = vld [vmem:[%s0 + $0x8] sm:$0xff]
  %v21 = vld [vmem:[%s0 + $0x10] sm:$0xff]
  %v22 = vld [vmem:[%s0 + $0x18] sm:$0xff]
  %v23 = vld [vmem:[%s0 + $0x20] sm:$0xff]
  %v24 = vld [vmem:[%s0 + $0x28] sm:$0xff]
  %v25 = vld [vmem:[%s0 + $0x30] sm:$0xff]
  %v26 = vld [vmem:[%s0 + $0x38] sm:$0xff]
  %v27 = vld [vmem:[%s0 + $0x40] sm:$0xff]
  %v28 = vld [vmem:[%s0 + $0x48] sm:$0xff]
  %v29 = vld [vmem:[%s0 + $0x50] sm:$0xff]
  %v30 = vld [vmem:[%s0 + $0x58] sm:$0xff]
  %v31 = vld [vmem:[%s0 + $0x60] sm:$0xff]
  %v32 = vld [vmem:[%s0 + $0x68] sm:$0xff]
  %v33 = vld [vmem:[%s0 + $0x70] sm:$0xff]
  %v34 = vld [vmem:[%s0 + $0x78] sm:$0xff]
  %v35 = vld [vmem:[%s0 + $0x80] sm:$0xff]
  %v36 = vld [vmem:[%s0 + $0x88] sm:$0xff]
  %v37 = vld [vmem:[%s0 + $0x90] sm:$0xff]
  %v38 = vld [vmem:[%s0 + $0x98] sm:$0xff]
  %v39 = vld [vmem:[%s0 + $0xa0] sm:$0xff]
  %v40 = vld [vmem:[%s0 + $0xa8] sm:$0xff]
  %v41 = vld [vmem:[%s0 + $0xb0] sm:$0xff]
  %v42 = vld [vmem:[%s0 + $0xb8] sm:$0xff]
  %v43 = vld [vmem:[%s0 + $0xc0] sm:$0xff]
  %v44 = vld [vmem:[%s0 + $0xc8] sm:$0xff]
  %v45 = vld [vmem:[%s0 + $0xd0] sm:$0xff]
  %v46 = vld [vmem:[%s0 + $0xd8] sm:$0xff]
  %v47 = vld [vmem:[%s0 + $0xe0] sm:$0xff]
  %v48 = vld [vmem:[%s0 + $0xe8] sm:$0xff]
  %v49 = vld [vmem:[%s0 + $0xf0] sm:$0xff]
  %v50 = vld [vmem:[%s0 + $0xf8] sm:$0xff]
  %vm51 = vcmp.gt.s32.totalorder %v19, 0
  %v52 = vsel %vm51, %v19, 0
  %vm53 = vcmp.gt.s32.totalorder %v20, 0
  %v54 = vsel %vm53, %v20, 0
  %vm55 = vcmp.gt.s32.totalorder %v21, 0
  %v56 = vsel %vm55, %v21, 0
  %vm57 = vcmp.gt.s32.totalorder %v22, 0
  %v58 = vsel %vm57, %v22, 0
  %vm59 = vcmp.gt.s32.totalorder %v23, 0
  %v60 = vsel %vm59, %v23, 0
  %vm61 = vcmp.gt.s32.totalorder %v24, 0
  %v62 = vsel %vm61, %v24, 0
  %vm63 = vcmp.gt.s32.totalorder %v25, 0
  %v64 = vsel %vm63, %v25, 0
  %vm65 = vcmp.gt.s32.totalorder %v26, 0
  %v66 = vsel %vm65, %v26, 0
  %vm67 = vcmp.gt.s32.totalorder %v27, 0
  %v68 = vsel %vm67, %v27, 0
  %vm69 = vcmp.gt.s32.totalorder %v28, 0
  %v70 = vsel %vm69, %v28, 0
  %vm71 = vcmp.gt.s32.totalorder %v29, 0
  %v72 = vsel %vm71, %v29, 0
  %vm73 = vcmp.gt.s32.totalorder %v30, 0
  %v74 = vsel %vm73, %v30, 0
  %vm75 = vcmp.gt.s32.totalorder %v31, 0
  %v76 = vsel %vm75, %v31, 0
  %vm77 = vcmp.gt.s32.totalorder %v32, 0
  %v78 = vsel %vm77, %v32, 0
  %vm79 = vcmp.gt.s32.totalorder %v33, 0
  %v80 = vsel %vm79, %v33, 0
  %vm81 = vcmp.gt.s32.totalorder %v34, 0
  %v82 = vsel %vm81, %v34, 0
  %vm83 = vcmp.gt.s32.totalorder %v35, 0
  %v84 = vsel %vm83, %v35, 0
  %vm85 = vcmp.gt.s32.totalorder %v36, 0
  %v86 = vsel %vm85, %v36, 0
  %vm87 = vcmp.gt.s32.totalorder %v37, 0
  %v88 = vsel %vm87, %v37, 0
  %vm89 = vcmp.gt.s32.totalorder %v38, 0
  %v90 = vsel %vm89, %v38, 0
  %vm91 = vcmp.gt.s32.totalorder %v39, 0
  %v92 = vsel %vm91, %v39, 0
  %vm93 = vcmp.gt.s32.totalorder %v40, 0
  %v94 = vsel %vm93, %v40, 0
  %vm95 = vcmp.gt.s32.totalorder %v41, 0
  %v96 = vsel %vm95, %v41, 0
  %vm97 = vcmp.gt.s32.totalorder %v42, 0
  %v98 = vsel %vm97, %v42, 0
  %vm99 = vcmp.gt.s32.totalorder %v43, 0
  %v100 = vsel %vm99, %v43, 0
  %vm101 = vcmp.gt.s32.totalorder %v44, 0
  %v102 = vsel %vm101, %v44, 0
  %vm103 = vcmp.gt.s32.totalorder %v45, 0
  %v104 = vsel %vm103, %v45, 0
  %vm105 = vcmp.gt.s32.totalorder %v46, 0
  %v106 = vsel %vm105, %v46, 0
  %vm107 = vcmp.gt.s32.totalorder %v47, 0
  %v108 = vsel %vm107, %v47, 0
  %vm109 = vcmp.gt.s32.totalorder %v48, 0
  %v110 = vsel %vm109, %v48, 0
  %vm111 = vcmp.gt.s32.totalorder %v49, 0
  %v112 = vsel %vm111, %v49, 0
  %vm113 = vcmp.gt.s32.totalorder %v50, 0
  %v114 = vsel %vm113, %v50, 0
  %vm115 = vcmp.lt.s32.totalorder %v52, 10
  %v116 = vsel %vm115, %v52, 10
  %vm117 = vcmp.lt.s32.totalorder %v54, 10
  %v118 = vsel %vm117, %v54, 10
  %vm119 = vcmp.lt.s32.totalorder %v56, 10
  %v120 = vsel %vm119, %v56, 10
  %vm121 = vcmp.lt.s32.totalorder %v58, 10
  %v122 = vsel %vm121, %v58, 10
  %vm123 = vcmp.lt.s32.totalorder %v60, 10
  %v124 = vsel %vm123, %v60, 10
  %vm125 = vcmp.lt.s32.totalorder %v62, 10
  %v126 = vsel %vm125, %v62, 10
  %vm127 = vcmp.lt.s32.totalorder %v64, 10
  %v128 = vsel %vm127, %v64, 10
  %vm129 = vcmp.lt.s32.totalorder %v66, 10
  %v130 = vsel %vm129, %v66, 10
  %vm131 = vcmp.lt.s32.totalorder %v68, 10
  %v132 = vsel %vm131, %v68, 10
  %vm133 = vcmp.lt.s32.totalorder %v70, 10
  %v134 = vsel %vm133, %v70, 10
  %vm135 = vcmp.lt.s32.totalorder %v72, 10
  %v136 = vsel %vm135, %v72, 10
  %vm137 = vcmp.lt.s32.totalorder %v74, 10
  %v138 = vsel %vm137, %v74, 10
  %vm139 = vcmp.lt.s32.totalorder %v76, 10
  %v140 = vsel %vm139, %v76, 10
  %vm141 = vcmp.lt.s32.totalorder %v78, 10
  %v142 = vsel %vm141, %v78, 10
  %vm143 = vcmp.lt.s32.totalorder %v80, 10
  %v144 = vsel %vm143, %v80, 10
  %vm145 = vcmp.lt.s32.totalorder %v82, 10
  %v146 = vsel %vm145, %v82, 10
  %vm147 = vcmp.lt.s32.totalorder %v84, 10
  %v148 = vsel %vm147, %v84, 10
  %vm149 = vcmp.lt.s32.totalorder %v86, 10
  %v150 = vsel %vm149, %v86, 10
  %vm151 = vcmp.lt.s32.totalorder %v88, 10
  %v152 = vsel %vm151, %v88, 10
  %vm153 = vcmp.lt.s32.totalorder %v90, 10
  %v154 = vsel %vm153, %v90, 10
  %vm155 = vcmp.lt.s32.totalorder %v92, 10
  %v156 = vsel %vm155, %v92, 10
  %vm157 = vcmp.lt.s32.totalorder %v94, 10
  %v158 = vsel %vm157, %v94, 10
  %vm159 = vcmp.lt.s32.totalorder %v96, 10
  %v160 = vsel %vm159, %v96, 10
  %vm161 = vcmp.lt.s32.totalorder %v98, 10
  %v162 = vsel %vm161, %v98, 10
  %vm163 = vcmp.lt.s32.totalorder %v100, 10
  %v164 = vsel %vm163, %v100, 10
  %vm165 = vcmp.lt.s32.totalorder %v102, 10
  %v166 = vsel %vm165, %v102, 10
  %vm167 = vcmp.lt.s32.totalorder %v104, 10
  %v168 = vsel %vm167, %v104, 10
  %vm169 = vcmp.lt.s32.totalorder %v106, 10
  %v170 = vsel %vm169, %v106, 10
  %vm171 = vcmp.lt.s32.totalorder %v108, 10
  %v172 = vsel %vm171, %v108, 10
  %vm173 = vcmp.lt.s32.totalorder %v110, 10
  %v174 = vsel %vm173, %v110, 10
  %vm175 = vcmp.lt.s32.totalorder %v112, 10
  %v176 = vsel %vm175, %v112, 10
  %vm177 = vcmp.lt.s32.totalorder %v114, 10
  %v178 = vsel %vm177, %v114, 10
  %179 = vset.pattern.permute.xlu0 0
  %180 = vperm.xlu0 %179, %v116
  %v181 = vpop.permute.xlu0 %180
  %182 = vset.pattern.permute.xlu0 0
  %183 = vperm.xlu0 %182, %v118
  %v184 = vpop.permute.xlu0 %183
  %185 = vset.pattern.permute.xlu0 0
  %186 = vperm.xlu0 %185, %v120
  %v187 = vpop.permute.xlu0 %186
  %188 = vset.pattern.permute.xlu0 0
  %189 = vperm.xlu0 %188, %v122
  %v190 = vpop.permute.xlu0 %189
  %191 = vset.pattern.permute.xlu0 0
  %192 = vperm.xlu0 %191, %v124
  %v193 = vpop.permute.xlu0 %192
  %194 = vset.pattern.permute.xlu0 0
  %195 = vperm.xlu0 %194, %v126
  %v196 = vpop.permute.xlu0 %195
  %197 = vset.pattern.permute.xlu0 0
  %198 = vperm.xlu0 %197, %v128
  %v199 = vpop.permute.xlu0 %198
  %200 = vset.pattern.permute.xlu0 0
  %201 = vperm.xlu0 %200, %v130
  %v202 = vpop.permute.xlu0 %201
  %203 = vset.pattern.permute.xlu0 0
  %204 = vperm.xlu0 %203, %v132
  %v205 = vpop.permute.xlu0 %204
  %206 = vset.pattern.permute.xlu0 0
  %207 = vperm.xlu0 %206, %v134
  %v208 = vpop.permute.xlu0 %207
  %209 = vset.pattern.permute.xlu0 0
  %210 = vperm.xlu0 %209, %v136
  %v211 = vpop.permute.xlu0 %210
  %212 = vset.pattern.permute.xlu0 0
  %213 = vperm.xlu0 %212, %v138
  %v214 = vpop.permute.xlu0 %213
  %215 = vset.pattern.permute.xlu0 0
  %216 = vperm.xlu0 %215, %v140
  %v217 = vpop.permute.xlu0 %216
  %218 = vset.pattern.permute.xlu0 0
  %219 = vperm.xlu0 %218, %v142
  %v220 = vpop.permute.xlu0 %219
  %221 = vset.pattern.permute.xlu0 0
  %222 = vperm.xlu0 %221, %v144
  %v223 = vpop.permute.xlu0 %222
  %224 = vset.pattern.permute.xlu0 0
  %225 = vperm.xlu0 %224, %v146
  %v226 = vpop.permute.xlu0 %225
  %227 = vset.pattern.permute.xlu0 0
  %228 = vperm.xlu0 %227, %v148
  %v229 = vpop.permute.xlu0 %228
  %230 = vset.pattern.permute.xlu0 0
  %231 = vperm.xlu0 %230, %v150
  %v232 = vpop.permute.xlu0 %231
  %233 = vset.pattern.permute.xlu0 0
  %234 = vperm.xlu0 %233, %v152
  %v235 = vpop.permute.xlu0 %234
  %236 = vset.pattern.permute.xlu0 0
  %237 = vperm.xlu0 %236, %v154
  %v238 = vpop.permute.xlu0 %237
  %239 = vset.pattern.permute.xlu0 0
  %240 = vperm.xlu0 %239, %v156
  %v241 = vpop.permute.xlu0 %240
  %242 = vset.pattern.permute.xlu0 0
  %243 = vperm.xlu0 %242, %v158
  %v244 = vpop.permute.xlu0 %243
  %245 = vset.pattern.permute.xlu0 0
  %246 = vperm.xlu0 %245, %v160
  %v247 = vpop.permute.xlu0 %246
  %248 = vset.pattern.permute.xlu0 0
  %249 = vperm.xlu0 %248, %v162
  %v250 = vpop.permute.xlu0 %249
  %251 = vset.pattern.permute.xlu0 0
  %252 = vperm.xlu0 %251, %v164
  %v253 = vpop.permute.xlu0 %252
  %254 = vset.pattern.permute.xlu0 0
  %255 = vperm.xlu0 %254, %v166
  %v256 = vpop.permute.xlu0 %255
  %257 = vset.pattern.permute.xlu0 0
  %258 = vperm.xlu0 %257, %v168
  %v259 = vpop.permute.xlu0 %258
  %260 = vset.pattern.permute.xlu0 0
  %261 = vperm.xlu0 %260, %v170
  %v262 = vpop.permute.xlu0 %261
  %263 = vset.pattern.permute.xlu0 0
  %264 = vperm.xlu0 %263, %v172
  %v265 = vpop.permute.xlu0 %264
  %266 = vset.pattern.permute.xlu0 0
  %267 = vperm.xlu0 %266, %v174
  %v268 = vpop.permute.xlu0 %267
  %269 = vset.pattern.permute.xlu0 0
  %270 = vperm.xlu0 %269, %v176
  %v271 = vpop.permute.xlu0 %270
  %272 = vset.pattern.permute.xlu0 0
  %273 = vperm.xlu0 %272, %v178
  %v274 = vpop.permute.xlu0 %273
  %vm275 = vcmp.eq.s32.totalorder %v18, %v181
  %vm276 = vcmp.eq.s32.totalorder %v18, %v184
  %vm277 = vcmp.eq.s32.totalorder %v18, %v187
  %vm278 = vcmp.eq.s32.totalorder %v18, %v190
  %vm279 = vcmp.eq.s32.totalorder %v18, %v193
  %vm280 = vcmp.eq.s32.totalorder %v18, %v196
  %vm281 = vcmp.eq.s32.totalorder %v18, %v199
  %vm282 = vcmp.eq.s32.totalorder %v18, %v202
  %vm283 = vcmp.eq.s32.totalorder %v18, %v205
  %vm284 = vcmp.eq.s32.totalorder %v18, %v208
  %vm285 = vcmp.eq.s32.totalorder %v18, %v211
  %vm286 = vcmp.eq.s32.totalorder %v18, %v214
  %vm287 = vcmp.eq.s32.totalorder %v18, %v217
  %vm288 = vcmp.eq.s32.totalorder %v18, %v220
  %vm289 = vcmp.eq.s32.totalorder %v18, %v223
  %vm290 = vcmp.eq.s32.totalorder %v18, %v226
  %vm291 = vcmp.eq.s32.totalorder %v18, %v229
  %vm292 = vcmp.eq.s32.totalorder %v18, %v232
  %vm293 = vcmp.eq.s32.totalorder %v18, %v235
  %vm294 = vcmp.eq.s32.totalorder %v18, %v238
  %vm295 = vcmp.eq.s32.totalorder %v18, %v241
  %vm296 = vcmp.eq.s32.totalorder %v18, %v244
  %vm297 = vcmp.eq.s32.totalorder %v18, %v247
  %vm298 = vcmp.eq.s32.totalorder %v18, %v250
  %vm299 = vcmp.eq.s32.totalorder %v18, %v253
  %vm300 = vcmp.eq.s32.totalorder %v18, %v256
  %vm301 = vcmp.eq.s32.totalorder %v18, %v259
  %vm302 = vcmp.eq.s32.totalorder %v18, %v262
  %vm303 = vcmp.eq.s32.totalorder %v18, %v265
  %vm304 = vcmp.eq.s32.totalorder %v18, %v268
  %vm305 = vcmp.eq.s32.totalorder %v18, %v271
  %vm306 = vcmp.eq.s32.totalorder %v18, %v274
  %vm307 = vcmp.lt.s32.totalorder %v52, 6
  %v308 = vsel %vm307, %v52, 6
  %vm309 = vcmp.lt.s32.totalorder %v54, 6
  %v310 = vsel %vm309, %v54, 6
  %vm311 = vcmp.lt.s32.totalorder %v56, 6
  %v312 = vsel %vm311, %v56, 6
  %vm313 = vcmp.lt.s32.totalorder %v58, 6
  %v314 = vsel %vm313, %v58, 6
  %vm315 = vcmp.lt.s32.totalorder %v60, 6
  %v316 = vsel %vm315, %v60, 6
  %vm317 = vcmp.lt.s32.totalorder %v62, 6
  %v318 = vsel %vm317, %v62, 6
  %vm319 = vcmp.lt.s32.totalorder %v64, 6
  %v320 = vsel %vm319, %v64, 6
  %vm321 = vcmp.lt.s32.totalorder %v66, 6
  %v322 = vsel %vm321, %v66, 6
  %vm323 = vcmp.lt.s32.totalorder %v68, 6
  %v324 = vsel %vm323, %v68, 6
  %vm325 = vcmp.lt.s32.totalorder %v70, 6
  %v326 = vsel %vm325, %v70, 6
  %vm327 = vcmp.lt.s32.totalorder %v72, 6
  %v328 = vsel %vm327, %v72, 6
  %vm329 = vcmp.lt.s32.totalorder %v74, 6
  %v330 = vsel %vm329, %v74, 6
  %vm331 = vcmp.lt.s32.totalorder %v76, 6
  %v332 = vsel %vm331, %v76, 6
  %vm333 = vcmp.lt.s32.totalorder %v78, 6
  %v334 = vsel %vm333, %v78, 6
  %vm335 = vcmp.lt.s32.totalorder %v80, 6
  %v336 = vsel %vm335, %v80, 6
  %vm337 = vcmp.lt.s32.totalorder %v82, 6
  %v338 = vsel %vm337, %v82, 6
  %vm339 = vcmp.lt.s32.totalorder %v84, 6
  %v340 = vsel %vm339, %v84, 6
  %vm341 = vcmp.lt.s32.totalorder %v86, 6
  %v342 = vsel %vm341, %v86, 6
  %vm343 = vcmp.lt.s32.totalorder %v88, 6
  %v344 = vsel %vm343, %v88, 6
  %vm345 = vcmp.lt.s32.totalorder %v90, 6
  %v346 = vsel %vm345, %v90, 6
  %vm347 = vcmp.lt.s32.totalorder %v92, 6
  %v348 = vsel %vm347, %v92, 6
  %vm349 = vcmp.lt.s32.totalorder %v94, 6
  %v350 = vsel %vm349, %v94, 6
  %vm351 = vcmp.lt.s32.totalorder %v96, 6
  %v352 = vsel %vm351, %v96, 6
  %vm353 = vcmp.lt.s32.totalorder %v98, 6
  %v354 = vsel %vm353, %v98, 6
  %vm355 = vcmp.lt.s32.totalorder %v100, 6
  %v356 = vsel %vm355, %v100, 6
  %vm357 = vcmp.lt.s32.totalorder %v102, 6
  %v358 = vsel %vm357, %v102, 6
  %vm359 = vcmp.lt.s32.totalorder %v104, 6
  %v360 = vsel %vm359, %v104, 6
  %vm361 = vcmp.lt.s32.totalorder %v106, 6
  %v362 = vsel %vm361, %v106, 6
  %vm363 = vcmp.lt.s32.totalorder %v108, 6
  %v364 = vsel %vm363, %v108, 6
  %vm365 = vcmp.lt.s32.totalorder %v110, 6
  %v366 = vsel %vm365, %v110, 6
  %vm367 = vcmp.lt.s32.totalorder %v112, 6
  %v368 = vsel %vm367, %v112, 6
  %vm369 = vcmp.lt.s32.totalorder %v114, 6
  %v370 = vsel %vm369, %v114, 6
  %v371 = vadd.s32 %v308, 13
  %v372 = vadd.s32 %v310, 13
  %v373 = vadd.s32 %v312, 13
  %v374 = vadd.s32 %v314, 13
  %v375 = vadd.s32 %v316, 13
  %v376 = vadd.s32 %v318, 13
  %v377 = vadd.s32 %v320, 13
  %v378 = vadd.s32 %v322, 13
  %v379 = vadd.s32 %v324, 13
  %v380 = vadd.s32 %v326, 13
  %v381 = vadd.s32 %v328, 13
  %v382 = vadd.s32 %v330, 13
  %v383 = vadd.s32 %v332, 13
  %v384 = vadd.s32 %v334, 13
  %v385 = vadd.s32 %v336, 13
  %v386 = vadd.s32 %v338, 13
  %v387 = vadd.s32 %v340, 13
  %v388 = vadd.s32 %v342, 13
  %v389 = vadd.s32 %v344, 13
  %v390 = vadd.s32 %v346, 13
  %v391 = vadd.s32 %v348, 13
  %v392 = vadd.s32 %v350, 13
  %v393 = vadd.s32 %v352, 13
  %v394 = vadd.s32 %v354, 13
  %v395 = vadd.s32 %v356, 13
  %v396 = vadd.s32 %v358, 13
  %v397 = vadd.s32 %v360, 13
  %v398 = vadd.s32 %v362, 13
  %v399 = vadd.s32 %v364, 13
  %v400 = vadd.s32 %v366, 13
  %v401 = vadd.s32 %v368, 13
  %v402 = vadd.s32 %v370, 13
  %403 = vset.pattern.permute.xlu0 1
  %404 = vperm.xlu0 %403, %v371
  %v405 = vpop.permute.xlu0 %404
  %406 = vset.pattern.permute.xlu0 1
  %407 = vperm.xlu0 %406, %v372
  %v408 = vpop.permute.xlu0 %407
  %409 = vset.pattern.permute.xlu0 1
  %410 = vperm.xlu0 %409, %v373
  %v411 = vpop.permute.xlu0 %410
  %412 = vset.pattern.permute.xlu0 1
  %413 = vperm.xlu0 %412, %v374
  %v414 = vpop.permute.xlu0 %413
  %415 = vset.pattern.permute.xlu0 1
  %416 = vperm.xlu0 %415, %v375
  %v417 = vpop.permute.xlu0 %416
  %418 = vset.pattern.permute.xlu0 1
  %419 = vperm.xlu0 %418, %v376
  %v420 = vpop.permute.xlu0 %419
  %421 = vset.pattern.permute.xlu0 1
  %422 = vperm.xlu0 %421, %v377
  %v423 = vpop.permute.xlu0 %422
  %424 = vset.pattern.permute.xlu0 1
  %425 = vperm.xlu0 %424, %v378
  %v426 = vpop.permute.xlu0 %425
  %427 = vset.pattern.permute.xlu0 1
  %428 = vperm.xlu0 %427, %v379
  %v429 = vpop.permute.xlu0 %428
  %430 = vset.pattern.permute.xlu0 1
  %431 = vperm.xlu0 %430, %v380
  %v432 = vpop.permute.xlu0 %431
  %433 = vset.pattern.permute.xlu0 1
  %434 = vperm.xlu0 %433, %v381
  %v435 = vpop.permute.xlu0 %434
  %436 = vset.pattern.permute.xlu0 1
  %437 = vperm.xlu0 %436, %v382
  %v438 = vpop.permute.xlu0 %437
  %439 = vset.pattern.permute.xlu0 1
  %440 = vperm.xlu0 %439, %v383
  %v441 = vpop.permute.xlu0 %440
  %442 = vset.pattern.permute.xlu0 1
  %443 = vperm.xlu0 %442, %v384
  %v444 = vpop.permute.xlu0 %443
  %445 = vset.pattern.permute.xlu0 1
  %446 = vperm.xlu0 %445, %v385
  %v447 = vpop.permute.xlu0 %446
  %448 = vset.pattern.permute.xlu0 1
  %449 = vperm.xlu0 %448, %v386
  %v450 = vpop.permute.xlu0 %449
  %451 = vset.pattern.permute.xlu0 1
  %452 = vperm.xlu0 %451, %v387
  %v453 = vpop.permute.xlu0 %452
  %454 = vset.pattern.permute.xlu0 1
  %455 = vperm.xlu0 %454, %v388
  %v456 = vpop.permute.xlu0 %455
  %457 = vset.pattern.permute.xlu0 1
  %458 = vperm.xlu0 %457, %v389
  %v459 = vpop.permute.xlu0 %458
  %460 = vset.pattern.permute.xlu0 1
  %461 = vperm.xlu0 %460, %v390
  %v462 = vpop.permute.xlu0 %461
  %463 = vset.pattern.permute.xlu0 1
  %464 = vperm.xlu0 %463, %v391
  %v465 = vpop.permute.xlu0 %464
  %466 = vset.pattern.permute.xlu0 1
  %467 = vperm.xlu0 %466, %v392
  %v468 = vpop.permute.xlu0 %467
  %469 = vset.pattern.permute.xlu0 1
  %470 = vperm.xlu0 %469, %v393
  %v471 = vpop.permute.xlu0 %470
  %472 = vset.pattern.permute.xlu0 1
  %473 = vperm.xlu0 %472, %v394
  %v474 = vpop.permute.xlu0 %473
  %475 = vset.pattern.permute.xlu0 1
  %476 = vperm.xlu0 %475, %v395
  %v477 = vpop.permute.xlu0 %476
  %478 = vset.pattern.permute.xlu0 1
  %479 = vperm.xlu0 %478, %v396
  %v480 = vpop.permute.xlu0 %479
  %481 = vset.pattern.permute.xlu0 1
  %482 = vperm.xlu0 %481, %v397
  %v483 = vpop.permute.xlu0 %482
  %484 = vset.pattern.permute.xlu0 1
  %485 = vperm.xlu0 %484, %v398
  %v486 = vpop.permute.xlu0 %485
  %487 = vset.pattern.permute.xlu0 1
  %488 = vperm.xlu0 %487, %v399
  %v489 = vpop.permute.xlu0 %488
  %490 = vset.pattern.permute.xlu0 1
  %491 = vperm.xlu0 %490, %v400
  %v492 = vpop.permute.xlu0 %491
  %493 = vset.pattern.permute.xlu0 1
  %494 = vperm.xlu0 %493, %v401
  %v495 = vpop.permute.xlu0 %494
  %496 = vset.pattern.permute.xlu0 1
  %497 = vperm.xlu0 %496, %v402
  %v498 = vpop.permute.xlu0 %497
  %vm499 = vcmp.eq.s32.totalorder %v18, %v405
  %vm500 = vcmp.eq.s32.totalorder %v18, %v408
  %vm501 = vcmp.eq.s32.totalorder %v18, %v411
  %vm502 = vcmp.eq.s32.totalorder %v18, %v414
  %vm503 = vcmp.eq.s32.totalorder %v18, %v417
  %vm504 = vcmp.eq.s32.totalorder %v18, %v420
  %vm505 = vcmp.eq.s32.totalorder %v18, %v423
  %vm506 = vcmp.eq.s32.totalorder %v18, %v426
  %vm507 = vcmp.eq.s32.totalorder %v18, %v429
  %vm508 = vcmp.eq.s32.totalorder %v18, %v432
  %vm509 = vcmp.eq.s32.totalorder %v18, %v435
  %vm510 = vcmp.eq.s32.totalorder %v18, %v438
  %vm511 = vcmp.eq.s32.totalorder %v18, %v441
  %vm512 = vcmp.eq.s32.totalorder %v18, %v444
  %vm513 = vcmp.eq.s32.totalorder %v18, %v447
  %vm514 = vcmp.eq.s32.totalorder %v18, %v450
  %vm515 = vcmp.eq.s32.totalorder %v18, %v453
  %vm516 = vcmp.eq.s32.totalorder %v18, %v456
  %vm517 = vcmp.eq.s32.totalorder %v18, %v459
  %vm518 = vcmp.eq.s32.totalorder %v18, %v462
  %vm519 = vcmp.eq.s32.totalorder %v18, %v465
  %vm520 = vcmp.eq.s32.totalorder %v18, %v468
  %vm521 = vcmp.eq.s32.totalorder %v18, %v471
  %vm522 = vcmp.eq.s32.totalorder %v18, %v474
  %vm523 = vcmp.eq.s32.totalorder %v18, %v477
  %vm524 = vcmp.eq.s32.totalorder %v18, %v480
  %vm525 = vcmp.eq.s32.totalorder %v18, %v483
  %vm526 = vcmp.eq.s32.totalorder %v18, %v486
  %vm527 = vcmp.eq.s32.totalorder %v18, %v489
  %vm528 = vcmp.eq.s32.totalorder %v18, %v492
  %vm529 = vcmp.eq.s32.totalorder %v18, %v495
  %vm530 = vcmp.eq.s32.totalorder %v18, %v498
  %vm531 = vmor %vm275, %vm499
  %vm532 = vmor %vm276, %vm500
  %vm533 = vmor %vm277, %vm501
  %vm534 = vmor %vm278, %vm502
  %vm535 = vmor %vm279, %vm503
  %vm536 = vmor %vm280, %vm504
  %vm537 = vmor %vm281, %vm505
  %vm538 = vmor %vm282, %vm506
  %vm539 = vmor %vm283, %vm507
  %vm540 = vmor %vm284, %vm508
  %vm541 = vmor %vm285, %vm509
  %vm542 = vmor %vm286, %vm510
  %vm543 = vmor %vm287, %vm511
  %vm544 = vmor %vm288, %vm512
  %vm545 = vmor %vm289, %vm513
  %vm546 = vmor %vm290, %vm514
  %vm547 = vmor %vm291, %vm515
  %vm548 = vmor %vm292, %vm516
  %vm549 = vmor %vm293, %vm517
  %vm550 = vmor %vm294, %vm518
  %vm551 = vmor %vm295, %vm519
  %vm552 = vmor %vm296, %vm520
  %vm553 = vmor %vm297, %vm521
  %vm554 = vmor %vm298, %vm522
  %vm555 = vmor %vm299, %vm523
  %vm556 = vmor %vm300, %vm524
  %vm557 = vmor %vm301, %vm525
  %vm558 = vmor %vm302, %vm526
  %vm559 = vmor %vm303, %vm527
  %vm560 = vmor %vm304, %vm528
  %vm561 = vmor %vm305, %vm529
  %vm562 = vmor %vm306, %vm530
  %vm563 = vcmp.lt.s32.totalorder %v52, 4
  %v564 = vsel %vm563, %v52, 4
  %vm565 = vcmp.lt.s32.totalorder %v54, 4
  %v566 = vsel %vm565, %v54, 4
  %vm567 = vcmp.lt.s32.totalorder %v56, 4
  %v568 = vsel %vm567, %v56, 4
  %vm569 = vcmp.lt.s32.totalorder %v58, 4
  %v570 = vsel %vm569, %v58, 4
  %vm571 = vcmp.lt.s32.totalorder %v60, 4
  %v572 = vsel %vm571, %v60, 4
  %vm573 = vcmp.lt.s32.totalorder %v62, 4
  %v574 = vsel %vm573, %v62, 4
  %vm575 = vcmp.lt.s32.totalorder %v64, 4
  %v576 = vsel %vm575, %v64, 4
  %vm577 = vcmp.lt.s32.totalorder %v66, 4
  %v578 = vsel %vm577, %v66, 4
  %vm579 = vcmp.lt.s32.totalorder %v68, 4
  %v580 = vsel %vm579, %v68, 4
  %vm581 = vcmp.lt.s32.totalorder %v70, 4
  %v582 = vsel %vm581, %v70, 4
  %vm583 = vcmp.lt.s32.totalorder %v72, 4
  %v584 = vsel %vm583, %v72, 4
  %vm585 = vcmp.lt.s32.totalorder %v74, 4
  %v586 = vsel %vm585, %v74, 4
  %vm587 = vcmp.lt.s32.totalorder %v76, 4
  %v588 = vsel %vm587, %v76, 4
  %vm589 = vcmp.lt.s32.totalorder %v78, 4
  %v590 = vsel %vm589, %v78, 4
  %vm591 = vcmp.lt.s32.totalorder %v80, 4
  %v592 = vsel %vm591, %v80, 4
  %vm593 = vcmp.lt.s32.totalorder %v82, 4
  %v594 = vsel %vm593, %v82, 4
  %vm595 = vcmp.lt.s32.totalorder %v84, 4
  %v596 = vsel %vm595, %v84, 4
  %vm597 = vcmp.lt.s32.totalorder %v86, 4
  %v598 = vsel %vm597, %v86, 4
  %vm599 = vcmp.lt.s32.totalorder %v88, 4
  %v600 = vsel %vm599, %v88, 4
  %vm601 = vcmp.lt.s32.totalorder %v90, 4
  %v602 = vsel %vm601, %v90, 4
  %vm603 = vcmp.lt.s32.totalorder %v92, 4
  %v604 = vsel %vm603, %v92, 4
  %vm605 = vcmp.lt.s32.totalorder %v94, 4
  %v606 = vsel %vm605, %v94, 4
  %vm607 = vcmp.lt.s32.totalorder %v96, 4
  %v608 = vsel %vm607, %v96, 4
  %vm609 = vcmp.lt.s32.totalorder %v98, 4
  %v610 = vsel %vm609, %v98, 4
  %vm611 = vcmp.lt.s32.totalorder %v100, 4
  %v612 = vsel %vm611, %v100, 4
  %vm613 = vcmp.lt.s32.totalorder %v102, 4
  %v614 = vsel %vm613, %v102, 4
  %vm615 = vcmp.lt.s32.totalorder %v104, 4
  %v616 = vsel %vm615, %v104, 4
  %vm617 = vcmp.lt.s32.totalorder %v106, 4
  %v618 = vsel %vm617, %v106, 4
  %vm619 = vcmp.lt.s32.totalorder %v108, 4
  %v620 = vsel %vm619, %v108, 4
  %vm621 = vcmp.lt.s32.totalorder %v110, 4
  %v622 = vsel %vm621, %v110, 4
  %vm623 = vcmp.lt.s32.totalorder %v112, 4
  %v624 = vsel %vm623, %v112, 4
  %vm625 = vcmp.lt.s32.totalorder %v114, 4
  %v626 = vsel %vm625, %v114, 4
  %v627 = vadd.s32 %v564, 26
  %v628 = vadd.s32 %v566, 26
  %v629 = vadd.s32 %v568, 26
  %v630 = vadd.s32 %v570, 26
  %v631 = vadd.s32 %v572, 26
  %v632 = vadd.s32 %v574, 26
  %v633 = vadd.s32 %v576, 26
  %v634 = vadd.s32 %v578, 26
  %v635 = vadd.s32 %v580, 26
  %v636 = vadd.s32 %v582, 26
  %v637 = vadd.s32 %v584, 26
  %v638 = vadd.s32 %v586, 26
  %v639 = vadd.s32 %v588, 26
  %v640 = vadd.s32 %v590, 26
  %v641 = vadd.s32 %v592, 26
  %v642 = vadd.s32 %v594, 26
  %v643 = vadd.s32 %v596, 26
  %v644 = vadd.s32 %v598, 26
  %v645 = vadd.s32 %v600, 26
  %v646 = vadd.s32 %v602, 26
  %v647 = vadd.s32 %v604, 26
  %v648 = vadd.s32 %v606, 26
  %v649 = vadd.s32 %v608, 26
  %v650 = vadd.s32 %v610, 26
  %v651 = vadd.s32 %v612, 26
  %v652 = vadd.s32 %v614, 26
  %v653 = vadd.s32 %v616, 26
  %v654 = vadd.s32 %v618, 26
  %v655 = vadd.s32 %v620, 26
  %v656 = vadd.s32 %v622, 26
  %v657 = vadd.s32 %v624, 26
  %v658 = vadd.s32 %v626, 26
  %659 = vset.pattern.permute.xlu0 2
  %660 = vperm.xlu0 %659, %v627
  %v661 = vpop.permute.xlu0 %660
  %662 = vset.pattern.permute.xlu0 2
  %663 = vperm.xlu0 %662, %v628
  %v664 = vpop.permute.xlu0 %663
  %665 = vset.pattern.permute.xlu0 2
  %666 = vperm.xlu0 %665, %v629
  %v667 = vpop.permute.xlu0 %666
  %668 = vset.pattern.permute.xlu0 2
  %669 = vperm.xlu0 %668, %v630
  %v670 = vpop.permute.xlu0 %669
  %671 = vset.pattern.permute.xlu0 2
  %672 = vperm.xlu0 %671, %v631
  %v673 = vpop.permute.xlu0 %672
  %674 = vset.pattern.permute.xlu0 2
  %675 = vperm.xlu0 %674, %v632
  %v676 = vpop.permute.xlu0 %675
  %677 = vset.pattern.permute.xlu0 2
  %678 = vperm.xlu0 %677, %v633
  %v679 = vpop.permute.xlu0 %678
  %680 = vset.pattern.permute.xlu0 2
  %681 = vperm.xlu0 %680, %v634
  %v682 = vpop.permute.xlu0 %681
  %683 = vset.pattern.permute.xlu0 2
  %684 = vperm.xlu0 %683, %v635
  %v685 = vpop.permute.xlu0 %684
  %686 = vset.pattern.permute.xlu0 2
  %687 = vperm.xlu0 %686, %v636
  %v688 = vpop.permute.xlu0 %687
  %689 = vset.pattern.permute.xlu0 2
  %690 = vperm.xlu0 %689, %v637
  %v691 = vpop.permute.xlu0 %690
  %692 = vset.pattern.permute.xlu0 2
  %693 = vperm.xlu0 %692, %v638
  %v694 = vpop.permute.xlu0 %693
  %695 = vset.pattern.permute.xlu0 2
  %696 = vperm.xlu0 %695, %v639
  %v697 = vpop.permute.xlu0 %696
  %698 = vset.pattern.permute.xlu0 2
  %699 = vperm.xlu0 %698, %v640
  %v700 = vpop.permute.xlu0 %699
  %701 = vset.pattern.permute.xlu0 2
  %702 = vperm.xlu0 %701, %v641
  %v703 = vpop.permute.xlu0 %702
  %704 = vset.pattern.permute.xlu0 2
  %705 = vperm.xlu0 %704, %v642
  %v706 = vpop.permute.xlu0 %705
  %707 = vset.pattern.permute.xlu0 2
  %708 = vperm.xlu0 %707, %v643
  %v709 = vpop.permute.xlu0 %708
  %710 = vset.pattern.permute.xlu0 2
  %711 = vperm.xlu0 %710, %v644
  %v712 = vpop.permute.xlu0 %711
  %713 = vset.pattern.permute.xlu0 2
  %714 = vperm.xlu0 %713, %v645
  %v715 = vpop.permute.xlu0 %714
  %716 = vset.pattern.permute.xlu0 2
  %717 = vperm.xlu0 %716, %v646
  %v718 = vpop.permute.xlu0 %717
  %719 = vset.pattern.permute.xlu0 2
  %720 = vperm.xlu0 %719, %v647
  %v721 = vpop.permute.xlu0 %720
  %722 = vset.pattern.permute.xlu0 2
  %723 = vperm.xlu0 %722, %v648
  %v724 = vpop.permute.xlu0 %723
  %725 = vset.pattern.permute.xlu0 2
  %726 = vperm.xlu0 %725, %v649
  %v727 = vpop.permute.xlu0 %726
  %728 = vset.pattern.permute.xlu0 2
  %729 = vperm.xlu0 %728, %v650
  %v730 = vpop.permute.xlu0 %729
  %731 = vset.pattern.permute.xlu0 2
  %732 = vperm.xlu0 %731, %v651
  %v733 = vpop.permute.xlu0 %732
  %734 = vset.pattern.permute.xlu0 2
  %735 = vperm.xlu0 %734, %v652
  %v736 = vpop.permute.xlu0 %735
  %737 = vset.pattern.permute.xlu0 2
  %738 = vperm.xlu0 %737, %v653
  %v739 = vpop.permute.xlu0 %738
  %740 = vset.pattern.permute.xlu0 2
  %741 = vperm.xlu0 %740, %v654
  %v742 = vpop.permute.xlu0 %741
  %743 = vset.pattern.permute.xlu0 2
  %744 = vperm.xlu0 %743, %v655
  %v745 = vpop.permute.xlu0 %744
  %746 = vset.pattern.permute.xlu0 2
  %747 = vperm.xlu0 %746, %v656
  %v748 = vpop.permute.xlu0 %747
  %749 = vset.pattern.permute.xlu0 2
  %750 = vperm.xlu0 %749, %v657
  %v751 = vpop.permute.xlu0 %750
  %752 = vset.pattern.permute.xlu0 2
  %753 = vperm.xlu0 %752, %v658
  %v754 = vpop.permute.xlu0 %753
  %vm755 = vcmp.eq.s32.totalorder %v18, %v661
  %vm756 = vcmp.eq.s32.totalorder %v18, %v664
  %vm757 = vcmp.eq.s32.totalorder %v18, %v667
  %vm758 = vcmp.eq.s32.totalorder %v18, %v670
  %vm759 = vcmp.eq.s32.totalorder %v18, %v673
  %vm760 = vcmp.eq.s32.totalorder %v18, %v676
  %vm761 = vcmp.eq.s32.totalorder %v18, %v679
  %vm762 = vcmp.eq.s32.totalorder %v18, %v682
  %vm763 = vcmp.eq.s32.totalorder %v18, %v685
  %vm764 = vcmp.eq.s32.totalorder %v18, %v688
  %vm765 = vcmp.eq.s32.totalorder %v18, %v691
  %vm766 = vcmp.eq.s32.totalorder %v18, %v694
  %vm767 = vcmp.eq.s32.totalorder %v18, %v697
  %vm768 = vcmp.eq.s32.totalorder %v18, %v700
  %vm769 = vcmp.eq.s32.totalorder %v18, %v703
  %vm770 = vcmp.eq.s32.totalorder %v18, %v706
  %vm771 = vcmp.eq.s32.totalorder %v18, %v709
  %vm772 = vcmp.eq.s32.totalorder %v18, %v712
  %vm773 = vcmp.eq.s32.totalorder %v18, %v715
  %vm774 = vcmp.eq.s32.totalorder %v18, %v718
  %vm775 = vcmp.eq.s32.totalorder %v18, %v721
  %vm776 = vcmp.eq.s32.totalorder %v18, %v724
  %vm777 = vcmp.eq.s32.totalorder %v18, %v727
  %vm778 = vcmp.eq.s32.totalorder %v18, %v730
  %vm779 = vcmp.eq.s32.totalorder %v18, %v733
  %vm780 = vcmp.eq.s32.totalorder %v18, %v736
  %vm781 = vcmp.eq.s32.totalorder %v18, %v739
  %vm782 = vcmp.eq.s32.totalorder %v18, %v742
  %vm783 = vcmp.eq.s32.totalorder %v18, %v745
  %vm784 = vcmp.eq.s32.totalorder %v18, %v748
  %vm785 = vcmp.eq.s32.totalorder %v18, %v751
  %vm786 = vcmp.eq.s32.totalorder %v18, %v754
  %vm787 = vmor %vm531, %vm755
  %vm788 = vmor %vm532, %vm756
  %vm789 = vmor %vm533, %vm757
  %vm790 = vmor %vm534, %vm758
  %vm791 = vmor %vm535, %vm759
  %vm792 = vmor %vm536, %vm760
  %vm793 = vmor %vm537, %vm761
  %vm794 = vmor %vm538, %vm762
  %vm795 = vmor %vm539, %vm763
  %vm796 = vmor %vm540, %vm764
  %vm797 = vmor %vm541, %vm765
  %vm798 = vmor %vm542, %vm766
  %vm799 = vmor %vm543, %vm767
  %vm800 = vmor %vm544, %vm768
  %vm801 = vmor %vm545, %vm769
  %vm802 = vmor %vm546, %vm770
  %vm803 = vmor %vm547, %vm771
  %vm804 = vmor %vm548, %vm772
  %vm805 = vmor %vm549, %vm773
  %vm806 = vmor %vm550, %vm774
  %vm807 = vmor %vm551, %vm775
  %vm808 = vmor %vm552, %vm776
  %vm809 = vmor %vm553, %vm777
  %vm810 = vmor %vm554, %vm778
  %vm811 = vmor %vm555, %vm779
  %vm812 = vmor %vm556, %vm780
  %vm813 = vmor %vm557, %vm781
  %vm814 = vmor %vm558, %vm782
  %vm815 = vmor %vm559, %vm783
  %vm816 = vmor %vm560, %vm784
  %vm817 = vmor %vm561, %vm785
  %vm818 = vmor %vm562, %vm786
  %vm819 = vcmp.lt.s32.totalorder %v52, 12
  %v820 = vsel %vm819, %v52, 12
  %vm821 = vcmp.lt.s32.totalorder %v54, 12
  %v822 = vsel %vm821, %v54, 12
  %vm823 = vcmp.lt.s32.totalorder %v56, 12
  %v824 = vsel %vm823, %v56, 12
  %vm825 = vcmp.lt.s32.totalorder %v58, 12
  %v826 = vsel %vm825, %v58, 12
  %vm827 = vcmp.lt.s32.totalorder %v60, 12
  %v828 = vsel %vm827, %v60, 12
  %vm829 = vcmp.lt.s32.totalorder %v62, 12
  %v830 = vsel %vm829, %v62, 12
  %vm831 = vcmp.lt.s32.totalorder %v64, 12
  %v832 = vsel %vm831, %v64, 12
  %vm833 = vcmp.lt.s32.totalorder %v66, 12
  %v834 = vsel %vm833, %v66, 12
  %vm835 = vcmp.lt.s32.totalorder %v68, 12
  %v836 = vsel %vm835, %v68, 12
  %vm837 = vcmp.lt.s32.totalorder %v70, 12
  %v838 = vsel %vm837, %v70, 12
  %vm839 = vcmp.lt.s32.totalorder %v72, 12
  %v840 = vsel %vm839, %v72, 12
  %vm841 = vcmp.lt.s32.totalorder %v74, 12
  %v842 = vsel %vm841, %v74, 12
  %vm843 = vcmp.lt.s32.totalorder %v76, 12
  %v844 = vsel %vm843, %v76, 12
  %vm845 = vcmp.lt.s32.totalorder %v78, 12
  %v846 = vsel %vm845, %v78, 12
  %vm847 = vcmp.lt.s32.totalorder %v80, 12
  %v848 = vsel %vm847, %v80, 12
  %vm849 = vcmp.lt.s32.totalorder %v82, 12
  %v850 = vsel %vm849, %v82, 12
  %vm851 = vcmp.lt.s32.totalorder %v84, 12
  %v852 = vsel %vm851, %v84, 12
  %vm853 = vcmp.lt.s32.totalorder %v86, 12
  %v854 = vsel %vm853, %v86, 12
  %vm855 = vcmp.lt.s32.totalorder %v88, 12
  %v856 = vsel %vm855, %v88, 12
  %vm857 = vcmp.lt.s32.totalorder %v90, 12
  %v858 = vsel %vm857, %v90, 12
  %vm859 = vcmp.lt.s32.totalorder %v92, 12
  %v860 = vsel %vm859, %v92, 12
  %vm861 = vcmp.lt.s32.totalorder %v94, 12
  %v862 = vsel %vm861, %v94, 12
  %vm863 = vcmp.lt.s32.totalorder %v96, 12
  %v864 = vsel %vm863, %v96, 12
  %vm865 = vcmp.lt.s32.totalorder %v98, 12
  %v866 = vsel %vm865, %v98, 12
  %vm867 = vcmp.lt.s32.totalorder %v100, 12
  %v868 = vsel %vm867, %v100, 12
  %vm869 = vcmp.lt.s32.totalorder %v102, 12
  %v870 = vsel %vm869, %v102, 12
  %vm871 = vcmp.lt.s32.totalorder %v104, 12
  %v872 = vsel %vm871, %v104, 12
  %vm873 = vcmp.lt.s32.totalorder %v106, 12
  %v874 = vsel %vm873, %v106, 12
  %vm875 = vcmp.lt.s32.totalorder %v108, 12
  %v876 = vsel %vm875, %v108, 12
  %vm877 = vcmp.lt.s32.totalorder %v110, 12
  %v878 = vsel %vm877, %v110, 12
  %vm879 = vcmp.lt.s32.totalorder %v112, 12
  %v880 = vsel %vm879, %v112, 12
  %vm881 = vcmp.lt.s32.totalorder %v114, 12
  %v882 = vsel %vm881, %v114, 12
  %v883 = vadd.s32 %v820, 39
  %v884 = vadd.s32 %v822, 39
  %v885 = vadd.s32 %v824, 39
  %v886 = vadd.s32 %v826, 39
  %v887 = vadd.s32 %v828, 39
  %v888 = vadd.s32 %v830, 39
  %v889 = vadd.s32 %v832, 39
  %v890 = vadd.s32 %v834, 39
  %v891 = vadd.s32 %v836, 39
  %v892 = vadd.s32 %v838, 39
  %v893 = vadd.s32 %v840, 39
  %v894 = vadd.s32 %v842, 39
  %v895 = vadd.s32 %v844, 39
  %v896 = vadd.s32 %v846, 39
  %v897 = vadd.s32 %v848, 39
  %v898 = vadd.s32 %v850, 39
  %v899 = vadd.s32 %v852, 39
  %v900 = vadd.s32 %v854, 39
  %v901 = vadd.s32 %v856, 39
  %v902 = vadd.s32 %v858, 39
  %v903 = vadd.s32 %v860, 39
  %v904 = vadd.s32 %v862, 39
  %v905 = vadd.s32 %v864, 39
  %v906 = vadd.s32 %v866, 39
  %v907 = vadd.s32 %v868, 39
  %v908 = vadd.s32 %v870, 39
  %v909 = vadd.s32 %v872, 39
  %v910 = vadd.s32 %v874, 39
  %v911 = vadd.s32 %v876, 39
  %v912 = vadd.s32 %v878, 39
  %v913 = vadd.s32 %v880, 39
  %v914 = vadd.s32 %v882, 39
  %915 = vset.pattern.permute.xlu0 3
  %916 = vperm.xlu0 %915, %v883
  %v917 = vpop.permute.xlu0 %916
  %918 = vset.pattern.permute.xlu0 3
  %919 = vperm.xlu0 %918, %v884
  %v920 = vpop.permute.xlu0 %919
  %921 = vset.pattern.permute.xlu0 3
  %922 = vperm.xlu0 %921, %v885
  %v923 = vpop.permute.xlu0 %922
  %924 = vset.pattern.permute.xlu0 3
  %925 = vperm.xlu0 %924, %v886
  %v926 = vpop.permute.xlu0 %925
  %927 = vset.pattern.permute.xlu0 3
  %928 = vperm.xlu0 %927, %v887
  %v929 = vpop.permute.xlu0 %928
  %930 = vset.pattern.permute.xlu0 3
  %931 = vperm.xlu0 %930, %v888
  %v932 = vpop.permute.xlu0 %931
  %933 = vset.pattern.permute.xlu0 3
  %934 = vperm.xlu0 %933, %v889
  %v935 = vpop.permute.xlu0 %934
  %936 = vset.pattern.permute.xlu0 3
  %937 = vperm.xlu0 %936, %v890
  %v938 = vpop.permute.xlu0 %937
  %939 = vset.pattern.permute.xlu0 3
  %940 = vperm.xlu0 %939, %v891
  %v941 = vpop.permute.xlu0 %940
  %942 = vset.pattern.permute.xlu0 3
  %943 = vperm.xlu0 %942, %v892
  %v944 = vpop.permute.xlu0 %943
  %945 = vset.pattern.permute.xlu0 3
  %946 = vperm.xlu0 %945, %v893
  %v947 = vpop.permute.xlu0 %946
  %948 = vset.pattern.permute.xlu0 3
  %949 = vperm.xlu0 %948, %v894
  %v950 = vpop.permute.xlu0 %949
  %951 = vset.pattern.permute.xlu0 3
  %952 = vperm.xlu0 %951, %v895
  %v953 = vpop.permute.xlu0 %952
  %954 = vset.pattern.permute.xlu0 3
  %955 = vperm.xlu0 %954, %v896
  %v956 = vpop.permute.xlu0 %955
  %957 = vset.pattern.permute.xlu0 3
  %958 = vperm.xlu0 %957, %v897
  %v959 = vpop.permute.xlu0 %958
  %960 = vset.pattern.permute.xlu0 3
  %961 = vperm.xlu0 %960, %v898
  %v962 = vpop.permute.xlu0 %961
  %963 = vset.pattern.permute.xlu0 3
  %964 = vperm.xlu0 %963, %v899
  %v965 = vpop.permute.xlu0 %964
  %966 = vset.pattern.permute.xlu0 3
  %967 = vperm.xlu0 %966, %v900
  %v968 = vpop.permute.xlu0 %967
  %969 = vset.pattern.permute.xlu0 3
  %970 = vperm.xlu0 %969, %v901
  %v971 = vpop.permute.xlu0 %970
  %972 = vset.pattern.permute.xlu0 3
  %973 = vperm.xlu0 %972, %v902
  %v974 = vpop.permute.xlu0 %973
  %975 = vset.pattern.permute.xlu0 3
  %976 = vperm.xlu0 %975, %v903
  %v977 = vpop.permute.xlu0 %976
  %978 = vset.pattern.permute.xlu0 3
  %979 = vperm.xlu0 %978, %v904
  %v980 = vpop.permute.xlu0 %979
  %981 = vset.pattern.permute.xlu0 3
  %982 = vperm.xlu0 %981, %v905
  %v983 = vpop.permute.xlu0 %982
  %984 = vset.pattern.permute.xlu0 3
  %985 = vperm.xlu0 %984, %v906
  %v986 = vpop.permute.xlu0 %985
  %987 = vset.pattern.permute.xlu0 3
  %988 = vperm.xlu0 %987, %v907
  %v989 = vpop.permute.xlu0 %988
  %990 = vset.pattern.permute.xlu0 3
  %991 = vperm.xlu0 %990, %v908
  %v992 = vpop.permute.xlu0 %991
  %993 = vset.pattern.permute.xlu0 3
  %994 = vperm.xlu0 %993, %v909
  %v995 = vpop.permute.xlu0 %994
  %996 = vset.pattern.permute.xlu0 3
  %997 = vperm.xlu0 %996, %v910
  %v998 = vpop.permute.xlu0 %997
  %999 = vset.pattern.permute.xlu0 3
  %1000 = vperm.xlu0 %999, %v911
  %v1001 = vpop.permute.xlu0 %1000
  %1002 = vset.pattern.permute.xlu0 3
  %1003 = vperm.xlu0 %1002, %v912
  %v1004 = vpop.permute.xlu0 %1003
  %1005 = vset.pattern.permute.xlu0 3
  %1006 = vperm.xlu0 %1005, %v913
  %v1007 = vpop.permute.xlu0 %1006
  %1008 = vset.pattern.permute.xlu0 3
  %1009 = vperm.xlu0 %1008, %v914
  %v1010 = vpop.permute.xlu0 %1009
  %vm1011 = vcmp.eq.s32.totalorder %v18, %v917
  %vm1012 = vcmp.eq.s32.totalorder %v18, %v920
  %vm1013 = vcmp.eq.s32.totalorder %v18, %v923
  %vm1014 = vcmp.eq.s32.totalorder %v18, %v926
  %vm1015 = vcmp.eq.s32.totalorder %v18, %v929
  %vm1016 = vcmp.eq.s32.totalorder %v18, %v932
  %vm1017 = vcmp.eq.s32.totalorder %v18, %v935
  %vm1018 = vcmp.eq.s32.totalorder %v18, %v938
  %vm1019 = vcmp.eq.s32.totalorder %v18, %v941
  %vm1020 = vcmp.eq.s32.totalorder %v18, %v944
  %vm1021 = vcmp.eq.s32.totalorder %v18, %v947
  %vm1022 = vcmp.eq.s32.totalorder %v18, %v950
  %vm1023 = vcmp.eq.s32.totalorder %v18, %v953
  %vm1024 = vcmp.eq.s32.totalorder %v18, %v956
  %vm1025 = vcmp.eq.s32.totalorder %v18, %v959
  %vm1026 = vcmp.eq.s32.totalorder %v18, %v962
  %vm1027 = vcmp.eq.s32.totalorder %v18, %v965
  %vm1028 = vcmp.eq.s32.totalorder %v18, %v968
  %vm1029 = vcmp.eq.s32.totalorder %v18, %v971
  %vm1030 = vcmp.eq.s32.totalorder %v18, %v974
  %vm1031 = vcmp.eq.s32.totalorder %v18, %v977
  %vm1032 = vcmp.eq.s32.totalorder %v18, %v980
  %vm1033 = vcmp.eq.s32.totalorder %v18, %v983
  %vm1034 = vcmp.eq.s32.totalorder %v18, %v986
  %vm1035 = vcmp.eq.s32.totalorder %v18, %v989
  %vm1036 = vcmp.eq.s32.totalorder %v18, %v992
  %vm1037 = vcmp.eq.s32.totalorder %v18, %v995
  %vm1038 = vcmp.eq.s32.totalorder %v18, %v998
  %vm1039 = vcmp.eq.s32.totalorder %v18, %v1001
  %vm1040 = vcmp.eq.s32.totalorder %v18, %v1004
  %vm1041 = vcmp.eq.s32.totalorder %v18, %v1007
  %vm1042 = vcmp.eq.s32.totalorder %v18, %v1010
  %vm1043 = vmor %vm787, %vm1011
  %vm1044 = vmor %vm788, %vm1012
  %vm1045 = vmor %vm789, %vm1013
  %vm1046 = vmor %vm790, %vm1014
  %vm1047 = vmor %vm791, %vm1015
  %vm1048 = vmor %vm792, %vm1016
  %vm1049 = vmor %vm793, %vm1017
  %vm1050 = vmor %vm794, %vm1018
  %vm1051 = vmor %vm795, %vm1019
  %vm1052 = vmor %vm796, %vm1020
  %vm1053 = vmor %vm797, %vm1021
  %vm1054 = vmor %vm798, %vm1022
  %vm1055 = vmor %vm799, %vm1023
  %vm1056 = vmor %vm800, %vm1024
  %vm1057 = vmor %vm801, %vm1025
  %vm1058 = vmor %vm802, %vm1026
  %vm1059 = vmor %vm803, %vm1027
  %vm1060 = vmor %vm804, %vm1028
  %vm1061 = vmor %vm805, %vm1029
  %vm1062 = vmor %vm806, %vm1030
  %vm1063 = vmor %vm807, %vm1031
  %vm1064 = vmor %vm808, %vm1032
  %vm1065 = vmor %vm809, %vm1033
  %vm1066 = vmor %vm810, %vm1034
  %vm1067 = vmor %vm811, %vm1035
  %vm1068 = vmor %vm812, %vm1036
  %vm1069 = vmor %vm813, %vm1037
  %vm1070 = vmor %vm814, %vm1038
  %vm1071 = vmor %vm815, %vm1039
  %vm1072 = vmor %vm816, %vm1040
  %vm1073 = vmor %vm817, %vm1041
  %vm1074 = vmor %vm818, %vm1042
  %v1075 = vsel %vm1043, 1.0, 0.0
  %v1076 = vsel %vm1044, 1.0, 0.0
  %v1077 = vsel %vm1045, 1.0, 0.0
  %v1078 = vsel %vm1046, 1.0, 0.0
  %v1079 = vsel %vm1047, 1.0, 0.0
  %v1080 = vsel %vm1048, 1.0, 0.0
  %v1081 = vsel %vm1049, 1.0, 0.0
  %v1082 = vsel %vm1050, 1.0, 0.0
  %v1083 = vsel %vm1051, 1.0, 0.0
  %v1084 = vsel %vm1052, 1.0, 0.0
  %v1085 = vsel %vm1053, 1.0, 0.0
  %v1086 = vsel %vm1054, 1.0, 0.0
  %v1087 = vsel %vm1055, 1.0, 0.0
  %v1088 = vsel %vm1056, 1.0, 0.0
  %v1089 = vsel %vm1057, 1.0, 0.0
  %v1090 = vsel %vm1058, 1.0, 0.0
  %v1091 = vsel %vm1059, 1.0, 0.0
  %v1092 = vsel %vm1060, 1.0, 0.0
  %v1093 = vsel %vm1061, 1.0, 0.0
  %v1094 = vsel %vm1062, 1.0, 0.0
  %v1095 = vsel %vm1063, 1.0, 0.0
  %v1096 = vsel %vm1064, 1.0, 0.0
  %v1097 = vsel %vm1065, 1.0, 0.0
  %v1098 = vsel %vm1066, 1.0, 0.0
  %v1099 = vsel %vm1067, 1.0, 0.0
  %v1100 = vsel %vm1068, 1.0, 0.0
  %v1101 = vsel %vm1069, 1.0, 0.0
  %v1102 = vsel %vm1070, 1.0, 0.0
  %v1103 = vsel %vm1071, 1.0, 0.0
  %v1104 = vsel %vm1072, 1.0, 0.0
  %v1105 = vsel %vm1073, 1.0, 0.0
  %v1106 = vsel %vm1074, 1.0, 0.0
  %v1107 = vpack.c.bf16 %v1076, %v1075
  %v1108 = vpack.c.bf16 %v1078, %v1077
  %v1109 = vpack.c.bf16 %v1080, %v1079
  %v1110 = vpack.c.bf16 %v1082, %v1081
  %v1111 = vpack.c.bf16 %v1084, %v1083
  %v1112 = vpack.c.bf16 %v1086, %v1085
  %v1113 = vpack.c.bf16 %v1088, %v1087
  %v1114 = vpack.c.bf16 %v1090, %v1089
  %v1115 = vpack.c.bf16 %v1092, %v1091
  %v1116 = vpack.c.bf16 %v1094, %v1093
  %v1117 = vpack.c.bf16 %v1096, %v1095
  %v1118 = vpack.c.bf16 %v1098, %v1097
  %v1119 = vpack.c.bf16 %v1100, %v1099
  %v1120 = vpack.c.bf16 %v1102, %v1101
  %v1121 = vpack.c.bf16 %v1104, %v1103
  %v1122 = vpack.c.bf16 %v1106, %v1105
  %v1123 = vld [vmem:[%s1] sm:$0xf]
  %v1124 = vld [vmem:[%s1 + $0x4] sm:$0xf]
  %v1125 = vld [vmem:[%s1 + $0x8] sm:$0xf]
  %v1126 = vld [vmem:[%s1 + $0xc] sm:$0xf]
  %v1127 = vld [vmem:[%s1 + $0x10] sm:$0xf]
  %v1128 = vld [vmem:[%s1 + $0x14] sm:$0xf]
  %v1129 = vld [vmem:[%s1 + $0x18] sm:$0xf]
  %v1130 = vld [vmem:[%s1 + $0x1c] sm:$0xf]
  %v1131 = vld [vmem:[%s1 + $0x20] sm:$0xf]
  %v1132 = vld [vmem:[%s1 + $0x24] sm:$0xf]
  %v1133 = vld [vmem:[%s1 + $0x28] sm:$0xf]
  %v1134 = vld [vmem:[%s1 + $0x2c] sm:$0xf]
  %v1135 = vld [vmem:[%s1 + $0x30] sm:$0xf]
  %v1136 = vld [vmem:[%s1 + $0x34] sm:$0xf]
  %v1137 = vld [vmem:[%s1 + $0x38] sm:$0xf]
  %v1138 = vld [vmem:[%s1 + $0x3c] sm:$0xf]
  %v1155 = vunpack.c.l.b16 %v1123
  %v1156 = vunpack.c.l.b16 %v1124
  %v1157 = vunpack.c.l.b16 %v1125
  %v1158 = vunpack.c.l.b16 %v1126
  %v1159 = vunpack.c.l.b16 %v1127
  %v1160 = vunpack.c.l.b16 %v1128
  %v1161 = vunpack.c.l.b16 %v1129
  %v1162 = vunpack.c.l.b16 %v1130
  %v1163 = vunpack.c.l.b16 %v1131
  %v1164 = vunpack.c.l.b16 %v1132
  %v1165 = vunpack.c.l.b16 %v1133
  %v1166 = vunpack.c.l.b16 %v1134
  %v1167 = vunpack.c.l.b16 %v1135
  %v1168 = vunpack.c.l.b16 %v1136
  %v1169 = vunpack.c.l.b16 %v1137
  %v1170 = vunpack.c.l.b16 %v1138
  %v1171 = vpack.c.b16 %v1156, %v1155
  %v1172 = vpack.c.b16 %v1158, %v1157
  %v1173 = vpack.c.b16 %v1160, %v1159
  %v1174 = vpack.c.b16 %v1162, %v1161
  %v1175 = vpack.c.b16 %v1164, %v1163
  %v1176 = vpack.c.b16 %v1166, %v1165
  %v1177 = vpack.c.b16 %v1168, %v1167
  %v1178 = vpack.c.b16 %v1170, %v1169
  %1187 = vmatprep.subr.bf16.mxu0 0
  %1188 = vmatpush1.bf16.msra.mxu0 %v1171
  %1189 = vmatprep.subr.bf16.mxu0 0
  %1190 = vmatpush1.bf16.msra.mxu0 %v1172
  %1191 = vmatprep.subr.bf16.mxu0 0
  %1192 = vmatpush1.bf16.msra.mxu0 %v1173
  %1193 = vmatprep.subr.bf16.mxu0 0
  %1194 = vmatpush1.bf16.msra.mxu0 %v1174
  %1195 = vmatprep.subr.bf16.mxu0 0
  %1196 = vmatpush1.bf16.msra.mxu0 %v1175
  %1197 = vmatprep.subr.bf16.mxu0 0
  %1198 = vmatpush1.bf16.msra.mxu0 %v1176
  %1199 = vmatprep.subr.bf16.mxu0 0
  %1200 = vmatpush1.bf16.msra.mxu0 %v1177
  %1201 = vmatprep.subr.bf16.mxu0 0
  %1202 = vmatpush1.bf16.msra.mxu0 %v1178
  %1203 = vmatprep.subr.bf16.mxu0 0
  %1204 = vmatpush1.bf16.msra.mxu0 0
  %1205 = vmatprep.subr.bf16.mxu0 0
  %1206 = vmatpush1.bf16.msra.mxu0 0
  %1207 = vmatprep.subr.bf16.mxu0 0
  %1208 = vmatpush1.bf16.msra.mxu0 0
  %1209 = vmatprep.subr.bf16.mxu0 0
  %1210 = vmatpush1.bf16.msra.mxu0 0
  %1211 = vmatprep.subr.bf16.mxu0 0
  %1212 = vmatpush1.bf16.msra.mxu0 0
  %1213 = vmatprep.subr.bf16.mxu0 0
  %1214 = vmatpush1.bf16.msra.mxu0 0
  %1215 = vmatprep.subr.bf16.mxu0 0
  %1216 = vmatpush1.bf16.msra.mxu0 0
  %1217 = vmatprep.subr.bf16.mxu0 0
  %1218 = vmatpush1.bf16.msra.mxu0 0
  %1219 = vmatprep.mubr.bf16.mxu0 0
  %1220 = vmatmul.mubr.bf16.gmra.mrb[0].mxu0 %v1107
  %v1221 = vpop.f32.mrb[0].mxu0
  %v1222 = vadd.f32 0.0, %v1221
  %v1223 = vpop.f32.mrb[0].mxu0
  %v1224 = vpop.f32.mrb[0].mxu0
  %v1225 = vadd.f32 0.0, %v1224
  %v1226 = vpop.f32.mrb[0].mxu0
  %1227 = vmatprep.mubr.bf16.mxu0 0
  %1228 = vmatmul.mubr.bf16.gmra.mrb[0].mxu0 %v1108
  %v1229 = vpop.f32.mrb[0].mxu0
  %v1230 = vadd.f32 0.0, %v1229
  %v1231 = vpop.f32.mrb[0].mxu0
  %v1232 = vpop.f32.mrb[0].mxu0
  %v1233 = vadd.f32 0.0, %v1232
  %v1234 = vpop.f32.mrb[0].mxu0
  %1235 = vmatprep.mubr.bf16.mxu0 0
  %1236 = vmatmul.mubr.bf16.gmra.mrb[0].mxu0 %v1109
  %v1237 = vpop.f32.mrb[0].mxu0
  %v1238 = vadd.f32 0.0, %v1237
  %v1239 = vpop.f32.mrb[0].mxu0
  %v1240 = vpop.f32.mrb[0].mxu0
  %v1241 = vadd.f32 0.0, %v1240
  %v1242 = vpop.f32.mrb[0].mxu0
  %1243 = vmatprep.mubr.bf16.mxu0 0
  %1244 = vmatmul.mubr.bf16.gmra.mrb[0].mxu0 %v1110
  %v1245 = vpop.f32.mrb[0].mxu0
  %v1246 = vadd.f32 0.0, %v1245
  %v1247 = vpop.f32.mrb[0].mxu0
  %v1248 = vpop.f32.mrb[0].mxu0
  %v1249 = vadd.f32 0.0, %v1248
  %v1250 = vpop.f32.mrb[0].mxu0
  %1251 = vmatprep.mubr.bf16.mxu0 0
  %1252 = vmatmul.mubr.bf16.gmra.mrb[0].mxu0 %v1111
  %v1253 = vpop.f32.mrb[0].mxu0
  %v1254 = vadd.f32 0.0, %v1253
  %v1255 = vpop.f32.mrb[0].mxu0
  %v1256 = vpop.f32.mrb[0].mxu0
  %v1257 = vadd.f32 0.0, %v1256
  %v1258 = vpop.f32.mrb[0].mxu0
  %1259 = vmatprep.mubr.bf16.mxu0 0
  %1260 = vmatmul.mubr.bf16.gmra.mrb[0].mxu0 %v1112
  %v1261 = vpop.f32.mrb[0].mxu0
  %v1262 = vadd.f32 0.0, %v1261
  %v1263 = vpop.f32.mrb[0].mxu0
  %v1264 = vpop.f32.mrb[0].mxu0
  %v1265 = vadd.f32 0.0, %v1264
  %v1266 = vpop.f32.mrb[0].mxu0
  %1267 = vmatprep.mubr.bf16.mxu0 0
  %1268 = vmatmul.mubr.bf16.gmra.mrb[0].mxu0 %v1113
  %v1269 = vpop.f32.mrb[0].mxu0
  %v1270 = vadd.f32 0.0, %v1269
  %v1271 = vpop.f32.mrb[0].mxu0
  %v1272 = vpop.f32.mrb[0].mxu0
  %v1273 = vadd.f32 0.0, %v1272
  %v1274 = vpop.f32.mrb[0].mxu0
  %1275 = vmatprep.mubr.bf16.mxu0 0
  %1276 = vmatmul.mubr.bf16.gmra.mrb[0].mxu0 %v1114
  %v1277 = vpop.f32.mrb[0].mxu0
  %v1278 = vadd.f32 0.0, %v1277
  %v1279 = vpop.f32.mrb[0].mxu0
  %v1280 = vpop.f32.mrb[0].mxu0
  %v1281 = vadd.f32 0.0, %v1280
  %v1282 = vpop.f32.mrb[0].mxu0
  %1283 = vmatprep.mubr.bf16.mxu0 0
  %1284 = vmatmul.mubr.bf16.gmra.mrb[0].mxu0 %v1115
  %v1285 = vpop.f32.mrb[0].mxu0
  %v1286 = vadd.f32 0.0, %v1285
  %v1287 = vpop.f32.mrb[0].mxu0
  %v1288 = vpop.f32.mrb[0].mxu0
  %v1289 = vadd.f32 0.0, %v1288
  %v1290 = vpop.f32.mrb[0].mxu0
  %1291 = vmatprep.mubr.bf16.mxu0 0
  %1292 = vmatmul.mubr.bf16.gmra.mrb[0].mxu0 %v1116
  %v1293 = vpop.f32.mrb[0].mxu0
  %v1294 = vadd.f32 0.0, %v1293
  %v1295 = vpop.f32.mrb[0].mxu0
  %v1296 = vpop.f32.mrb[0].mxu0
  %v1297 = vadd.f32 0.0, %v1296
  %v1298 = vpop.f32.mrb[0].mxu0
  %1299 = vmatprep.mubr.bf16.mxu0 0
  %1300 = vmatmul.mubr.bf16.gmra.mrb[0].mxu0 %v1117
  %v1301 = vpop.f32.mrb[0].mxu0
  %v1302 = vadd.f32 0.0, %v1301
  %v1303 = vpop.f32.mrb[0].mxu0
  %v1304 = vpop.f32.mrb[0].mxu0
  %v1305 = vadd.f32 0.0, %v1304
  %v1306 = vpop.f32.mrb[0].mxu0
  %1307 = vmatprep.mubr.bf16.mxu0 0
  %1308 = vmatmul.mubr.bf16.gmra.mrb[0].mxu0 %v1118
  %v1309 = vpop.f32.mrb[0].mxu0
  %v1310 = vadd.f32 0.0, %v1309
  %v1311 = vpop.f32.mrb[0].mxu0
  %v1312 = vpop.f32.mrb[0].mxu0
  %v1313 = vadd.f32 0.0, %v1312
  %v1314 = vpop.f32.mrb[0].mxu0
  %1315 = vmatprep.mubr.bf16.mxu0 0
  %1316 = vmatmul.mubr.bf16.gmra.mrb[0].mxu0 %v1119
  %v1317 = vpop.f32.mrb[0].mxu0
  %v1318 = vadd.f32 0.0, %v1317
  %v1319 = vpop.f32.mrb[0].mxu0
  %v1320 = vpop.f32.mrb[0].mxu0
  %v1321 = vadd.f32 0.0, %v1320
  %v1322 = vpop.f32.mrb[0].mxu0
  %1323 = vmatprep.mubr.bf16.mxu0 0
  %1324 = vmatmul.mubr.bf16.gmra.mrb[0].mxu0 %v1120
  %v1325 = vpop.f32.mrb[0].mxu0
  %v1326 = vadd.f32 0.0, %v1325
  %v1327 = vpop.f32.mrb[0].mxu0
  %v1328 = vpop.f32.mrb[0].mxu0
  %v1329 = vadd.f32 0.0, %v1328
  %v1330 = vpop.f32.mrb[0].mxu0
  %1331 = vmatprep.mubr.bf16.mxu0 0
  %1332 = vmatmul.mubr.bf16.gmra.mrb[0].mxu0 %v1121
  %v1333 = vpop.f32.mrb[0].mxu0
  %v1334 = vadd.f32 0.0, %v1333
  %v1335 = vpop.f32.mrb[0].mxu0
  %v1336 = vpop.f32.mrb[0].mxu0
  %v1337 = vadd.f32 0.0, %v1336
  %v1338 = vpop.f32.mrb[0].mxu0
  %1339 = vmatprep.mubr.bf16.mxu0 0
  %1340 = vmatmul.mubr.bf16.gmra.mrb[0].mxu0 %v1122
  %v1341 = vpop.f32.mrb[0].mxu0
  %v1342 = vadd.f32 0.0, %v1341
  %v1343 = vpop.f32.mrb[0].mxu0
  %v1344 = vpop.f32.mrb[0].mxu0
  %v1345 = vadd.f32 0.0, %v1344
  %v1346 = vpop.f32.mrb[0].mxu0
  %1347 = vdwg.mxu0
  %1348 = vst [vmem:[%s3] sm:$0xff] %v1222
  %1349 = vst [vmem:[%s3 + $0x8] sm:$0xff] %v1225
  %1350 = vst [vmem:[%s3 + $0x10] sm:$0xff] %v1230
  %1351 = vst [vmem:[%s3 + $0x18] sm:$0xff] %v1233
  %1352 = vst [vmem:[%s3 + $0x20] sm:$0xff] %v1238
  %1353 = vst [vmem:[%s3 + $0x28] sm:$0xff] %v1241
  %1354 = vst [vmem:[%s3 + $0x30] sm:$0xff] %v1246
  %1355 = vst [vmem:[%s3 + $0x38] sm:$0xff] %v1249
  %1356 = vst [vmem:[%s3 + $0x40] sm:$0xff] %v1254
  %1357 = vst [vmem:[%s3 + $0x48] sm:$0xff] %v1257
  %1358 = vst [vmem:[%s3 + $0x50] sm:$0xff] %v1262
  %1359 = vst [vmem:[%s3 + $0x58] sm:$0xff] %v1265
  %1360 = vst [vmem:[%s3 + $0x60] sm:$0xff] %v1270
  %1361 = vst [vmem:[%s3 + $0x68] sm:$0xff] %v1273
  %1362 = vst [vmem:[%s3 + $0x70] sm:$0xff] %v1278
  %1363 = vst [vmem:[%s3 + $0x78] sm:$0xff] %v1281
  %1364 = vst [vmem:[%s3 + $0x80] sm:$0xff] %v1286
  %1365 = vst [vmem:[%s3 + $0x88] sm:$0xff] %v1289
  %1366 = vst [vmem:[%s3 + $0x90] sm:$0xff] %v1294
  %1367 = vst [vmem:[%s3 + $0x98] sm:$0xff] %v1297
  %1368 = vst [vmem:[%s3 + $0xa0] sm:$0xff] %v1302
  %1369 = vst [vmem:[%s3 + $0xa8] sm:$0xff] %v1305
  %1370 = vst [vmem:[%s3 + $0xb0] sm:$0xff] %v1310
  %1371 = vst [vmem:[%s3 + $0xb8] sm:$0xff] %v1313
  %1372 = vst [vmem:[%s3 + $0xc0] sm:$0xff] %v1318
  %1373 = vst [vmem:[%s3 + $0xc8] sm:$0xff] %v1321
  %1374 = vst [vmem:[%s3 + $0xd0] sm:$0xff] %v1326
  %1375 = vst [vmem:[%s3 + $0xd8] sm:$0xff] %v1329
  %1376 = vst [vmem:[%s3 + $0xe0] sm:$0xff] %v1334
  %1377 = vst [vmem:[%s3 + $0xe8] sm:$0xff] %v1337
  %1378 = vst [vmem:[%s3 + $0xf0] sm:$0xff] %v1342
  %1379 = vst [vmem:[%s3 + $0xf8] sm:$0xff] %v1345
  %v1380 = vld [vmem:[%s0] sm:$0xff]
  %v1381 = vld [vmem:[%s0 + $0x8] sm:$0xff]
  %v1382 = vld [vmem:[%s0 + $0x10] sm:$0xff]
  %v1383 = vld [vmem:[%s0 + $0x18] sm:$0xff]
  %v1384 = vld [vmem:[%s0 + $0x20] sm:$0xff]
  %v1385 = vld [vmem:[%s0 + $0x28] sm:$0xff]
  %v1386 = vld [vmem:[%s0 + $0x30] sm:$0xff]
  %v1387 = vld [vmem:[%s0 + $0x38] sm:$0xff]
  %v1388 = vld [vmem:[%s0 + $0x40] sm:$0xff]
  %v1389 = vld [vmem:[%s0 + $0x48] sm:$0xff]
  %v1390 = vld [vmem:[%s0 + $0x50] sm:$0xff]
  %v1391 = vld [vmem:[%s0 + $0x58] sm:$0xff]
  %v1392 = vld [vmem:[%s0 + $0x60] sm:$0xff]
  %v1393 = vld [vmem:[%s0 + $0x68] sm:$0xff]
  %v1394 = vld [vmem:[%s0 + $0x70] sm:$0xff]
  %v1395 = vld [vmem:[%s0 + $0x78] sm:$0xff]
  %v1396 = vld [vmem:[%s0 + $0x80] sm:$0xff]
  %v1397 = vld [vmem:[%s0 + $0x88] sm:$0xff]
  %v1398 = vld [vmem:[%s0 + $0x90] sm:$0xff]
  %v1399 = vld [vmem:[%s0 + $0x98] sm:$0xff]
  %v1400 = vld [vmem:[%s0 + $0xa0] sm:$0xff]
  %v1401 = vld [vmem:[%s0 + $0xa8] sm:$0xff]
  %v1402 = vld [vmem:[%s0 + $0xb0] sm:$0xff]
  %v1403 = vld [vmem:[%s0 + $0xb8] sm:$0xff]
  %v1404 = vld [vmem:[%s0 + $0xc0] sm:$0xff]
  %v1405 = vld [vmem:[%s0 + $0xc8] sm:$0xff]
  %v1406 = vld [vmem:[%s0 + $0xd0] sm:$0xff]
  %v1407 = vld [vmem:[%s0 + $0xd8] sm:$0xff]
  %v1408 = vld [vmem:[%s0 + $0xe0] sm:$0xff]
  %v1409 = vld [vmem:[%s0 + $0xe8] sm:$0xff]
  %v1410 = vld [vmem:[%s0 + $0xf0] sm:$0xff]
  %v1411 = vld [vmem:[%s0 + $0xf8] sm:$0xff]
  %vm1412 = vcmp.gt.s32.totalorder %v1380, 0
  %v1413 = vsel %vm1412, %v1380, 0
  %vm1414 = vcmp.gt.s32.totalorder %v1381, 0
  %v1415 = vsel %vm1414, %v1381, 0
  %vm1416 = vcmp.gt.s32.totalorder %v1382, 0
  %v1417 = vsel %vm1416, %v1382, 0
  %vm1418 = vcmp.gt.s32.totalorder %v1383, 0
  %v1419 = vsel %vm1418, %v1383, 0
  %vm1420 = vcmp.gt.s32.totalorder %v1384, 0
  %v1421 = vsel %vm1420, %v1384, 0
  %vm1422 = vcmp.gt.s32.totalorder %v1385, 0
  %v1423 = vsel %vm1422, %v1385, 0
  %vm1424 = vcmp.gt.s32.totalorder %v1386, 0
  %v1425 = vsel %vm1424, %v1386, 0
  %vm1426 = vcmp.gt.s32.totalorder %v1387, 0
  %v1427 = vsel %vm1426, %v1387, 0
  %vm1428 = vcmp.gt.s32.totalorder %v1388, 0
  %v1429 = vsel %vm1428, %v1388, 0
  %vm1430 = vcmp.gt.s32.totalorder %v1389, 0
  %v1431 = vsel %vm1430, %v1389, 0
  %vm1432 = vcmp.gt.s32.totalorder %v1390, 0
  %v1433 = vsel %vm1432, %v1390, 0
  %vm1434 = vcmp.gt.s32.totalorder %v1391, 0
  %v1435 = vsel %vm1434, %v1391, 0
  %vm1436 = vcmp.gt.s32.totalorder %v1392, 0
  %v1437 = vsel %vm1436, %v1392, 0
  %vm1438 = vcmp.gt.s32.totalorder %v1393, 0
  %v1439 = vsel %vm1438, %v1393, 0
  %vm1440 = vcmp.gt.s32.totalorder %v1394, 0
  %v1441 = vsel %vm1440, %v1394, 0
  %vm1442 = vcmp.gt.s32.totalorder %v1395, 0
  %v1443 = vsel %vm1442, %v1395, 0
  %vm1444 = vcmp.gt.s32.totalorder %v1396, 0
  %v1445 = vsel %vm1444, %v1396, 0
  %vm1446 = vcmp.gt.s32.totalorder %v1397, 0
  %v1447 = vsel %vm1446, %v1397, 0
  %vm1448 = vcmp.gt.s32.totalorder %v1398, 0
  %v1449 = vsel %vm1448, %v1398, 0
  %vm1450 = vcmp.gt.s32.totalorder %v1399, 0
  %v1451 = vsel %vm1450, %v1399, 0
  %vm1452 = vcmp.gt.s32.totalorder %v1400, 0
  %v1453 = vsel %vm1452, %v1400, 0
  %vm1454 = vcmp.gt.s32.totalorder %v1401, 0
  %v1455 = vsel %vm1454, %v1401, 0
  %vm1456 = vcmp.gt.s32.totalorder %v1402, 0
  %v1457 = vsel %vm1456, %v1402, 0
  %vm1458 = vcmp.gt.s32.totalorder %v1403, 0
  %v1459 = vsel %vm1458, %v1403, 0
  %vm1460 = vcmp.gt.s32.totalorder %v1404, 0
  %v1461 = vsel %vm1460, %v1404, 0
  %vm1462 = vcmp.gt.s32.totalorder %v1405, 0
  %v1463 = vsel %vm1462, %v1405, 0
  %vm1464 = vcmp.gt.s32.totalorder %v1406, 0
  %v1465 = vsel %vm1464, %v1406, 0
  %vm1466 = vcmp.gt.s32.totalorder %v1407, 0
  %v1467 = vsel %vm1466, %v1407, 0
  %vm1468 = vcmp.gt.s32.totalorder %v1408, 0
  %v1469 = vsel %vm1468, %v1408, 0
  %vm1470 = vcmp.gt.s32.totalorder %v1409, 0
  %v1471 = vsel %vm1470, %v1409, 0
  %vm1472 = vcmp.gt.s32.totalorder %v1410, 0
  %v1473 = vsel %vm1472, %v1410, 0
  %vm1474 = vcmp.gt.s32.totalorder %v1411, 0
  %v1475 = vsel %vm1474, %v1411, 0
  %vm1476 = vcmp.lt.s32.totalorder %v1413, 49
  %v1477 = vsel %vm1476, %v1413, 49
  %vm1478 = vcmp.lt.s32.totalorder %v1415, 49
  %v1479 = vsel %vm1478, %v1415, 49
  %vm1480 = vcmp.lt.s32.totalorder %v1417, 49
  %v1481 = vsel %vm1480, %v1417, 49
  %vm1482 = vcmp.lt.s32.totalorder %v1419, 49
  %v1483 = vsel %vm1482, %v1419, 49
  %vm1484 = vcmp.lt.s32.totalorder %v1421, 49
  %v1485 = vsel %vm1484, %v1421, 49
  %vm1486 = vcmp.lt.s32.totalorder %v1423, 49
  %v1487 = vsel %vm1486, %v1423, 49
  %vm1488 = vcmp.lt.s32.totalorder %v1425, 49
  %v1489 = vsel %vm1488, %v1425, 49
  %vm1490 = vcmp.lt.s32.totalorder %v1427, 49
  %v1491 = vsel %vm1490, %v1427, 49
  %vm1492 = vcmp.lt.s32.totalorder %v1429, 49
  %v1493 = vsel %vm1492, %v1429, 49
  %vm1494 = vcmp.lt.s32.totalorder %v1431, 49
  %v1495 = vsel %vm1494, %v1431, 49
  %vm1496 = vcmp.lt.s32.totalorder %v1433, 49
  %v1497 = vsel %vm1496, %v1433, 49
  %vm1498 = vcmp.lt.s32.totalorder %v1435, 49
  %v1499 = vsel %vm1498, %v1435, 49
  %vm1500 = vcmp.lt.s32.totalorder %v1437, 49
  %v1501 = vsel %vm1500, %v1437, 49
  %vm1502 = vcmp.lt.s32.totalorder %v1439, 49
  %v1503 = vsel %vm1502, %v1439, 49
  %vm1504 = vcmp.lt.s32.totalorder %v1441, 49
  %v1505 = vsel %vm1504, %v1441, 49
  %vm1506 = vcmp.lt.s32.totalorder %v1443, 49
  %v1507 = vsel %vm1506, %v1443, 49
  %vm1508 = vcmp.lt.s32.totalorder %v1445, 49
  %v1509 = vsel %vm1508, %v1445, 49
  %vm1510 = vcmp.lt.s32.totalorder %v1447, 49
  %v1511 = vsel %vm1510, %v1447, 49
  %vm1512 = vcmp.lt.s32.totalorder %v1449, 49
  %v1513 = vsel %vm1512, %v1449, 49
  %vm1514 = vcmp.lt.s32.totalorder %v1451, 49
  %v1515 = vsel %vm1514, %v1451, 49
  %vm1516 = vcmp.lt.s32.totalorder %v1453, 49
  %v1517 = vsel %vm1516, %v1453, 49
  %vm1518 = vcmp.lt.s32.totalorder %v1455, 49
  %v1519 = vsel %vm1518, %v1455, 49
  %vm1520 = vcmp.lt.s32.totalorder %v1457, 49
  %v1521 = vsel %vm1520, %v1457, 49
  %vm1522 = vcmp.lt.s32.totalorder %v1459, 49
  %v1523 = vsel %vm1522, %v1459, 49
  %vm1524 = vcmp.lt.s32.totalorder %v1461, 49
  %v1525 = vsel %vm1524, %v1461, 49
  %vm1526 = vcmp.lt.s32.totalorder %v1463, 49
  %v1527 = vsel %vm1526, %v1463, 49
  %vm1528 = vcmp.lt.s32.totalorder %v1465, 49
  %v1529 = vsel %vm1528, %v1465, 49
  %vm1530 = vcmp.lt.s32.totalorder %v1467, 49
  %v1531 = vsel %vm1530, %v1467, 49
  %vm1532 = vcmp.lt.s32.totalorder %v1469, 49
  %v1533 = vsel %vm1532, %v1469, 49
  %vm1534 = vcmp.lt.s32.totalorder %v1471, 49
  %v1535 = vsel %vm1534, %v1471, 49
  %vm1536 = vcmp.lt.s32.totalorder %v1473, 49
  %v1537 = vsel %vm1536, %v1473, 49
  %vm1538 = vcmp.lt.s32.totalorder %v1475, 49
  %v1539 = vsel %vm1538, %v1475, 49
  %1540 = vset.pattern.permute.xlu0 4
  %1541 = vperm.xlu0 %1540, %v1477
  %v1542 = vpop.permute.xlu0 %1541
  %1543 = vset.pattern.permute.xlu0 4
  %1544 = vperm.xlu0 %1543, %v1479
  %v1545 = vpop.permute.xlu0 %1544
  %1546 = vset.pattern.permute.xlu0 4
  %1547 = vperm.xlu0 %1546, %v1481
  %v1548 = vpop.permute.xlu0 %1547
  %1549 = vset.pattern.permute.xlu0 4
  %1550 = vperm.xlu0 %1549, %v1483
  %v1551 = vpop.permute.xlu0 %1550
  %1552 = vset.pattern.permute.xlu0 4
  %1553 = vperm.xlu0 %1552, %v1485
  %v1554 = vpop.permute.xlu0 %1553
  %1555 = vset.pattern.permute.xlu0 4
  %1556 = vperm.xlu0 %1555, %v1487
  %v1557 = vpop.permute.xlu0 %1556
  %1558 = vset.pattern.permute.xlu0 4
  %1559 = vperm.xlu0 %1558, %v1489
  %v1560 = vpop.permute.xlu0 %1559
  %1561 = vset.pattern.permute.xlu0 4
  %1562 = vperm.xlu0 %1561, %v1491
  %v1563 = vpop.permute.xlu0 %1562
  %1564 = vset.pattern.permute.xlu0 4
  %1565 = vperm.xlu0 %1564, %v1493
  %v1566 = vpop.permute.xlu0 %1565
  %1567 = vset.pattern.permute.xlu0 4
  %1568 = vperm.xlu0 %1567, %v1495
  %v1569 = vpop.permute.xlu0 %1568
  %1570 = vset.pattern.permute.xlu0 4
  %1571 = vperm.xlu0 %1570, %v1497
  %v1572 = vpop.permute.xlu0 %1571
  %1573 = vset.pattern.permute.xlu0 4
  %1574 = vperm.xlu0 %1573, %v1499
  %v1575 = vpop.permute.xlu0 %1574
  %1576 = vset.pattern.permute.xlu0 4
  %1577 = vperm.xlu0 %1576, %v1501
  %v1578 = vpop.permute.xlu0 %1577
  %1579 = vset.pattern.permute.xlu0 4
  %1580 = vperm.xlu0 %1579, %v1503
  %v1581 = vpop.permute.xlu0 %1580
  %1582 = vset.pattern.permute.xlu0 4
  %1583 = vperm.xlu0 %1582, %v1505
  %v1584 = vpop.permute.xlu0 %1583
  %1585 = vset.pattern.permute.xlu0 4
  %1586 = vperm.xlu0 %1585, %v1507
  %v1587 = vpop.permute.xlu0 %1586
  %1588 = vset.pattern.permute.xlu0 4
  %1589 = vperm.xlu0 %1588, %v1509
  %v1590 = vpop.permute.xlu0 %1589
  %1591 = vset.pattern.permute.xlu0 4
  %1592 = vperm.xlu0 %1591, %v1511
  %v1593 = vpop.permute.xlu0 %1592
  %1594 = vset.pattern.permute.xlu0 4
  %1595 = vperm.xlu0 %1594, %v1513
  %v1596 = vpop.permute.xlu0 %1595
  %1597 = vset.pattern.permute.xlu0 4
  %1598 = vperm.xlu0 %1597, %v1515
  %v1599 = vpop.permute.xlu0 %1598
  %1600 = vset.pattern.permute.xlu0 4
  %1601 = vperm.xlu0 %1600, %v1517
  %v1602 = vpop.permute.xlu0 %1601
  %1603 = vset.pattern.permute.xlu0 4
  %1604 = vperm.xlu0 %1603, %v1519
  %v1605 = vpop.permute.xlu0 %1604
  %1606 = vset.pattern.permute.xlu0 4
  %1607 = vperm.xlu0 %1606, %v1521
  %v1608 = vpop.permute.xlu0 %1607
  %1609 = vset.pattern.permute.xlu0 4
  %1610 = vperm.xlu0 %1609, %v1523
  %v1611 = vpop.permute.xlu0 %1610
  %1612 = vset.pattern.permute.xlu0 4
  %1613 = vperm.xlu0 %1612, %v1525
  %v1614 = vpop.permute.xlu0 %1613
  %1615 = vset.pattern.permute.xlu0 4
  %1616 = vperm.xlu0 %1615, %v1527
  %v1617 = vpop.permute.xlu0 %1616
  %1618 = vset.pattern.permute.xlu0 4
  %1619 = vperm.xlu0 %1618, %v1529
  %v1620 = vpop.permute.xlu0 %1619
  %1621 = vset.pattern.permute.xlu0 4
  %1622 = vperm.xlu0 %1621, %v1531
  %v1623 = vpop.permute.xlu0 %1622
  %1624 = vset.pattern.permute.xlu0 4
  %1625 = vperm.xlu0 %1624, %v1533
  %v1626 = vpop.permute.xlu0 %1625
  %1627 = vset.pattern.permute.xlu0 4
  %1628 = vperm.xlu0 %1627, %v1535
  %v1629 = vpop.permute.xlu0 %1628
  %1630 = vset.pattern.permute.xlu0 4
  %1631 = vperm.xlu0 %1630, %v1537
  %v1632 = vpop.permute.xlu0 %1631
  %1633 = vset.pattern.permute.xlu0 4
  %1634 = vperm.xlu0 %1633, %v1539
  %v1635 = vpop.permute.xlu0 %1634
  %vm1636 = vcmp.eq.s32.totalorder %v18, %v1542
  %vm1637 = vcmp.eq.s32.totalorder %v18, %v1545
  %vm1638 = vcmp.eq.s32.totalorder %v18, %v1548
  %vm1639 = vcmp.eq.s32.totalorder %v18, %v1551
  %vm1640 = vcmp.eq.s32.totalorder %v18, %v1554
  %vm1641 = vcmp.eq.s32.totalorder %v18, %v1557
  %vm1642 = vcmp.eq.s32.totalorder %v18, %v1560
  %vm1643 = vcmp.eq.s32.totalorder %v18, %v1563
  %vm1644 = vcmp.eq.s32.totalorder %v18, %v1566
  %vm1645 = vcmp.eq.s32.totalorder %v18, %v1569
  %vm1646 = vcmp.eq.s32.totalorder %v18, %v1572
  %vm1647 = vcmp.eq.s32.totalorder %v18, %v1575
  %vm1648 = vcmp.eq.s32.totalorder %v18, %v1578
  %vm1649 = vcmp.eq.s32.totalorder %v18, %v1581
  %vm1650 = vcmp.eq.s32.totalorder %v18, %v1584
  %vm1651 = vcmp.eq.s32.totalorder %v18, %v1587
  %vm1652 = vcmp.eq.s32.totalorder %v18, %v1590
  %vm1653 = vcmp.eq.s32.totalorder %v18, %v1593
  %vm1654 = vcmp.eq.s32.totalorder %v18, %v1596
  %vm1655 = vcmp.eq.s32.totalorder %v18, %v1599
  %vm1656 = vcmp.eq.s32.totalorder %v18, %v1602
  %vm1657 = vcmp.eq.s32.totalorder %v18, %v1605
  %vm1658 = vcmp.eq.s32.totalorder %v18, %v1608
  %vm1659 = vcmp.eq.s32.totalorder %v18, %v1611
  %vm1660 = vcmp.eq.s32.totalorder %v18, %v1614
  %vm1661 = vcmp.eq.s32.totalorder %v18, %v1617
  %vm1662 = vcmp.eq.s32.totalorder %v18, %v1620
  %vm1663 = vcmp.eq.s32.totalorder %v18, %v1623
  %vm1664 = vcmp.eq.s32.totalorder %v18, %v1626
  %vm1665 = vcmp.eq.s32.totalorder %v18, %v1629
  %vm1666 = vcmp.eq.s32.totalorder %v18, %v1632
  %vm1667 = vcmp.eq.s32.totalorder %v18, %v1635
  %v1668 = vsel %vm1636, 1.0, 0.0
  %v1669 = vsel %vm1637, 1.0, 0.0
  %v1670 = vsel %vm1638, 1.0, 0.0
  %v1671 = vsel %vm1639, 1.0, 0.0
  %v1672 = vsel %vm1640, 1.0, 0.0
  %v1673 = vsel %vm1641, 1.0, 0.0
  %v1674 = vsel %vm1642, 1.0, 0.0
  %v1675 = vsel %vm1643, 1.0, 0.0
  %v1676 = vsel %vm1644, 1.0, 0.0
  %v1677 = vsel %vm1645, 1.0, 0.0
  %v1678 = vsel %vm1646, 1.0, 0.0
  %v1679 = vsel %vm1647, 1.0, 0.0
  %v1680 = vsel %vm1648, 1.0, 0.0
  %v1681 = vsel %vm1649, 1.0, 0.0
  %v1682 = vsel %vm1650, 1.0, 0.0
  %v1683 = vsel %vm1651, 1.0, 0.0
  %v1684 = vsel %vm1652, 1.0, 0.0
  %v1685 = vsel %vm1653, 1.0, 0.0
  %v1686 = vsel %vm1654, 1.0, 0.0
  %v1687 = vsel %vm1655, 1.0, 0.0
  %v1688 = vsel %vm1656, 1.0, 0.0
  %v1689 = vsel %vm1657, 1.0, 0.0
  %v1690 = vsel %vm1658, 1.0, 0.0
  %v1691 = vsel %vm1659, 1.0, 0.0
  %v1692 = vsel %vm1660, 1.0, 0.0
  %v1693 = vsel %vm1661, 1.0, 0.0
  %v1694 = vsel %vm1662, 1.0, 0.0
  %v1695 = vsel %vm1663, 1.0, 0.0
  %v1696 = vsel %vm1664, 1.0, 0.0
  %v1697 = vsel %vm1665, 1.0, 0.0
  %v1698 = vsel %vm1666, 1.0, 0.0
  %v1699 = vsel %vm1667, 1.0, 0.0
  %v1700 = vld [vmem:[%s2] sm:$0xff]
  %v1701 = vld [vmem:[%s2 + $0x8] sm:$0xff]
  %v1702 = vld [vmem:[%s2 + $0x10] sm:$0xff]
  %v1703 = vld [vmem:[%s2 + $0x18] sm:$0xff]
  %v1704 = vld [vmem:[%s2 + $0x20] sm:$0xff]
  %v1705 = vld [vmem:[%s2 + $0x28] sm:$0xff]
  %v1706 = vld [vmem:[%s2 + $0x30] sm:$0xff]
  %v1707 = vld [vmem:[%s2 + $0x38] sm:$0xff]
  %v1708 = vld [vmem:[%s2 + $0x40] sm:$0xff]
  %v1709 = vld [vmem:[%s2 + $0x48] sm:$0xff]
  %v1710 = vld [vmem:[%s2 + $0x50] sm:$0xff]
  %v1711 = vld [vmem:[%s2 + $0x58] sm:$0xff]
  %v1712 = vld [vmem:[%s2 + $0x60] sm:$0xff]
  %v1713 = vld [vmem:[%s2 + $0x68] sm:$0xff]
  %v1714 = vld [vmem:[%s2 + $0x70] sm:$0xff]
  %v1715 = vld [vmem:[%s2 + $0x78] sm:$0xff]
  %1716 = vmatprep.subr.mxu0 0.0
  %v1717 = vand.u32 %v1700, 4294901760
  %1718 = vmatpush1.msra.mxu0 %v1717
  %1719 = vmatprep.subr.mxu0 0.0
  %v1720 = vand.u32 %v1701, 4294901760
  %1721 = vmatpush1.msra.mxu0 %v1720
  %1722 = vmatprep.subr.mxu0 0.0
  %v1723 = vand.u32 %v1702, 4294901760
  %1724 = vmatpush1.msra.mxu0 %v1723
  %1725 = vmatprep.subr.mxu0 0.0
  %v1726 = vand.u32 %v1703, 4294901760
  %1727 = vmatpush1.msra.mxu0 %v1726
  %1728 = vmatprep.subr.mxu0 0.0
  %v1729 = vand.u32 %v1704, 4294901760
  %1730 = vmatpush1.msra.mxu0 %v1729
  %1731 = vmatprep.subr.mxu0 0.0
  %v1732 = vand.u32 %v1705, 4294901760
  %1733 = vmatpush1.msra.mxu0 %v1732
  %1734 = vmatprep.subr.mxu0 0.0
  %v1735 = vand.u32 %v1706, 4294901760
  %1736 = vmatpush1.msra.mxu0 %v1735
  %1737 = vmatprep.subr.mxu0 0.0
  %v1738 = vand.u32 %v1707, 4294901760
  %1739 = vmatpush1.msra.mxu0 %v1738
  %1740 = vmatprep.subr.mxu0 0.0
  %v1741 = vand.u32 %v1708, 4294901760
  %1742 = vmatpush1.msra.mxu0 %v1741
  %1743 = vmatprep.subr.mxu0 0.0
  %v1744 = vand.u32 %v1709, 4294901760
  %1745 = vmatpush1.msra.mxu0 %v1744
  %1746 = vmatprep.subr.mxu0 0.0
  %v1747 = vand.u32 %v1710, 4294901760
  %1748 = vmatpush1.msra.mxu0 %v1747
  %1749 = vmatprep.subr.mxu0 0.0
  %v1750 = vand.u32 %v1711, 4294901760
  %1751 = vmatpush1.msra.mxu0 %v1750
  %1752 = vmatprep.subr.mxu0 0.0
  %v1753 = vand.u32 %v1712, 4294901760
  %1754 = vmatpush1.msra.mxu0 %v1753
  %1755 = vmatprep.subr.mxu0 0.0
  %v1756 = vand.u32 %v1713, 4294901760
  %1757 = vmatpush1.msra.mxu0 %v1756
  %1758 = vmatprep.subr.mxu0 0.0
  %v1759 = vand.u32 %v1714, 4294901760
  %1760 = vmatpush1.msra.mxu0 %v1759
  %1761 = vmatprep.subr.mxu0 0.0
  %v1762 = vand.u32 %v1715, 4294901760
  %1763 = vmatpush1.msra.mxu0 %v1762
  %1764 = vmatprep.subr.mxu0 0.0
  %1765 = vmatpush1.msra.mxu0 0.0
  %1766 = vmatprep.subr.mxu0 0.0
  %1767 = vmatpush1.msra.mxu0 0.0
  %1768 = vmatprep.subr.mxu0 0.0
  %1769 = vmatpush1.msra.mxu0 0.0
  %1770 = vmatprep.subr.mxu0 0.0
  %1771 = vmatpush1.msra.mxu0 0.0
  %1772 = vmatprep.subr.mxu0 0.0
  %1773 = vmatpush1.msra.mxu0 0.0
  %1774 = vmatprep.subr.mxu0 0.0
  %1775 = vmatpush1.msra.mxu0 0.0
  %1776 = vmatprep.subr.mxu0 0.0
  %1777 = vmatpush1.msra.mxu0 0.0
  %1778 = vmatprep.subr.mxu0 0.0
  %1779 = vmatpush1.msra.mxu0 0.0
  %1780 = vmatprep.subr.mxu0 0.0
  %1781 = vmatpush1.msra.mxu0 0.0
  %1782 = vmatprep.subr.mxu0 0.0
  %1783 = vmatpush1.msra.mxu0 0.0
  %1784 = vmatprep.subr.mxu0 0.0
  %1785 = vmatpush1.msra.mxu0 0.0
  %1786 = vmatprep.subr.mxu0 0.0
  %1787 = vmatpush1.msra.mxu0 0.0
  %1788 = vmatprep.subr.mxu0 0.0
  %1789 = vmatpush1.msra.mxu0 0.0
  %1790 = vmatprep.subr.mxu0 0.0
  %1791 = vmatpush1.msra.mxu0 0.0
  %1792 = vmatprep.subr.mxu0 0.0
  %1793 = vmatpush1.msra.mxu0 0.0
  %1794 = vmatprep.subr.mxu0 0.0
  %1795 = vmatpush1.msra.mxu0 0.0
  %1796 = vmatprep.mubr.f32.mxu0 0.0
  %v1797 = vsub.f32 %v1668, %v1668
  %v1798 = vand.u32 %v1797, 4294901760
  %v1799 = vsub.f32 %v1797, %v1798
  %v1800 = vand.u32 %v1799, 4294901760
  %1801 = vmatmul.mubr.f32.gmra.mrb[0].mxu0 %v1800
  %v1802 = vpop.f32.mrb[0].mxu0
  %v1803 = vadd.f32 0.0, %v1802
  %v1804 = vpop.f32.mrb[0].mxu0
  %1805 = vmatprep.mubr.f32.mxu0 0.0
  %v1806 = vsub.f32 %v1669, %v1669
  %v1807 = vand.u32 %v1806, 4294901760
  %v1808 = vsub.f32 %v1806, %v1807
  %v1809 = vand.u32 %v1808, 4294901760
  %1810 = vmatmul.mubr.f32.gmra.mrb[0].mxu0 %v1809
  %v1811 = vpop.f32.mrb[0].mxu0
  %v1812 = vadd.f32 0.0, %v1811
  %v1813 = vpop.f32.mrb[0].mxu0
  %1814 = vmatprep.mubr.f32.mxu0 0.0
  %v1815 = vsub.f32 %v1670, %v1670
  %v1816 = vand.u32 %v1815, 4294901760
  %v1817 = vsub.f32 %v1815, %v1816
  %v1818 = vand.u32 %v1817, 4294901760
  %1819 = vmatmul.mubr.f32.gmra.mrb[0].mxu0 %v1818
  %v1820 = vpop.f32.mrb[0].mxu0
  %v1821 = vadd.f32 0.0, %v1820
  %v1822 = vpop.f32.mrb[0].mxu0
  %1823 = vmatprep.mubr.f32.mxu0 0.0
  %v1824 = vsub.f32 %v1671, %v1671
  %v1825 = vand.u32 %v1824, 4294901760
  %v1826 = vsub.f32 %v1824, %v1825
  %v1827 = vand.u32 %v1826, 4294901760
  %1828 = vmatmul.mubr.f32.gmra.mrb[0].mxu0 %v1827
  %v1829 = vpop.f32.mrb[0].mxu0
  %v1830 = vadd.f32 0.0, %v1829
  %v1831 = vpop.f32.mrb[0].mxu0
  %1832 = vmatprep.mubr.f32.mxu0 0.0
  %v1833 = vsub.f32 %v1672, %v1672
  %v1834 = vand.u32 %v1833, 4294901760
  %v1835 = vsub.f32 %v1833, %v1834
  %v1836 = vand.u32 %v1835, 4294901760
  %1837 = vmatmul.mubr.f32.gmra.mrb[0].mxu0 %v1836
  %v1838 = vpop.f32.mrb[0].mxu0
  %v1839 = vadd.f32 0.0, %v1838
  %v1840 = vpop.f32.mrb[0].mxu0
  %1841 = vmatprep.mubr.f32.mxu0 0.0
  %v1842 = vsub.f32 %v1673, %v1673
  %v1843 = vand.u32 %v1842, 4294901760
  %v1844 = vsub.f32 %v1842, %v1843
  %v1845 = vand.u32 %v1844, 4294901760
  %1846 = vmatmul.mubr.f32.gmra.mrb[0].mxu0 %v1845
  %v1847 = vpop.f32.mrb[0].mxu0
  %v1848 = vadd.f32 0.0, %v1847
  %v1849 = vpop.f32.mrb[0].mxu0
  %1850 = vmatprep.mubr.f32.mxu0 0.0
  %v1851 = vsub.f32 %v1674, %v1674
  %v1852 = vand.u32 %v1851, 4294901760
  %v1853 = vsub.f32 %v1851, %v1852
  %v1854 = vand.u32 %v1853, 4294901760
  %1855 = vmatmul.mubr.f32.gmra.mrb[0].mxu0 %v1854
  %v1856 = vpop.f32.mrb[0].mxu0
  %v1857 = vadd.f32 0.0, %v1856
  %v1858 = vpop.f32.mrb[0].mxu0
  %1859 = vmatprep.mubr.f32.mxu0 0.0
  %v1860 = vsub.f32 %v1675, %v1675
  %v1861 = vand.u32 %v1860, 4294901760
  %v1862 = vsub.f32 %v1860, %v1861
  %v1863 = vand.u32 %v1862, 4294901760
  %1864 = vmatmul.mubr.f32.gmra.mrb[0].mxu0 %v1863
  %v1865 = vpop.f32.mrb[0].mxu0
  %v1866 = vadd.f32 0.0, %v1865
  %v1867 = vpop.f32.mrb[0].mxu0
  %1868 = vmatprep.mubr.f32.mxu0 0.0
  %v1869 = vsub.f32 %v1676, %v1676
  %v1870 = vand.u32 %v1869, 4294901760
  %v1871 = vsub.f32 %v1869, %v1870
  %v1872 = vand.u32 %v1871, 4294901760
  %1873 = vmatmul.mubr.f32.gmra.mrb[0].mxu0 %v1872
  %v1874 = vpop.f32.mrb[0].mxu0
  %v1875 = vadd.f32 0.0, %v1874
  %v1876 = vpop.f32.mrb[0].mxu0
  %1877 = vmatprep.mubr.f32.mxu0 0.0
  %v1878 = vsub.f32 %v1677, %v1677
  %v1879 = vand.u32 %v1878, 4294901760
  %v1880 = vsub.f32 %v1878, %v1879
  %v1881 = vand.u32 %v1880, 4294901760
  %1882 = vmatmul.mubr.f32.gmra.mrb[0].mxu0 %v1881
  %v1883 = vpop.f32.mrb[0].mxu0
  %v1884 = vadd.f32 0.0, %v1883
  %v1885 = vpop.f32.mrb[0].mxu0
  %1886 = vmatprep.mubr.f32.mxu0 0.0
  %v1887 = vsub.f32 %v1678, %v1678
  %v1888 = vand.u32 %v1887, 4294901760
  %v1889 = vsub.f32 %v1887, %v1888
  %v1890 = vand.u32 %v1889, 4294901760
  %1891 = vmatmul.mubr.f32.gmra.mrb[0].mxu0 %v1890
  %v1892 = vpop.f32.mrb[0].mxu0
  %v1893 = vadd.f32 0.0, %v1892
  %v1894 = vpop.f32.mrb[0].mxu0
  %1895 = vmatprep.mubr.f32.mxu0 0.0
  %v1896 = vsub.f32 %v1679, %v1679
  %v1897 = vand.u32 %v1896, 4294901760
  %v1898 = vsub.f32 %v1896, %v1897
  %v1899 = vand.u32 %v1898, 4294901760
  %1900 = vmatmul.mubr.f32.gmra.mrb[0].mxu0 %v1899
  %v1901 = vpop.f32.mrb[0].mxu0
  %v1902 = vadd.f32 0.0, %v1901
  %v1903 = vpop.f32.mrb[0].mxu0
  %1904 = vmatprep.mubr.f32.mxu0 0.0
  %v1905 = vsub.f32 %v1680, %v1680
  %v1906 = vand.u32 %v1905, 4294901760
  %v1907 = vsub.f32 %v1905, %v1906
  %v1908 = vand.u32 %v1907, 4294901760
  %1909 = vmatmul.mubr.f32.gmra.mrb[0].mxu0 %v1908
  %v1910 = vpop.f32.mrb[0].mxu0
  %v1911 = vadd.f32 0.0, %v1910
  %v1912 = vpop.f32.mrb[0].mxu0
  %1913 = vmatprep.mubr.f32.mxu0 0.0
  %v1914 = vsub.f32 %v1681, %v1681
  %v1915 = vand.u32 %v1914, 4294901760
  %v1916 = vsub.f32 %v1914, %v1915
  %v1917 = vand.u32 %v1916, 4294901760
  %1918 = vmatmul.mubr.f32.gmra.mrb[0].mxu0 %v1917
  %v1919 = vpop.f32.mrb[0].mxu0
  %v1920 = vadd.f32 0.0, %v1919
  %v1921 = vpop.f32.mrb[0].mxu0
  %1922 = vmatprep.mubr.f32.mxu0 0.0
  %v1923 = vsub.f32 %v1682, %v1682
  %v1924 = vand.u32 %v1923, 4294901760
  %v1925 = vsub.f32 %v1923, %v1924
  %v1926 = vand.u32 %v1925, 4294901760
  %1927 = vmatmul.mubr.f32.gmra.mrb[0].mxu0 %v1926
  %v1928 = vpop.f32.mrb[0].mxu0
  %v1929 = vadd.f32 0.0, %v1928
  %v1930 = vpop.f32.mrb[0].mxu0
  %1931 = vmatprep.mubr.f32.mxu0 0.0
  %v1932 = vsub.f32 %v1683, %v1683
  %v1933 = vand.u32 %v1932, 4294901760
  %v1934 = vsub.f32 %v1932, %v1933
  %v1935 = vand.u32 %v1934, 4294901760
  %1936 = vmatmul.mubr.f32.gmra.mrb[0].mxu0 %v1935
  %v1937 = vpop.f32.mrb[0].mxu0
  %v1938 = vadd.f32 0.0, %v1937
  %v1939 = vpop.f32.mrb[0].mxu0
  %1940 = vmatprep.mubr.f32.mxu0 0.0
  %v1941 = vsub.f32 %v1684, %v1684
  %v1942 = vand.u32 %v1941, 4294901760
  %v1943 = vsub.f32 %v1941, %v1942
  %v1944 = vand.u32 %v1943, 4294901760
  %1945 = vmatmul.mubr.f32.gmra.mrb[0].mxu0 %v1944
  %v1946 = vpop.f32.mrb[0].mxu0
  %v1947 = vadd.f32 0.0, %v1946
  %v1948 = vpop.f32.mrb[0].mxu0
  %1949 = vmatprep.mubr.f32.mxu0 0.0
  %v1950 = vsub.f32 %v1685, %v1685
  %v1951 = vand.u32 %v1950, 4294901760
  %v1952 = vsub.f32 %v1950, %v1951
  %v1953 = vand.u32 %v1952, 4294901760
  %1954 = vmatmul.mubr.f32.gmra.mrb[0].mxu0 %v1953
  %v1955 = vpop.f32.mrb[0].mxu0
  %v1956 = vadd.f32 0.0, %v1955
  %v1957 = vpop.f32.mrb[0].mxu0
  %1958 = vmatprep.mubr.f32.mxu0 0.0
  %v1959 = vsub.f32 %v1686, %v1686
  %v1960 = vand.u32 %v1959, 4294901760
  %v1961 = vsub.f32 %v1959, %v1960
  %v1962 = vand.u32 %v1961, 4294901760
  %1963 = vmatmul.mubr.f32.gmra.mrb[0].mxu0 %v1962
  %v1964 = vpop.f32.mrb[0].mxu0
  %v1965 = vadd.f32 0.0, %v1964
  %v1966 = vpop.f32.mrb[0].mxu0
  %1967 = vmatprep.mubr.f32.mxu0 0.0
  %v1968 = vsub.f32 %v1687, %v1687
  %v1969 = vand.u32 %v1968, 4294901760
  %v1970 = vsub.f32 %v1968, %v1969
  %v1971 = vand.u32 %v1970, 4294901760
  %1972 = vmatmul.mubr.f32.gmra.mrb[0].mxu0 %v1971
  %v1973 = vpop.f32.mrb[0].mxu0
  %v1974 = vadd.f32 0.0, %v1973
  %v1975 = vpop.f32.mrb[0].mxu0
  %1976 = vmatprep.mubr.f32.mxu0 0.0
  %v1977 = vsub.f32 %v1688, %v1688
  %v1978 = vand.u32 %v1977, 4294901760
  %v1979 = vsub.f32 %v1977, %v1978
  %v1980 = vand.u32 %v1979, 4294901760
  %1981 = vmatmul.mubr.f32.gmra.mrb[0].mxu0 %v1980
  %v1982 = vpop.f32.mrb[0].mxu0
  %v1983 = vadd.f32 0.0, %v1982
  %v1984 = vpop.f32.mrb[0].mxu0
  %1985 = vmatprep.mubr.f32.mxu0 0.0
  %v1986 = vsub.f32 %v1689, %v1689
  %v1987 = vand.u32 %v1986, 4294901760
  %v1988 = vsub.f32 %v1986, %v1987
  %v1989 = vand.u32 %v1988, 4294901760
  %1990 = vmatmul.mubr.f32.gmra.mrb[0].mxu0 %v1989
  %v1991 = vpop.f32.mrb[0].mxu0
  %v1992 = vadd.f32 0.0, %v1991
  %v1993 = vpop.f32.mrb[0].mxu0
  %1994 = vmatprep.mubr.f32.mxu0 0.0
  %v1995 = vsub.f32 %v1690, %v1690
  %v1996 = vand.u32 %v1995, 4294901760
  %v1997 = vsub.f32 %v1995, %v1996
  %v1998 = vand.u32 %v1997, 4294901760
  %1999 = vmatmul.mubr.f32.gmra.mrb[0].mxu0 %v1998
  %v2000 = vpop.f32.mrb[0].mxu0
  %v2001 = vadd.f32 0.0, %v2000
  %v2002 = vpop.f32.mrb[0].mxu0
  %2003 = vmatprep.mubr.f32.mxu0 0.0
  %v2004 = vsub.f32 %v1691, %v1691
  %v2005 = vand.u32 %v2004, 4294901760
  %v2006 = vsub.f32 %v2004, %v2005
  %v2007 = vand.u32 %v2006, 4294901760
  %2008 = vmatmul.mubr.f32.gmra.mrb[0].mxu0 %v2007
  %v2009 = vpop.f32.mrb[0].mxu0
  %v2010 = vadd.f32 0.0, %v2009
  %v2011 = vpop.f32.mrb[0].mxu0
  %2012 = vmatprep.mubr.f32.mxu0 0.0
  %v2013 = vsub.f32 %v1692, %v1692
  %v2014 = vand.u32 %v2013, 4294901760
  %v2015 = vsub.f32 %v2013, %v2014
  %v2016 = vand.u32 %v2015, 4294901760
  %2017 = vmatmul.mubr.f32.gmra.mrb[0].mxu0 %v2016
  %v2018 = vpop.f32.mrb[0].mxu0
  %v2019 = vadd.f32 0.0, %v2018
  %v2020 = vpop.f32.mrb[0].mxu0
  %2021 = vmatprep.mubr.f32.mxu0 0.0
  %v2022 = vsub.f32 %v1693, %v1693
  %v2023 = vand.u32 %v2022, 4294901760
  %v2024 = vsub.f32 %v2022, %v2023
  %v2025 = vand.u32 %v2024, 4294901760
  %2026 = vmatmul.mubr.f32.gmra.mrb[0].mxu0 %v2025
  %v2027 = vpop.f32.mrb[0].mxu0
  %v2028 = vadd.f32 0.0, %v2027
  %v2029 = vpop.f32.mrb[0].mxu0
  %2030 = vmatprep.mubr.f32.mxu0 0.0
  %v2031 = vsub.f32 %v1694, %v1694
  %v2032 = vand.u32 %v2031, 4294901760
  %v2033 = vsub.f32 %v2031, %v2032
  %v2034 = vand.u32 %v2033, 4294901760
  %2035 = vmatmul.mubr.f32.gmra.mrb[0].mxu0 %v2034
  %v2036 = vpop.f32.mrb[0].mxu0
  %v2037 = vadd.f32 0.0, %v2036
  %v2038 = vpop.f32.mrb[0].mxu0
  %2039 = vmatprep.mubr.f32.mxu0 0.0
  %v2040 = vsub.f32 %v1695, %v1695
  %v2041 = vand.u32 %v2040, 4294901760
  %v2042 = vsub.f32 %v2040, %v2041
  %v2043 = vand.u32 %v2042, 4294901760
  %2044 = vmatmul.mubr.f32.gmra.mrb[0].mxu0 %v2043
  %v2045 = vpop.f32.mrb[0].mxu0
  %v2046 = vadd.f32 0.0, %v2045
  %v2047 = vpop.f32.mrb[0].mxu0
  %2048 = vmatprep.mubr.f32.mxu0 0.0
  %v2049 = vsub.f32 %v1696, %v1696
  %v2050 = vand.u32 %v2049, 4294901760
  %v2051 = vsub.f32 %v2049, %v2050
  %v2052 = vand.u32 %v2051, 4294901760
  %2053 = vmatmul.mubr.f32.gmra.mrb[0].mxu0 %v2052
  %v2054 = vpop.f32.mrb[0].mxu0
  %v2055 = vadd.f32 0.0, %v2054
  %v2056 = vpop.f32.mrb[0].mxu0
  %2057 = vmatprep.mubr.f32.mxu0 0.0
  %v2058 = vsub.f32 %v1697, %v1697
  %v2059 = vand.u32 %v2058, 4294901760
  %v2060 = vsub.f32 %v2058, %v2059
  %v2061 = vand.u32 %v2060, 4294901760
  %2062 = vmatmul.mubr.f32.gmra.mrb[0].mxu0 %v2061
  %v2063 = vpop.f32.mrb[0].mxu0
  %v2064 = vadd.f32 0.0, %v2063
  %v2065 = vpop.f32.mrb[0].mxu0
  %2066 = vmatprep.mubr.f32.mxu0 0.0
  %v2067 = vsub.f32 %v1698, %v1698
  %v2068 = vand.u32 %v2067, 4294901760
  %v2069 = vsub.f32 %v2067, %v2068
  %v2070 = vand.u32 %v2069, 4294901760
  %2071 = vmatmul.mubr.f32.gmra.mrb[0].mxu0 %v2070
  %v2072 = vpop.f32.mrb[0].mxu0
  %v2073 = vadd.f32 0.0, %v2072
  %v2074 = vpop.f32.mrb[0].mxu0
  %2075 = vmatprep.mubr.f32.mxu0 0.0
  %v2076 = vsub.f32 %v1699, %v1699
  %v2077 = vand.u32 %v2076, 4294901760
  %v2078 = vsub.f32 %v2076, %v2077
  %v2079 = vand.u32 %v2078, 4294901760
  %2080 = vmatmul.mubr.f32.gmra.mrb[0].mxu0 %v2079
  %v2081 = vpop.f32.mrb[0].mxu0
  %v2082 = vadd.f32 0.0, %v2081
  %v2083 = vpop.f32.mrb[0].mxu0
  %2084 = vdwg.mxu0
  %2085 = vmatprep.subr.mxu0 0.0
  %v2086 = vand.u32 %v1700, 4294901760
  %v2087 = vsub.f32 %v1700, %v2086
  %v2088 = vand.u32 %v2087, 4294901760
  %v2089 = vsub.f32 %v2087, %v2088
  %v2090 = vand.u32 %v2089, 4294901760
  %2091 = vmatpush1.msra.mxu0 %v2090
  %2092 = vmatprep.subr.mxu0 0.0
  %v2093 = vand.u32 %v1701, 4294901760
  %v2094 = vsub.f32 %v1701, %v2093
  %v2095 = vand.u32 %v2094, 4294901760
  %v2096 = vsub.f32 %v2094, %v2095
  %v2097 = vand.u32 %v2096, 4294901760
  %2098 = vmatpush1.msra.mxu0 %v2097
  %2099 = vmatprep.subr.mxu0 0.0
  %v2100 = vand.u32 %v1702, 4294901760
  %v2101 = vsub.f32 %v1702, %v2100
  %v2102 = vand.u32 %v2101, 4294901760
  %v2103 = vsub.f32 %v2101, %v2102
  %v2104 = vand.u32 %v2103, 4294901760
  %2105 = vmatpush1.msra.mxu0 %v2104
  %2106 = vmatprep.subr.mxu0 0.0
  %v2107 = vand.u32 %v1703, 4294901760
  %v2108 = vsub.f32 %v1703, %v2107
  %v2109 = vand.u32 %v2108, 4294901760
  %v2110 = vsub.f32 %v2108, %v2109
  %v2111 = vand.u32 %v2110, 4294901760
  %2112 = vmatpush1.msra.mxu0 %v2111
  %2113 = vmatprep.subr.mxu0 0.0
  %v2114 = vand.u32 %v1704, 4294901760
  %v2115 = vsub.f32 %v1704, %v2114
  %v2116 = vand.u32 %v2115, 4294901760
  %v2117 = vsub.f32 %v2115, %v2116
  %v2118 = vand.u32 %v2117, 4294901760
  %2119 = vmatpush1.msra.mxu0 %v2118
  %2120 = vmatprep.subr.mxu0 0.0
  %v2121 = vand.u32 %v1705, 4294901760
  %v2122 = vsub.f32 %v1705, %v2121
  %v2123 = vand.u32 %v2122, 4294901760
  %v2124 = vsub.f32 %v2122, %v2123
  %v2125 = vand.u32 %v2124, 4294901760
  %2126 = vmatpush1.msra.mxu0 %v2125
  %2127 = vmatprep.subr.mxu0 0.0
  %v2128 = vand.u32 %v1706, 4294901760
  %v2129 = vsub.f32 %v1706, %v2128
  %v2130 = vand.u32 %v2129, 4294901760
  %v2131 = vsub.f32 %v2129, %v2130
  %v2132 = vand.u32 %v2131, 4294901760
  %2133 = vmatpush1.msra.mxu0 %v2132
  %2134 = vmatprep.subr.mxu0 0.0
  %v2135 = vand.u32 %v1707, 4294901760
  %v2136 = vsub.f32 %v1707, %v2135
  %v2137 = vand.u32 %v2136, 4294901760
  %v2138 = vsub.f32 %v2136, %v2137
  %v2139 = vand.u32 %v2138, 4294901760
  %2140 = vmatpush1.msra.mxu0 %v2139
  %2141 = vmatprep.subr.mxu0 0.0
  %v2142 = vand.u32 %v1708, 4294901760
  %v2143 = vsub.f32 %v1708, %v2142
  %v2144 = vand.u32 %v2143, 4294901760
  %v2145 = vsub.f32 %v2143, %v2144
  %v2146 = vand.u32 %v2145, 4294901760
  %2147 = vmatpush1.msra.mxu0 %v2146
  %2148 = vmatprep.subr.mxu0 0.0
  %v2149 = vand.u32 %v1709, 4294901760
  %v2150 = vsub.f32 %v1709, %v2149
  %v2151 = vand.u32 %v2150, 4294901760
  %v2152 = vsub.f32 %v2150, %v2151
  %v2153 = vand.u32 %v2152, 4294901760
  %2154 = vmatpush1.msra.mxu0 %v2153
  %2155 = vmatprep.subr.mxu0 0.0
  %v2156 = vand.u32 %v1710, 4294901760
  %v2157 = vsub.f32 %v1710, %v2156
  %v2158 = vand.u32 %v2157, 4294901760
  %v2159 = vsub.f32 %v2157, %v2158
  %v2160 = vand.u32 %v2159, 4294901760
  %2161 = vmatpush1.msra.mxu0 %v2160
  %2162 = vmatprep.subr.mxu0 0.0
  %v2163 = vand.u32 %v1711, 4294901760
  %v2164 = vsub.f32 %v1711, %v2163
  %v2165 = vand.u32 %v2164, 4294901760
  %v2166 = vsub.f32 %v2164, %v2165
  %v2167 = vand.u32 %v2166, 4294901760
  %2168 = vmatpush1.msra.mxu0 %v2167
  %2169 = vmatprep.subr.mxu0 0.0
  %v2170 = vand.u32 %v1712, 4294901760
  %v2171 = vsub.f32 %v1712, %v2170
  %v2172 = vand.u32 %v2171, 4294901760
  %v2173 = vsub.f32 %v2171, %v2172
  %v2174 = vand.u32 %v2173, 4294901760
  %2175 = vmatpush1.msra.mxu0 %v2174
  %2176 = vmatprep.subr.mxu0 0.0
  %v2177 = vand.u32 %v1713, 4294901760
  %v2178 = vsub.f32 %v1713, %v2177
  %v2179 = vand.u32 %v2178, 4294901760
  %v2180 = vsub.f32 %v2178, %v2179
  %v2181 = vand.u32 %v2180, 4294901760
  %2182 = vmatpush1.msra.mxu0 %v2181
  %2183 = vmatprep.subr.mxu0 0.0
  %v2184 = vand.u32 %v1714, 4294901760
  %v2185 = vsub.f32 %v1714, %v2184
  %v2186 = vand.u32 %v2185, 4294901760
  %v2187 = vsub.f32 %v2185, %v2186
  %v2188 = vand.u32 %v2187, 4294901760
  %2189 = vmatpush1.msra.mxu0 %v2188
  %2190 = vmatprep.subr.mxu0 0.0
  %v2191 = vand.u32 %v1715, 4294901760
  %v2192 = vsub.f32 %v1715, %v2191
  %v2193 = vand.u32 %v2192, 4294901760
  %v2194 = vsub.f32 %v2192, %v2193
  %v2195 = vand.u32 %v2194, 4294901760
  %2196 = vmatpush1.msra.mxu0 %v2195
  %2197 = vmatprep.subr.mxu0 0.0
  %2198 = vmatpush1.msra.mxu0 0.0
  %2199 = vmatprep.subr.mxu0 0.0
  %2200 = vmatpush1.msra.mxu0 0.0
  %2201 = vmatprep.subr.mxu0 0.0
  %2202 = vmatpush1.msra.mxu0 0.0
  %2203 = vmatprep.subr.mxu0 0.0
  %2204 = vmatpush1.msra.mxu0 0.0
  %2205 = vmatprep.subr.mxu0 0.0
  %2206 = vmatpush1.msra.mxu0 0.0
  %2207 = vmatprep.subr.mxu0 0.0
  %2208 = vmatpush1.msra.mxu0 0.0
  %2209 = vmatprep.subr.mxu0 0.0
  %2210 = vmatpush1.msra.mxu0 0.0
  %2211 = vmatprep.subr.mxu0 0.0
  %2212 = vmatpush1.msra.mxu0 0.0
  %2213 = vmatprep.subr.mxu0 0.0
  %2214 = vmatpush1.msra.mxu0 0.0
  %2215 = vmatprep.subr.mxu0 0.0
  %2216 = vmatpush1.msra.mxu0 0.0
  %2217 = vmatprep.subr.mxu0 0.0
  %2218 = vmatpush1.msra.mxu0 0.0
  %2219 = vmatprep.subr.mxu0 0.0
  %2220 = vmatpush1.msra.mxu0 0.0
  %2221 = vmatprep.subr.mxu0 0.0
  %2222 = vmatpush1.msra.mxu0 0.0
  %2223 = vmatprep.subr.mxu0 0.0
  %2224 = vmatpush1.msra.mxu0 0.0
  %2225 = vmatprep.subr.mxu0 0.0
  %2226 = vmatpush1.msra.mxu0 0.0
  %2227 = vmatprep.subr.mxu0 0.0
  %2228 = vmatpush1.msra.mxu0 0.0
  %2229 = vmatprep.mubr.f32.mxu0 0.0
  %2230 = vmatmul.mubr.f32.gmra.mrb[0].mxu0 %v1668
  %v2231 = vpop.f32.mrb[0].mxu0
  %v2232 = vadd.f32 %v1803, %v2231
  %v2233 = vpop.f32.mrb[0].mxu0
  %2234 = vmatprep.mubr.f32.mxu0 0.0
  %2235 = vmatmul.mubr.f32.gmra.mrb[0].mxu0 %v1669
  %v2236 = vpop.f32.mrb[0].mxu0
  %v2237 = vadd.f32 %v1812, %v2236
  %v2238 = vpop.f32.mrb[0].mxu0
  %2239 = vmatprep.mubr.f32.mxu0 0.0
  %2240 = vmatmul.mubr.f32.gmra.mrb[0].mxu0 %v1670
  %v2241 = vpop.f32.mrb[0].mxu0
  %v2242 = vadd.f32 %v1821, %v2241
  %v2243 = vpop.f32.mrb[0].mxu0
  %2244 = vmatprep.mubr.f32.mxu0 0.0
  %2245 = vmatmul.mubr.f32.gmra.mrb[0].mxu0 %v1671
  %v2246 = vpop.f32.mrb[0].mxu0
  %v2247 = vadd.f32 %v1830, %v2246
  %v2248 = vpop.f32.mrb[0].mxu0
  %2249 = vmatprep.mubr.f32.mxu0 0.0
  %2250 = vmatmul.mubr.f32.gmra.mrb[0].mxu0 %v1672
  %v2251 = vpop.f32.mrb[0].mxu0
  %v2252 = vadd.f32 %v1839, %v2251
  %v2253 = vpop.f32.mrb[0].mxu0
  %2254 = vmatprep.mubr.f32.mxu0 0.0
  %2255 = vmatmul.mubr.f32.gmra.mrb[0].mxu0 %v1673
  %v2256 = vpop.f32.mrb[0].mxu0
  %v2257 = vadd.f32 %v1848, %v2256
  %v2258 = vpop.f32.mrb[0].mxu0
  %2259 = vmatprep.mubr.f32.mxu0 0.0
  %2260 = vmatmul.mubr.f32.gmra.mrb[0].mxu0 %v1674
  %v2261 = vpop.f32.mrb[0].mxu0
  %v2262 = vadd.f32 %v1857, %v2261
  %v2263 = vpop.f32.mrb[0].mxu0
  %2264 = vmatprep.mubr.f32.mxu0 0.0
  %2265 = vmatmul.mubr.f32.gmra.mrb[0].mxu0 %v1675
  %v2266 = vpop.f32.mrb[0].mxu0
  %v2267 = vadd.f32 %v1866, %v2266
  %v2268 = vpop.f32.mrb[0].mxu0
  %2269 = vmatprep.mubr.f32.mxu0 0.0
  %2270 = vmatmul.mubr.f32.gmra.mrb[0].mxu0 %v1676
  %v2271 = vpop.f32.mrb[0].mxu0
  %v2272 = vadd.f32 %v1875, %v2271
  %v2273 = vpop.f32.mrb[0].mxu0
  %2274 = vmatprep.mubr.f32.mxu0 0.0
  %2275 = vmatmul.mubr.f32.gmra.mrb[0].mxu0 %v1677
  %v2276 = vpop.f32.mrb[0].mxu0
  %v2277 = vadd.f32 %v1884, %v2276
  %v2278 = vpop.f32.mrb[0].mxu0
  %2279 = vmatprep.mubr.f32.mxu0 0.0
  %2280 = vmatmul.mubr.f32.gmra.mrb[0].mxu0 %v1678
  %v2281 = vpop.f32.mrb[0].mxu0
  %v2282 = vadd.f32 %v1893, %v2281
  %v2283 = vpop.f32.mrb[0].mxu0
  %2284 = vmatprep.mubr.f32.mxu0 0.0
  %2285 = vmatmul.mubr.f32.gmra.mrb[0].mxu0 %v1679
  %v2286 = vpop.f32.mrb[0].mxu0
  %v2287 = vadd.f32 %v1902, %v2286
  %v2288 = vpop.f32.mrb[0].mxu0
  %2289 = vmatprep.mubr.f32.mxu0 0.0
  %2290 = vmatmul.mubr.f32.gmra.mrb[0].mxu0 %v1680
  %v2291 = vpop.f32.mrb[0].mxu0
  %v2292 = vadd.f32 %v1911, %v2291
  %v2293 = vpop.f32.mrb[0].mxu0
  %2294 = vmatprep.mubr.f32.mxu0 0.0
  %2295 = vmatmul.mubr.f32.gmra.mrb[0].mxu0 %v1681
  %v2296 = vpop.f32.mrb[0].mxu0
  %v2297 = vadd.f32 %v1920, %v2296
  %v2298 = vpop.f32.mrb[0].mxu0
  %2299 = vmatprep.mubr.f32.mxu0 0.0
  %2300 = vmatmul.mubr.f32.gmra.mrb[0].mxu0 %v1682
  %v2301 = vpop.f32.mrb[0].mxu0
  %v2302 = vadd.f32 %v1929, %v2301
  %v2303 = vpop.f32.mrb[0].mxu0
  %2304 = vmatprep.mubr.f32.mxu0 0.0
  %2305 = vmatmul.mubr.f32.gmra.mrb[0].mxu0 %v1683
  %v2306 = vpop.f32.mrb[0].mxu0
  %v2307 = vadd.f32 %v1938, %v2306
  %v2308 = vpop.f32.mrb[0].mxu0
  %2309 = vmatprep.mubr.f32.mxu0 0.0
  %2310 = vmatmul.mubr.f32.gmra.mrb[0].mxu0 %v1684
  %v2311 = vpop.f32.mrb[0].mxu0
  %v2312 = vadd.f32 %v1947, %v2311
  %v2313 = vpop.f32.mrb[0].mxu0
  %2314 = vmatprep.mubr.f32.mxu0 0.0
  %2315 = vmatmul.mubr.f32.gmra.mrb[0].mxu0 %v1685
  %v2316 = vpop.f32.mrb[0].mxu0
  %v2317 = vadd.f32 %v1956, %v2316
  %v2318 = vpop.f32.mrb[0].mxu0
  %2319 = vmatprep.mubr.f32.mxu0 0.0
  %2320 = vmatmul.mubr.f32.gmra.mrb[0].mxu0 %v1686
  %v2321 = vpop.f32.mrb[0].mxu0
  %v2322 = vadd.f32 %v1965, %v2321
  %v2323 = vpop.f32.mrb[0].mxu0
  %2324 = vmatprep.mubr.f32.mxu0 0.0
  %2325 = vmatmul.mubr.f32.gmra.mrb[0].mxu0 %v1687
  %v2326 = vpop.f32.mrb[0].mxu0
  %v2327 = vadd.f32 %v1974, %v2326
  %v2328 = vpop.f32.mrb[0].mxu0
  %2329 = vmatprep.mubr.f32.mxu0 0.0
  %2330 = vmatmul.mubr.f32.gmra.mrb[0].mxu0 %v1688
  %v2331 = vpop.f32.mrb[0].mxu0
  %v2332 = vadd.f32 %v1983, %v2331
  %v2333 = vpop.f32.mrb[0].mxu0
  %2334 = vmatprep.mubr.f32.mxu0 0.0
  %2335 = vmatmul.mubr.f32.gmra.mrb[0].mxu0 %v1689
  %v2336 = vpop.f32.mrb[0].mxu0
  %v2337 = vadd.f32 %v1992, %v2336
  %v2338 = vpop.f32.mrb[0].mxu0
  %2339 = vmatprep.mubr.f32.mxu0 0.0
  %2340 = vmatmul.mubr.f32.gmra.mrb[0].mxu0 %v1690
  %v2341 = vpop.f32.mrb[0].mxu0
  %v2342 = vadd.f32 %v2001, %v2341
  %v2343 = vpop.f32.mrb[0].mxu0
  %2344 = vmatprep.mubr.f32.mxu0 0.0
  %2345 = vmatmul.mubr.f32.gmra.mrb[0].mxu0 %v1691
  %v2346 = vpop.f32.mrb[0].mxu0
  %v2347 = vadd.f32 %v2010, %v2346
  %v2348 = vpop.f32.mrb[0].mxu0
  %2349 = vmatprep.mubr.f32.mxu0 0.0
  %2350 = vmatmul.mubr.f32.gmra.mrb[0].mxu0 %v1692
  %v2351 = vpop.f32.mrb[0].mxu0
  %v2352 = vadd.f32 %v2019, %v2351
  %v2353 = vpop.f32.mrb[0].mxu0
  %2354 = vmatprep.mubr.f32.mxu0 0.0
  %2355 = vmatmul.mubr.f32.gmra.mrb[0].mxu0 %v1693
  %v2356 = vpop.f32.mrb[0].mxu0
  %v2357 = vadd.f32 %v2028, %v2356
  %v2358 = vpop.f32.mrb[0].mxu0
  %2359 = vmatprep.mubr.f32.mxu0 0.0
  %2360 = vmatmul.mubr.f32.gmra.mrb[0].mxu0 %v1694
  %v2361 = vpop.f32.mrb[0].mxu0
  %v2362 = vadd.f32 %v2037, %v2361
  %v2363 = vpop.f32.mrb[0].mxu0
  %2364 = vmatprep.mubr.f32.mxu0 0.0
  %2365 = vmatmul.mubr.f32.gmra.mrb[0].mxu0 %v1695
  %v2366 = vpop.f32.mrb[0].mxu0
  %v2367 = vadd.f32 %v2046, %v2366
  %v2368 = vpop.f32.mrb[0].mxu0
  %2369 = vmatprep.mubr.f32.mxu0 0.0
  %2370 = vmatmul.mubr.f32.gmra.mrb[0].mxu0 %v1696
  %v2371 = vpop.f32.mrb[0].mxu0
  %v2372 = vadd.f32 %v2055, %v2371
  %v2373 = vpop.f32.mrb[0].mxu0
  %2374 = vmatprep.mubr.f32.mxu0 0.0
  %2375 = vmatmul.mubr.f32.gmra.mrb[0].mxu0 %v1697
  %v2376 = vpop.f32.mrb[0].mxu0
  %v2377 = vadd.f32 %v2064, %v2376
  %v2378 = vpop.f32.mrb[0].mxu0
  %2379 = vmatprep.mubr.f32.mxu0 0.0
  %2380 = vmatmul.mubr.f32.gmra.mrb[0].mxu0 %v1698
  %v2381 = vpop.f32.mrb[0].mxu0
  %v2382 = vadd.f32 %v2073, %v2381
  %v2383 = vpop.f32.mrb[0].mxu0
  %2384 = vmatprep.mubr.f32.mxu0 0.0
  %2385 = vmatmul.mubr.f32.gmra.mrb[0].mxu0 %v1699
  %v2386 = vpop.f32.mrb[0].mxu0
  %v2387 = vadd.f32 %v2082, %v2386
  %v2388 = vpop.f32.mrb[0].mxu0
  %2389 = vdwg.mxu0
  %2390 = vmatprep.subr.mxu0 0.0
  %v2391 = vand.u32 %v1700, 4294901760
  %v2392 = vsub.f32 %v1700, %v2391
  %2393 = vmatpush1.msra.mxu0 %v2392
  %2394 = vmatprep.subr.mxu0 0.0
  %v2395 = vand.u32 %v1701, 4294901760
  %v2396 = vsub.f32 %v1701, %v2395
  %2397 = vmatpush1.msra.mxu0 %v2396
  %2398 = vmatprep.subr.mxu0 0.0
  %v2399 = vand.u32 %v1702, 4294901760
  %v2400 = vsub.f32 %v1702, %v2399
  %2401 = vmatpush1.msra.mxu0 %v2400
  %2402 = vmatprep.subr.mxu0 0.0
  %v2403 = vand.u32 %v1703, 4294901760
  %v2404 = vsub.f32 %v1703, %v2403
  %2405 = vmatpush1.msra.mxu0 %v2404
  %2406 = vmatprep.subr.mxu0 0.0
  %v2407 = vand.u32 %v1704, 4294901760
  %v2408 = vsub.f32 %v1704, %v2407
  %2409 = vmatpush1.msra.mxu0 %v2408
  %2410 = vmatprep.subr.mxu0 0.0
  %v2411 = vand.u32 %v1705, 4294901760
  %v2412 = vsub.f32 %v1705, %v2411
  %2413 = vmatpush1.msra.mxu0 %v2412
  %2414 = vmatprep.subr.mxu0 0.0
  %v2415 = vand.u32 %v1706, 4294901760
  %v2416 = vsub.f32 %v1706, %v2415
  %2417 = vmatpush1.msra.mxu0 %v2416
  %2418 = vmatprep.subr.mxu0 0.0
  %v2419 = vand.u32 %v1707, 4294901760
  %v2420 = vsub.f32 %v1707, %v2419
  %2421 = vmatpush1.msra.mxu0 %v2420
  %2422 = vmatprep.subr.mxu0 0.0
  %v2423 = vand.u32 %v1708, 4294901760
  %v2424 = vsub.f32 %v1708, %v2423
  %2425 = vmatpush1.msra.mxu0 %v2424
  %2426 = vmatprep.subr.mxu0 0.0
  %v2427 = vand.u32 %v1709, 4294901760
  %v2428 = vsub.f32 %v1709, %v2427
  %2429 = vmatpush1.msra.mxu0 %v2428
  %2430 = vmatprep.subr.mxu0 0.0
  %v2431 = vand.u32 %v1710, 4294901760
  %v2432 = vsub.f32 %v1710, %v2431
  %2433 = vmatpush1.msra.mxu0 %v2432
  %2434 = vmatprep.subr.mxu0 0.0
  %v2435 = vand.u32 %v1711, 4294901760
  %v2436 = vsub.f32 %v1711, %v2435
  %2437 = vmatpush1.msra.mxu0 %v2436
  %2438 = vmatprep.subr.mxu0 0.0
  %v2439 = vand.u32 %v1712, 4294901760
  %v2440 = vsub.f32 %v1712, %v2439
  %2441 = vmatpush1.msra.mxu0 %v2440
  %2442 = vmatprep.subr.mxu0 0.0
  %v2443 = vand.u32 %v1713, 4294901760
  %v2444 = vsub.f32 %v1713, %v2443
  %2445 = vmatpush1.msra.mxu0 %v2444
  %2446 = vmatprep.subr.mxu0 0.0
  %v2447 = vand.u32 %v1714, 4294901760
  %v2448 = vsub.f32 %v1714, %v2447
  %2449 = vmatpush1.msra.mxu0 %v2448
  %2450 = vmatprep.subr.mxu0 0.0
  %v2451 = vand.u32 %v1715, 4294901760
  %v2452 = vsub.f32 %v1715, %v2451
  %2453 = vmatpush1.msra.mxu0 %v2452
  %2454 = vmatprep.subr.mxu0 0.0
  %2455 = vmatpush1.msra.mxu0 0.0
  %2456 = vmatprep.subr.mxu0 0.0
  %2457 = vmatpush1.msra.mxu0 0.0
  %2458 = vmatprep.subr.mxu0 0.0
  %2459 = vmatpush1.msra.mxu0 0.0
  %2460 = vmatprep.subr.mxu0 0.0
  %2461 = vmatpush1.msra.mxu0 0.0
  %2462 = vmatprep.subr.mxu0 0.0
  %2463 = vmatpush1.msra.mxu0 0.0
  %2464 = vmatprep.subr.mxu0 0.0
  %2465 = vmatpush1.msra.mxu0 0.0
  %2466 = vmatprep.subr.mxu0 0.0
  %2467 = vmatpush1.msra.mxu0 0.0
  %2468 = vmatprep.subr.mxu0 0.0
  %2469 = vmatpush1.msra.mxu0 0.0
  %2470 = vmatprep.subr.mxu0 0.0
  %2471 = vmatpush1.msra.mxu0 0.0
  %2472 = vmatprep.subr.mxu0 0.0
  %2473 = vmatpush1.msra.mxu0 0.0
  %2474 = vmatprep.subr.mxu0 0.0
  %2475 = vmatpush1.msra.mxu0 0.0
  %2476 = vmatprep.subr.mxu0 0.0
  %2477 = vmatpush1.msra.mxu0 0.0
  %2478 = vmatprep.subr.mxu0 0.0
  %2479 = vmatpush1.msra.mxu0 0.0
  %2480 = vmatprep.subr.mxu0 0.0
  %2481 = vmatpush1.msra.mxu0 0.0
  %2482 = vmatprep.subr.mxu0 0.0
  %2483 = vmatpush1.msra.mxu0 0.0
  %2484 = vmatprep.subr.mxu0 0.0
  %2485 = vmatpush1.msra.mxu0 0.0
  %2486 = vmatprep.mubr.f32.mxu0 0.0
  %v2487 = vsub.f32 %v1668, %v1668
  %2488 = vmatmul.mubr.f32.gmra.mrb[0].mxu0 %v2487
  %v2489 = vpop.f32.mrb[0].mxu0
  %v2490 = vadd.f32 %v2232, %v2489
  %v2491 = vpop.f32.mrb[0].mxu0
  %2492 = vmatprep.mubr.f32.mxu0 0.0
  %v2493 = vsub.f32 %v1669, %v1669
  %2494 = vmatmul.mubr.f32.gmra.mrb[0].mxu0 %v2493
  %v2495 = vpop.f32.mrb[0].mxu0
  %v2496 = vadd.f32 %v2237, %v2495
  %v2497 = vpop.f32.mrb[0].mxu0
  %2498 = vmatprep.mubr.f32.mxu0 0.0
  %v2499 = vsub.f32 %v1670, %v1670
  %2500 = vmatmul.mubr.f32.gmra.mrb[0].mxu0 %v2499
  %v2501 = vpop.f32.mrb[0].mxu0
  %v2502 = vadd.f32 %v2242, %v2501
  %v2503 = vpop.f32.mrb[0].mxu0
  %2504 = vmatprep.mubr.f32.mxu0 0.0
  %v2505 = vsub.f32 %v1671, %v1671
  %2506 = vmatmul.mubr.f32.gmra.mrb[0].mxu0 %v2505
  %v2507 = vpop.f32.mrb[0].mxu0
  %v2508 = vadd.f32 %v2247, %v2507
  %v2509 = vpop.f32.mrb[0].mxu0
  %2510 = vmatprep.mubr.f32.mxu0 0.0
  %v2511 = vsub.f32 %v1672, %v1672
  %2512 = vmatmul.mubr.f32.gmra.mrb[0].mxu0 %v2511
  %v2513 = vpop.f32.mrb[0].mxu0
  %v2514 = vadd.f32 %v2252, %v2513
  %v2515 = vpop.f32.mrb[0].mxu0
  %2516 = vmatprep.mubr.f32.mxu0 0.0
  %v2517 = vsub.f32 %v1673, %v1673
  %2518 = vmatmul.mubr.f32.gmra.mrb[0].mxu0 %v2517
  %v2519 = vpop.f32.mrb[0].mxu0
  %v2520 = vadd.f32 %v2257, %v2519
  %v2521 = vpop.f32.mrb[0].mxu0
  %2522 = vmatprep.mubr.f32.mxu0 0.0
  %v2523 = vsub.f32 %v1674, %v1674
  %2524 = vmatmul.mubr.f32.gmra.mrb[0].mxu0 %v2523
  %v2525 = vpop.f32.mrb[0].mxu0
  %v2526 = vadd.f32 %v2262, %v2525
  %v2527 = vpop.f32.mrb[0].mxu0
  %2528 = vmatprep.mubr.f32.mxu0 0.0
  %v2529 = vsub.f32 %v1675, %v1675
  %2530 = vmatmul.mubr.f32.gmra.mrb[0].mxu0 %v2529
  %v2531 = vpop.f32.mrb[0].mxu0
  %v2532 = vadd.f32 %v2267, %v2531
  %v2533 = vpop.f32.mrb[0].mxu0
  %2534 = vmatprep.mubr.f32.mxu0 0.0
  %v2535 = vsub.f32 %v1676, %v1676
  %2536 = vmatmul.mubr.f32.gmra.mrb[0].mxu0 %v2535
  %v2537 = vpop.f32.mrb[0].mxu0
  %v2538 = vadd.f32 %v2272, %v2537
  %v2539 = vpop.f32.mrb[0].mxu0
  %2540 = vmatprep.mubr.f32.mxu0 0.0
  %v2541 = vsub.f32 %v1677, %v1677
  %2542 = vmatmul.mubr.f32.gmra.mrb[0].mxu0 %v2541
  %v2543 = vpop.f32.mrb[0].mxu0
  %v2544 = vadd.f32 %v2277, %v2543
  %v2545 = vpop.f32.mrb[0].mxu0
  %2546 = vmatprep.mubr.f32.mxu0 0.0
  %v2547 = vsub.f32 %v1678, %v1678
  %2548 = vmatmul.mubr.f32.gmra.mrb[0].mxu0 %v2547
  %v2549 = vpop.f32.mrb[0].mxu0
  %v2550 = vadd.f32 %v2282, %v2549
  %v2551 = vpop.f32.mrb[0].mxu0
  %2552 = vmatprep.mubr.f32.mxu0 0.0
  %v2553 = vsub.f32 %v1679, %v1679
  %2554 = vmatmul.mubr.f32.gmra.mrb[0].mxu0 %v2553
  %v2555 = vpop.f32.mrb[0].mxu0
  %v2556 = vadd.f32 %v2287, %v2555
  %v2557 = vpop.f32.mrb[0].mxu0
  %2558 = vmatprep.mubr.f32.mxu0 0.0
  %v2559 = vsub.f32 %v1680, %v1680
  %2560 = vmatmul.mubr.f32.gmra.mrb[0].mxu0 %v2559
  %v2561 = vpop.f32.mrb[0].mxu0
  %v2562 = vadd.f32 %v2292, %v2561
  %v2563 = vpop.f32.mrb[0].mxu0
  %2564 = vmatprep.mubr.f32.mxu0 0.0
  %v2565 = vsub.f32 %v1681, %v1681
  %2566 = vmatmul.mubr.f32.gmra.mrb[0].mxu0 %v2565
  %v2567 = vpop.f32.mrb[0].mxu0
  %v2568 = vadd.f32 %v2297, %v2567
  %v2569 = vpop.f32.mrb[0].mxu0
  %2570 = vmatprep.mubr.f32.mxu0 0.0
  %v2571 = vsub.f32 %v1682, %v1682
  %2572 = vmatmul.mubr.f32.gmra.mrb[0].mxu0 %v2571
  %v2573 = vpop.f32.mrb[0].mxu0
  %v2574 = vadd.f32 %v2302, %v2573
  %v2575 = vpop.f32.mrb[0].mxu0
  %2576 = vmatprep.mubr.f32.mxu0 0.0
  %v2577 = vsub.f32 %v1683, %v1683
  %2578 = vmatmul.mubr.f32.gmra.mrb[0].mxu0 %v2577
  %v2579 = vpop.f32.mrb[0].mxu0
  %v2580 = vadd.f32 %v2307, %v2579
  %v2581 = vpop.f32.mrb[0].mxu0
  %2582 = vmatprep.mubr.f32.mxu0 0.0
  %v2583 = vsub.f32 %v1684, %v1684
  %2584 = vmatmul.mubr.f32.gmra.mrb[0].mxu0 %v2583
  %v2585 = vpop.f32.mrb[0].mxu0
  %v2586 = vadd.f32 %v2312, %v2585
  %v2587 = vpop.f32.mrb[0].mxu0
  %2588 = vmatprep.mubr.f32.mxu0 0.0
  %v2589 = vsub.f32 %v1685, %v1685
  %2590 = vmatmul.mubr.f32.gmra.mrb[0].mxu0 %v2589
  %v2591 = vpop.f32.mrb[0].mxu0
  %v2592 = vadd.f32 %v2317, %v2591
  %v2593 = vpop.f32.mrb[0].mxu0
  %2594 = vmatprep.mubr.f32.mxu0 0.0
  %v2595 = vsub.f32 %v1686, %v1686
  %2596 = vmatmul.mubr.f32.gmra.mrb[0].mxu0 %v2595
  %v2597 = vpop.f32.mrb[0].mxu0
  %v2598 = vadd.f32 %v2322, %v2597
  %v2599 = vpop.f32.mrb[0].mxu0
  %2600 = vmatprep.mubr.f32.mxu0 0.0
  %v2601 = vsub.f32 %v1687, %v1687
  %2602 = vmatmul.mubr.f32.gmra.mrb[0].mxu0 %v2601
  %v2603 = vpop.f32.mrb[0].mxu0
  %v2604 = vadd.f32 %v2327, %v2603
  %v2605 = vpop.f32.mrb[0].mxu0
  %2606 = vmatprep.mubr.f32.mxu0 0.0
  %v2607 = vsub.f32 %v1688, %v1688
  %2608 = vmatmul.mubr.f32.gmra.mrb[0].mxu0 %v2607
  %v2609 = vpop.f32.mrb[0].mxu0
  %v2610 = vadd.f32 %v2332, %v2609
  %v2611 = vpop.f32.mrb[0].mxu0
  %2612 = vmatprep.mubr.f32.mxu0 0.0
  %v2613 = vsub.f32 %v1689, %v1689
  %2614 = vmatmul.mubr.f32.gmra.mrb[0].mxu0 %v2613
  %v2615 = vpop.f32.mrb[0].mxu0
  %v2616 = vadd.f32 %v2337, %v2615
  %v2617 = vpop.f32.mrb[0].mxu0
  %2618 = vmatprep.mubr.f32.mxu0 0.0
  %v2619 = vsub.f32 %v1690, %v1690
  %2620 = vmatmul.mubr.f32.gmra.mrb[0].mxu0 %v2619
  %v2621 = vpop.f32.mrb[0].mxu0
  %v2622 = vadd.f32 %v2342, %v2621
  %v2623 = vpop.f32.mrb[0].mxu0
  %2624 = vmatprep.mubr.f32.mxu0 0.0
  %v2625 = vsub.f32 %v1691, %v1691
  %2626 = vmatmul.mubr.f32.gmra.mrb[0].mxu0 %v2625
  %v2627 = vpop.f32.mrb[0].mxu0
  %v2628 = vadd.f32 %v2347, %v2627
  %v2629 = vpop.f32.mrb[0].mxu0
  %2630 = vmatprep.mubr.f32.mxu0 0.0
  %v2631 = vsub.f32 %v1692, %v1692
  %2632 = vmatmul.mubr.f32.gmra.mrb[0].mxu0 %v2631
  %v2633 = vpop.f32.mrb[0].mxu0
  %v2634 = vadd.f32 %v2352, %v2633
  %v2635 = vpop.f32.mrb[0].mxu0
  %2636 = vmatprep.mubr.f32.mxu0 0.0
  %v2637 = vsub.f32 %v1693, %v1693
  %2638 = vmatmul.mubr.f32.gmra.mrb[0].mxu0 %v2637
  %v2639 = vpop.f32.mrb[0].mxu0
  %v2640 = vadd.f32 %v2357, %v2639
  %v2641 = vpop.f32.mrb[0].mxu0
  %2642 = vmatprep.mubr.f32.mxu0 0.0
  %v2643 = vsub.f32 %v1694, %v1694
  %2644 = vmatmul.mubr.f32.gmra.mrb[0].mxu0 %v2643
  %v2645 = vpop.f32.mrb[0].mxu0
  %v2646 = vadd.f32 %v2362, %v2645
  %v2647 = vpop.f32.mrb[0].mxu0
  %2648 = vmatprep.mubr.f32.mxu0 0.0
  %v2649 = vsub.f32 %v1695, %v1695
  %2650 = vmatmul.mubr.f32.gmra.mrb[0].mxu0 %v2649
  %v2651 = vpop.f32.mrb[0].mxu0
  %v2652 = vadd.f32 %v2367, %v2651
  %v2653 = vpop.f32.mrb[0].mxu0
  %2654 = vmatprep.mubr.f32.mxu0 0.0
  %v2655 = vsub.f32 %v1696, %v1696
  %2656 = vmatmul.mubr.f32.gmra.mrb[0].mxu0 %v2655
  %v2657 = vpop.f32.mrb[0].mxu0
  %v2658 = vadd.f32 %v2372, %v2657
  %v2659 = vpop.f32.mrb[0].mxu0
  %2660 = vmatprep.mubr.f32.mxu0 0.0
  %v2661 = vsub.f32 %v1697, %v1697
  %2662 = vmatmul.mubr.f32.gmra.mrb[0].mxu0 %v2661
  %v2663 = vpop.f32.mrb[0].mxu0
  %v2664 = vadd.f32 %v2377, %v2663
  %v2665 = vpop.f32.mrb[0].mxu0
  %2666 = vmatprep.mubr.f32.mxu0 0.0
  %v2667 = vsub.f32 %v1698, %v1698
  %2668 = vmatmul.mubr.f32.gmra.mrb[0].mxu0 %v2667
  %v2669 = vpop.f32.mrb[0].mxu0
  %v2670 = vadd.f32 %v2382, %v2669
  %v2671 = vpop.f32.mrb[0].mxu0
  %2672 = vmatprep.mubr.f32.mxu0 0.0
  %v2673 = vsub.f32 %v1699, %v1699
  %2674 = vmatmul.mubr.f32.gmra.mrb[0].mxu0 %v2673
  %v2675 = vpop.f32.mrb[0].mxu0
  %v2676 = vadd.f32 %v2387, %v2675
  %v2677 = vpop.f32.mrb[0].mxu0
  %2678 = vdwg.mxu0
  %2679 = vmatprep.subr.mxu0 0.0
  %v2680 = vand.u32 %v1700, 4294901760
  %2681 = vmatpush1.msra.mxu0 %v2680
  %2682 = vmatprep.subr.mxu0 0.0
  %v2683 = vand.u32 %v1701, 4294901760
  %2684 = vmatpush1.msra.mxu0 %v2683
  %2685 = vmatprep.subr.mxu0 0.0
  %v2686 = vand.u32 %v1702, 4294901760
  %2687 = vmatpush1.msra.mxu0 %v2686
  %2688 = vmatprep.subr.mxu0 0.0
  %v2689 = vand.u32 %v1703, 4294901760
  %2690 = vmatpush1.msra.mxu0 %v2689
  %2691 = vmatprep.subr.mxu0 0.0
  %v2692 = vand.u32 %v1704, 4294901760
  %2693 = vmatpush1.msra.mxu0 %v2692
  %2694 = vmatprep.subr.mxu0 0.0
  %v2695 = vand.u32 %v1705, 4294901760
  %2696 = vmatpush1.msra.mxu0 %v2695
  %2697 = vmatprep.subr.mxu0 0.0
  %v2698 = vand.u32 %v1706, 4294901760
  %2699 = vmatpush1.msra.mxu0 %v2698
  %2700 = vmatprep.subr.mxu0 0.0
  %v2701 = vand.u32 %v1707, 4294901760
  %2702 = vmatpush1.msra.mxu0 %v2701
  %2703 = vmatprep.subr.mxu0 0.0
  %v2704 = vand.u32 %v1708, 4294901760
  %2705 = vmatpush1.msra.mxu0 %v2704
  %2706 = vmatprep.subr.mxu0 0.0
  %v2707 = vand.u32 %v1709, 4294901760
  %2708 = vmatpush1.msra.mxu0 %v2707
  %2709 = vmatprep.subr.mxu0 0.0
  %v2710 = vand.u32 %v1710, 4294901760
  %2711 = vmatpush1.msra.mxu0 %v2710
  %2712 = vmatprep.subr.mxu0 0.0
  %v2713 = vand.u32 %v1711, 4294901760
  %2714 = vmatpush1.msra.mxu0 %v2713
  %2715 = vmatprep.subr.mxu0 0.0
  %v2716 = vand.u32 %v1712, 4294901760
  %2717 = vmatpush1.msra.mxu0 %v2716
  %2718 = vmatprep.subr.mxu0 0.0
  %v2719 = vand.u32 %v1713, 4294901760
  %2720 = vmatpush1.msra.mxu0 %v2719
  %2721 = vmatprep.subr.mxu0 0.0
  %v2722 = vand.u32 %v1714, 4294901760
  %2723 = vmatpush1.msra.mxu0 %v2722
  %2724 = vmatprep.subr.mxu0 0.0
  %v2725 = vand.u32 %v1715, 4294901760
  %2726 = vmatpush1.msra.mxu0 %v2725
  %2727 = vmatprep.subr.mxu0 0.0
  %2728 = vmatpush1.msra.mxu0 0.0
  %2729 = vmatprep.subr.mxu0 0.0
  %2730 = vmatpush1.msra.mxu0 0.0
  %2731 = vmatprep.subr.mxu0 0.0
  %2732 = vmatpush1.msra.mxu0 0.0
  %2733 = vmatprep.subr.mxu0 0.0
  %2734 = vmatpush1.msra.mxu0 0.0
  %2735 = vmatprep.subr.mxu0 0.0
  %2736 = vmatpush1.msra.mxu0 0.0
  %2737 = vmatprep.subr.mxu0 0.0
  %2738 = vmatpush1.msra.mxu0 0.0
  %2739 = vmatprep.subr.mxu0 0.0
  %2740 = vmatpush1.msra.mxu0 0.0
  %2741 = vmatprep.subr.mxu0 0.0
  %2742 = vmatpush1.msra.mxu0 0.0
  %2743 = vmatprep.subr.mxu0 0.0
  %2744 = vmatpush1.msra.mxu0 0.0
  %2745 = vmatprep.subr.mxu0 0.0
  %2746 = vmatpush1.msra.mxu0 0.0
  %2747 = vmatprep.subr.mxu0 0.0
  %2748 = vmatpush1.msra.mxu0 0.0
  %2749 = vmatprep.subr.mxu0 0.0
  %2750 = vmatpush1.msra.mxu0 0.0
  %2751 = vmatprep.subr.mxu0 0.0
  %2752 = vmatpush1.msra.mxu0 0.0
  %2753 = vmatprep.subr.mxu0 0.0
  %2754 = vmatpush1.msra.mxu0 0.0
  %2755 = vmatprep.subr.mxu0 0.0
  %2756 = vmatpush1.msra.mxu0 0.0
  %2757 = vmatprep.subr.mxu0 0.0
  %2758 = vmatpush1.msra.mxu0 0.0
  %2759 = vmatprep.mubr.f32.mxu0 0.0
  %v2760 = vsub.f32 %v1668, %v1668
  %v2761 = vand.u32 %v2760, 4294901760
  %2762 = vmatmul.mubr.f32.gmra.mrb[0].mxu0 %v2761
  %v2763 = vpop.f32.mrb[0].mxu0
  %v2764 = vadd.f32 %v2490, %v2763
  %v2765 = vpop.f32.mrb[0].mxu0
  %2766 = vmatprep.mubr.f32.mxu0 0.0
  %v2767 = vsub.f32 %v1669, %v1669
  %v2768 = vand.u32 %v2767, 4294901760
  %2769 = vmatmul.mubr.f32.gmra.mrb[0].mxu0 %v2768
  %v2770 = vpop.f32.mrb[0].mxu0
  %v2771 = vadd.f32 %v2496, %v2770
  %v2772 = vpop.f32.mrb[0].mxu0
  %2773 = vmatprep.mubr.f32.mxu0 0.0
  %v2774 = vsub.f32 %v1670, %v1670
  %v2775 = vand.u32 %v2774, 4294901760
  %2776 = vmatmul.mubr.f32.gmra.mrb[0].mxu0 %v2775
  %v2777 = vpop.f32.mrb[0].mxu0
  %v2778 = vadd.f32 %v2502, %v2777
  %v2779 = vpop.f32.mrb[0].mxu0
  %2780 = vmatprep.mubr.f32.mxu0 0.0
  %v2781 = vsub.f32 %v1671, %v1671
  %v2782 = vand.u32 %v2781, 4294901760
  %2783 = vmatmul.mubr.f32.gmra.mrb[0].mxu0 %v2782
  %v2784 = vpop.f32.mrb[0].mxu0
  %v2785 = vadd.f32 %v2508, %v2784
  %v2786 = vpop.f32.mrb[0].mxu0
  %2787 = vmatprep.mubr.f32.mxu0 0.0
  %v2788 = vsub.f32 %v1672, %v1672
  %v2789 = vand.u32 %v2788, 4294901760
  %2790 = vmatmul.mubr.f32.gmra.mrb[0].mxu0 %v2789
  %v2791 = vpop.f32.mrb[0].mxu0
  %v2792 = vadd.f32 %v2514, %v2791
  %v2793 = vpop.f32.mrb[0].mxu0
  %2794 = vmatprep.mubr.f32.mxu0 0.0
  %v2795 = vsub.f32 %v1673, %v1673
  %v2796 = vand.u32 %v2795, 4294901760
  %2797 = vmatmul.mubr.f32.gmra.mrb[0].mxu0 %v2796
  %v2798 = vpop.f32.mrb[0].mxu0
  %v2799 = vadd.f32 %v2520, %v2798
  %v2800 = vpop.f32.mrb[0].mxu0
  %2801 = vmatprep.mubr.f32.mxu0 0.0
  %v2802 = vsub.f32 %v1674, %v1674
  %v2803 = vand.u32 %v2802, 4294901760
  %2804 = vmatmul.mubr.f32.gmra.mrb[0].mxu0 %v2803
  %v2805 = vpop.f32.mrb[0].mxu0
  %v2806 = vadd.f32 %v2526, %v2805
  %v2807 = vpop.f32.mrb[0].mxu0
  %2808 = vmatprep.mubr.f32.mxu0 0.0
  %v2809 = vsub.f32 %v1675, %v1675
  %v2810 = vand.u32 %v2809, 4294901760
  %2811 = vmatmul.mubr.f32.gmra.mrb[0].mxu0 %v2810
  %v2812 = vpop.f32.mrb[0].mxu0
  %v2813 = vadd.f32 %v2532, %v2812
  %v2814 = vpop.f32.mrb[0].mxu0
  %2815 = vmatprep.mubr.f32.mxu0 0.0
  %v2816 = vsub.f32 %v1676, %v1676
  %v2817 = vand.u32 %v2816, 4294901760
  %2818 = vmatmul.mubr.f32.gmra.mrb[0].mxu0 %v2817
  %v2819 = vpop.f32.mrb[0].mxu0
  %v2820 = vadd.f32 %v2538, %v2819
  %v2821 = vpop.f32.mrb[0].mxu0
  %2822 = vmatprep.mubr.f32.mxu0 0.0
  %v2823 = vsub.f32 %v1677, %v1677
  %v2824 = vand.u32 %v2823, 4294901760
  %2825 = vmatmul.mubr.f32.gmra.mrb[0].mxu0 %v2824
  %v2826 = vpop.f32.mrb[0].mxu0
  %v2827 = vadd.f32 %v2544, %v2826
  %v2828 = vpop.f32.mrb[0].mxu0
  %2829 = vmatprep.mubr.f32.mxu0 0.0
  %v2830 = vsub.f32 %v1678, %v1678
  %v2831 = vand.u32 %v2830, 4294901760
  %2832 = vmatmul.mubr.f32.gmra.mrb[0].mxu0 %v2831
  %v2833 = vpop.f32.mrb[0].mxu0
  %v2834 = vadd.f32 %v2550, %v2833
  %v2835 = vpop.f32.mrb[0].mxu0
  %2836 = vmatprep.mubr.f32.mxu0 0.0
  %v2837 = vsub.f32 %v1679, %v1679
  %v2838 = vand.u32 %v2837, 4294901760
  %2839 = vmatmul.mubr.f32.gmra.mrb[0].mxu0 %v2838
  %v2840 = vpop.f32.mrb[0].mxu0
  %v2841 = vadd.f32 %v2556, %v2840
  %v2842 = vpop.f32.mrb[0].mxu0
  %2843 = vmatprep.mubr.f32.mxu0 0.0
  %v2844 = vsub.f32 %v1680, %v1680
  %v2845 = vand.u32 %v2844, 4294901760
  %2846 = vmatmul.mubr.f32.gmra.mrb[0].mxu0 %v2845
  %v2847 = vpop.f32.mrb[0].mxu0
  %v2848 = vadd.f32 %v2562, %v2847
  %v2849 = vpop.f32.mrb[0].mxu0
  %2850 = vmatprep.mubr.f32.mxu0 0.0
  %v2851 = vsub.f32 %v1681, %v1681
  %v2852 = vand.u32 %v2851, 4294901760
  %2853 = vmatmul.mubr.f32.gmra.mrb[0].mxu0 %v2852
  %v2854 = vpop.f32.mrb[0].mxu0
  %v2855 = vadd.f32 %v2568, %v2854
  %v2856 = vpop.f32.mrb[0].mxu0
  %2857 = vmatprep.mubr.f32.mxu0 0.0
  %v2858 = vsub.f32 %v1682, %v1682
  %v2859 = vand.u32 %v2858, 4294901760
  %2860 = vmatmul.mubr.f32.gmra.mrb[0].mxu0 %v2859
  %v2861 = vpop.f32.mrb[0].mxu0
  %v2862 = vadd.f32 %v2574, %v2861
  %v2863 = vpop.f32.mrb[0].mxu0
  %2864 = vmatprep.mubr.f32.mxu0 0.0
  %v2865 = vsub.f32 %v1683, %v1683
  %v2866 = vand.u32 %v2865, 4294901760
  %2867 = vmatmul.mubr.f32.gmra.mrb[0].mxu0 %v2866
  %v2868 = vpop.f32.mrb[0].mxu0
  %v2869 = vadd.f32 %v2580, %v2868
  %v2870 = vpop.f32.mrb[0].mxu0
  %2871 = vmatprep.mubr.f32.mxu0 0.0
  %v2872 = vsub.f32 %v1684, %v1684
  %v2873 = vand.u32 %v2872, 4294901760
  %2874 = vmatmul.mubr.f32.gmra.mrb[0].mxu0 %v2873
  %v2875 = vpop.f32.mrb[0].mxu0
  %v2876 = vadd.f32 %v2586, %v2875
  %v2877 = vpop.f32.mrb[0].mxu0
  %2878 = vmatprep.mubr.f32.mxu0 0.0
  %v2879 = vsub.f32 %v1685, %v1685
  %v2880 = vand.u32 %v2879, 4294901760
  %2881 = vmatmul.mubr.f32.gmra.mrb[0].mxu0 %v2880
  %v2882 = vpop.f32.mrb[0].mxu0
  %v2883 = vadd.f32 %v2592, %v2882
  %v2884 = vpop.f32.mrb[0].mxu0
  %2885 = vmatprep.mubr.f32.mxu0 0.0
  %v2886 = vsub.f32 %v1686, %v1686
  %v2887 = vand.u32 %v2886, 4294901760
  %2888 = vmatmul.mubr.f32.gmra.mrb[0].mxu0 %v2887
  %v2889 = vpop.f32.mrb[0].mxu0
  %v2890 = vadd.f32 %v2598, %v2889
  %v2891 = vpop.f32.mrb[0].mxu0
  %2892 = vmatprep.mubr.f32.mxu0 0.0
  %v2893 = vsub.f32 %v1687, %v1687
  %v2894 = vand.u32 %v2893, 4294901760
  %2895 = vmatmul.mubr.f32.gmra.mrb[0].mxu0 %v2894
  %v2896 = vpop.f32.mrb[0].mxu0
  %v2897 = vadd.f32 %v2604, %v2896
  %v2898 = vpop.f32.mrb[0].mxu0
  %2899 = vmatprep.mubr.f32.mxu0 0.0
  %v2900 = vsub.f32 %v1688, %v1688
  %v2901 = vand.u32 %v2900, 4294901760
  %2902 = vmatmul.mubr.f32.gmra.mrb[0].mxu0 %v2901
  %v2903 = vpop.f32.mrb[0].mxu0
  %v2904 = vadd.f32 %v2610, %v2903
  %v2905 = vpop.f32.mrb[0].mxu0
  %2906 = vmatprep.mubr.f32.mxu0 0.0
  %v2907 = vsub.f32 %v1689, %v1689
  %v2908 = vand.u32 %v2907, 4294901760
  %2909 = vmatmul.mubr.f32.gmra.mrb[0].mxu0 %v2908
  %v2910 = vpop.f32.mrb[0].mxu0
  %v2911 = vadd.f32 %v2616, %v2910
  %v2912 = vpop.f32.mrb[0].mxu0
  %2913 = vmatprep.mubr.f32.mxu0 0.0
  %v2914 = vsub.f32 %v1690, %v1690
  %v2915 = vand.u32 %v2914, 4294901760
  %2916 = vmatmul.mubr.f32.gmra.mrb[0].mxu0 %v2915
  %v2917 = vpop.f32.mrb[0].mxu0
  %v2918 = vadd.f32 %v2622, %v2917
  %v2919 = vpop.f32.mrb[0].mxu0
  %2920 = vmatprep.mubr.f32.mxu0 0.0
  %v2921 = vsub.f32 %v1691, %v1691
  %v2922 = vand.u32 %v2921, 4294901760
  %2923 = vmatmul.mubr.f32.gmra.mrb[0].mxu0 %v2922
  %v2924 = vpop.f32.mrb[0].mxu0
  %v2925 = vadd.f32 %v2628, %v2924
  %v2926 = vpop.f32.mrb[0].mxu0
  %2927 = vmatprep.mubr.f32.mxu0 0.0
  %v2928 = vsub.f32 %v1692, %v1692
  %v2929 = vand.u32 %v2928, 4294901760
  %2930 = vmatmul.mubr.f32.gmra.mrb[0].mxu0 %v2929
  %v2931 = vpop.f32.mrb[0].mxu0
  %v2932 = vadd.f32 %v2634, %v2931
  %v2933 = vpop.f32.mrb[0].mxu0
  %2934 = vmatprep.mubr.f32.mxu0 0.0
  %v2935 = vsub.f32 %v1693, %v1693
  %v2936 = vand.u32 %v2935, 4294901760
  %2937 = vmatmul.mubr.f32.gmra.mrb[0].mxu0 %v2936
  %v2938 = vpop.f32.mrb[0].mxu0
  %v2939 = vadd.f32 %v2640, %v2938
  %v2940 = vpop.f32.mrb[0].mxu0
  %2941 = vmatprep.mubr.f32.mxu0 0.0
  %v2942 = vsub.f32 %v1694, %v1694
  %v2943 = vand.u32 %v2942, 4294901760
  %2944 = vmatmul.mubr.f32.gmra.mrb[0].mxu0 %v2943
  %v2945 = vpop.f32.mrb[0].mxu0
  %v2946 = vadd.f32 %v2646, %v2945
  %v2947 = vpop.f32.mrb[0].mxu0
  %2948 = vmatprep.mubr.f32.mxu0 0.0
  %v2949 = vsub.f32 %v1695, %v1695
  %v2950 = vand.u32 %v2949, 4294901760
  %2951 = vmatmul.mubr.f32.gmra.mrb[0].mxu0 %v2950
  %v2952 = vpop.f32.mrb[0].mxu0
  %v2953 = vadd.f32 %v2652, %v2952
  %v2954 = vpop.f32.mrb[0].mxu0
  %2955 = vmatprep.mubr.f32.mxu0 0.0
  %v2956 = vsub.f32 %v1696, %v1696
  %v2957 = vand.u32 %v2956, 4294901760
  %2958 = vmatmul.mubr.f32.gmra.mrb[0].mxu0 %v2957
  %v2959 = vpop.f32.mrb[0].mxu0
  %v2960 = vadd.f32 %v2658, %v2959
  %v2961 = vpop.f32.mrb[0].mxu0
  %2962 = vmatprep.mubr.f32.mxu0 0.0
  %v2963 = vsub.f32 %v1697, %v1697
  %v2964 = vand.u32 %v2963, 4294901760
  %2965 = vmatmul.mubr.f32.gmra.mrb[0].mxu0 %v2964
  %v2966 = vpop.f32.mrb[0].mxu0
  %v2967 = vadd.f32 %v2664, %v2966
  %v2968 = vpop.f32.mrb[0].mxu0
  %2969 = vmatprep.mubr.f32.mxu0 0.0
  %v2970 = vsub.f32 %v1698, %v1698
  %v2971 = vand.u32 %v2970, 4294901760
  %2972 = vmatmul.mubr.f32.gmra.mrb[0].mxu0 %v2971
  %v2973 = vpop.f32.mrb[0].mxu0
  %v2974 = vadd.f32 %v2670, %v2973
  %v2975 = vpop.f32.mrb[0].mxu0
  %2976 = vmatprep.mubr.f32.mxu0 0.0
  %v2977 = vsub.f32 %v1699, %v1699
  %v2978 = vand.u32 %v2977, 4294901760
  %2979 = vmatmul.mubr.f32.gmra.mrb[0].mxu0 %v2978
  %v2980 = vpop.f32.mrb[0].mxu0
  %v2981 = vadd.f32 %v2676, %v2980
  %v2982 = vpop.f32.mrb[0].mxu0
  %2983 = vdwg.mxu0
  %2984 = vmatprep.subr.mxu0 0.0
  %v2985 = vand.u32 %v1700, 4294901760
  %v2986 = vsub.f32 %v1700, %v2985
  %v2987 = vand.u32 %v2986, 4294901760
  %2988 = vmatpush1.msra.mxu0 %v2987
  %2989 = vmatprep.subr.mxu0 0.0
  %v2990 = vand.u32 %v1701, 4294901760
  %v2991 = vsub.f32 %v1701, %v2990
  %v2992 = vand.u32 %v2991, 4294901760
  %2993 = vmatpush1.msra.mxu0 %v2992
  %2994 = vmatprep.subr.mxu0 0.0
  %v2995 = vand.u32 %v1702, 4294901760
  %v2996 = vsub.f32 %v1702, %v2995
  %v2997 = vand.u32 %v2996, 4294901760
  %2998 = vmatpush1.msra.mxu0 %v2997
  %2999 = vmatprep.subr.mxu0 0.0
  %v3000 = vand.u32 %v1703, 4294901760
  %v3001 = vsub.f32 %v1703, %v3000
  %v3002 = vand.u32 %v3001, 4294901760
  %3003 = vmatpush1.msra.mxu0 %v3002
  %3004 = vmatprep.subr.mxu0 0.0
  %v3005 = vand.u32 %v1704, 4294901760
  %v3006 = vsub.f32 %v1704, %v3005
  %v3007 = vand.u32 %v3006, 4294901760
  %3008 = vmatpush1.msra.mxu0 %v3007
  %3009 = vmatprep.subr.mxu0 0.0
  %v3010 = vand.u32 %v1705, 4294901760
  %v3011 = vsub.f32 %v1705, %v3010
  %v3012 = vand.u32 %v3011, 4294901760
  %3013 = vmatpush1.msra.mxu0 %v3012
  %3014 = vmatprep.subr.mxu0 0.0
  %v3015 = vand.u32 %v1706, 4294901760
  %v3016 = vsub.f32 %v1706, %v3015
  %v3017 = vand.u32 %v3016, 4294901760
  %3018 = vmatpush1.msra.mxu0 %v3017
  %3019 = vmatprep.subr.mxu0 0.0
  %v3020 = vand.u32 %v1707, 4294901760
  %v3021 = vsub.f32 %v1707, %v3020
  %v3022 = vand.u32 %v3021, 4294901760
  %3023 = vmatpush1.msra.mxu0 %v3022
  %3024 = vmatprep.subr.mxu0 0.0
  %v3025 = vand.u32 %v1708, 4294901760
  %v3026 = vsub.f32 %v1708, %v3025
  %v3027 = vand.u32 %v3026, 4294901760
  %3028 = vmatpush1.msra.mxu0 %v3027
  %3029 = vmatprep.subr.mxu0 0.0
  %v3030 = vand.u32 %v1709, 4294901760
  %v3031 = vsub.f32 %v1709, %v3030
  %v3032 = vand.u32 %v3031, 4294901760
  %3033 = vmatpush1.msra.mxu0 %v3032
  %3034 = vmatprep.subr.mxu0 0.0
  %v3035 = vand.u32 %v1710, 4294901760
  %v3036 = vsub.f32 %v1710, %v3035
  %v3037 = vand.u32 %v3036, 4294901760
  %3038 = vmatpush1.msra.mxu0 %v3037
  %3039 = vmatprep.subr.mxu0 0.0
  %v3040 = vand.u32 %v1711, 4294901760
  %v3041 = vsub.f32 %v1711, %v3040
  %v3042 = vand.u32 %v3041, 4294901760
  %3043 = vmatpush1.msra.mxu0 %v3042
  %3044 = vmatprep.subr.mxu0 0.0
  %v3045 = vand.u32 %v1712, 4294901760
  %v3046 = vsub.f32 %v1712, %v3045
  %v3047 = vand.u32 %v3046, 4294901760
  %3048 = vmatpush1.msra.mxu0 %v3047
  %3049 = vmatprep.subr.mxu0 0.0
  %v3050 = vand.u32 %v1713, 4294901760
  %v3051 = vsub.f32 %v1713, %v3050
  %v3052 = vand.u32 %v3051, 4294901760
  %3053 = vmatpush1.msra.mxu0 %v3052
  %3054 = vmatprep.subr.mxu0 0.0
  %v3055 = vand.u32 %v1714, 4294901760
  %v3056 = vsub.f32 %v1714, %v3055
  %v3057 = vand.u32 %v3056, 4294901760
  %3058 = vmatpush1.msra.mxu0 %v3057
  %3059 = vmatprep.subr.mxu0 0.0
  %v3060 = vand.u32 %v1715, 4294901760
  %v3061 = vsub.f32 %v1715, %v3060
  %v3062 = vand.u32 %v3061, 4294901760
  %3063 = vmatpush1.msra.mxu0 %v3062
  %3064 = vmatprep.subr.mxu0 0.0
  %3065 = vmatpush1.msra.mxu0 0.0
  %3066 = vmatprep.subr.mxu0 0.0
  %3067 = vmatpush1.msra.mxu0 0.0
  %3068 = vmatprep.subr.mxu0 0.0
  %3069 = vmatpush1.msra.mxu0 0.0
  %3070 = vmatprep.subr.mxu0 0.0
  %3071 = vmatpush1.msra.mxu0 0.0
  %3072 = vmatprep.subr.mxu0 0.0
  %3073 = vmatpush1.msra.mxu0 0.0
  %3074 = vmatprep.subr.mxu0 0.0
  %3075 = vmatpush1.msra.mxu0 0.0
  %3076 = vmatprep.subr.mxu0 0.0
  %3077 = vmatpush1.msra.mxu0 0.0
  %3078 = vmatprep.subr.mxu0 0.0
  %3079 = vmatpush1.msra.mxu0 0.0
  %3080 = vmatprep.subr.mxu0 0.0
  %3081 = vmatpush1.msra.mxu0 0.0
  %3082 = vmatprep.subr.mxu0 0.0
  %3083 = vmatpush1.msra.mxu0 0.0
  %3084 = vmatprep.subr.mxu0 0.0
  %3085 = vmatpush1.msra.mxu0 0.0
  %3086 = vmatprep.subr.mxu0 0.0
  %3087 = vmatpush1.msra.mxu0 0.0
  %3088 = vmatprep.subr.mxu0 0.0
  %3089 = vmatpush1.msra.mxu0 0.0
  %3090 = vmatprep.subr.mxu0 0.0
  %3091 = vmatpush1.msra.mxu0 0.0
  %3092 = vmatprep.subr.mxu0 0.0
  %3093 = vmatpush1.msra.mxu0 0.0
  %3094 = vmatprep.subr.mxu0 0.0
  %3095 = vmatpush1.msra.mxu0 0.0
  %3096 = vmatprep.mubr.f32.mxu0 0.0
  %3097 = vmatmul.mubr.f32.gmra.mrb[0].mxu0 %v1668
  %v3098 = vpop.f32.mrb[0].mxu0
  %v3099 = vadd.f32 %v2764, %v3098
  %v3100 = vpop.f32.mrb[0].mxu0
  %3101 = vmatprep.mubr.f32.mxu0 0.0
  %3102 = vmatmul.mubr.f32.gmra.mrb[0].mxu0 %v1669
  %v3103 = vpop.f32.mrb[0].mxu0
  %v3104 = vadd.f32 %v2771, %v3103
  %v3105 = vpop.f32.mrb[0].mxu0
  %3106 = vmatprep.mubr.f32.mxu0 0.0
  %3107 = vmatmul.mubr.f32.gmra.mrb[0].mxu0 %v1670
  %v3108 = vpop.f32.mrb[0].mxu0
  %v3109 = vadd.f32 %v2778, %v3108
  %v3110 = vpop.f32.mrb[0].mxu0
  %3111 = vmatprep.mubr.f32.mxu0 0.0
  %3112 = vmatmul.mubr.f32.gmra.mrb[0].mxu0 %v1671
  %v3113 = vpop.f32.mrb[0].mxu0
  %v3114 = vadd.f32 %v2785, %v3113
  %v3115 = vpop.f32.mrb[0].mxu0
  %3116 = vmatprep.mubr.f32.mxu0 0.0
  %3117 = vmatmul.mubr.f32.gmra.mrb[0].mxu0 %v1672
  %v3118 = vpop.f32.mrb[0].mxu0
  %v3119 = vadd.f32 %v2792, %v3118
  %v3120 = vpop.f32.mrb[0].mxu0
  %3121 = vmatprep.mubr.f32.mxu0 0.0
  %3122 = vmatmul.mubr.f32.gmra.mrb[0].mxu0 %v1673
  %v3123 = vpop.f32.mrb[0].mxu0
  %v3124 = vadd.f32 %v2799, %v3123
  %v3125 = vpop.f32.mrb[0].mxu0
  %3126 = vmatprep.mubr.f32.mxu0 0.0
  %3127 = vmatmul.mubr.f32.gmra.mrb[0].mxu0 %v1674
  %v3128 = vpop.f32.mrb[0].mxu0
  %v3129 = vadd.f32 %v2806, %v3128
  %v3130 = vpop.f32.mrb[0].mxu0
  %3131 = vmatprep.mubr.f32.mxu0 0.0
  %3132 = vmatmul.mubr.f32.gmra.mrb[0].mxu0 %v1675
  %v3133 = vpop.f32.mrb[0].mxu0
  %v3134 = vadd.f32 %v2813, %v3133
  %v3135 = vpop.f32.mrb[0].mxu0
  %3136 = vmatprep.mubr.f32.mxu0 0.0
  %3137 = vmatmul.mubr.f32.gmra.mrb[0].mxu0 %v1676
  %v3138 = vpop.f32.mrb[0].mxu0
  %v3139 = vadd.f32 %v2820, %v3138
  %v3140 = vpop.f32.mrb[0].mxu0
  %3141 = vmatprep.mubr.f32.mxu0 0.0
  %3142 = vmatmul.mubr.f32.gmra.mrb[0].mxu0 %v1677
  %v3143 = vpop.f32.mrb[0].mxu0
  %v3144 = vadd.f32 %v2827, %v3143
  %v3145 = vpop.f32.mrb[0].mxu0
  %3146 = vmatprep.mubr.f32.mxu0 0.0
  %3147 = vmatmul.mubr.f32.gmra.mrb[0].mxu0 %v1678
  %v3148 = vpop.f32.mrb[0].mxu0
  %v3149 = vadd.f32 %v2834, %v3148
  %v3150 = vpop.f32.mrb[0].mxu0
  %3151 = vmatprep.mubr.f32.mxu0 0.0
  %3152 = vmatmul.mubr.f32.gmra.mrb[0].mxu0 %v1679
  %v3153 = vpop.f32.mrb[0].mxu0
  %v3154 = vadd.f32 %v2841, %v3153
  %v3155 = vpop.f32.mrb[0].mxu0
  %3156 = vmatprep.mubr.f32.mxu0 0.0
  %3157 = vmatmul.mubr.f32.gmra.mrb[0].mxu0 %v1680
  %v3158 = vpop.f32.mrb[0].mxu0
  %v3159 = vadd.f32 %v2848, %v3158
  %v3160 = vpop.f32.mrb[0].mxu0
  %3161 = vmatprep.mubr.f32.mxu0 0.0
  %3162 = vmatmul.mubr.f32.gmra.mrb[0].mxu0 %v1681
  %v3163 = vpop.f32.mrb[0].mxu0
  %v3164 = vadd.f32 %v2855, %v3163
  %v3165 = vpop.f32.mrb[0].mxu0
  %3166 = vmatprep.mubr.f32.mxu0 0.0
  %3167 = vmatmul.mubr.f32.gmra.mrb[0].mxu0 %v1682
  %v3168 = vpop.f32.mrb[0].mxu0
  %v3169 = vadd.f32 %v2862, %v3168
  %v3170 = vpop.f32.mrb[0].mxu0
  %3171 = vmatprep.mubr.f32.mxu0 0.0
  %3172 = vmatmul.mubr.f32.gmra.mrb[0].mxu0 %v1683
  %v3173 = vpop.f32.mrb[0].mxu0
  %v3174 = vadd.f32 %v2869, %v3173
  %v3175 = vpop.f32.mrb[0].mxu0
  %3176 = vmatprep.mubr.f32.mxu0 0.0
  %3177 = vmatmul.mubr.f32.gmra.mrb[0].mxu0 %v1684
  %v3178 = vpop.f32.mrb[0].mxu0
  %v3179 = vadd.f32 %v2876, %v3178
  %v3180 = vpop.f32.mrb[0].mxu0
  %3181 = vmatprep.mubr.f32.mxu0 0.0
  %3182 = vmatmul.mubr.f32.gmra.mrb[0].mxu0 %v1685
  %v3183 = vpop.f32.mrb[0].mxu0
  %v3184 = vadd.f32 %v2883, %v3183
  %v3185 = vpop.f32.mrb[0].mxu0
  %3186 = vmatprep.mubr.f32.mxu0 0.0
  %3187 = vmatmul.mubr.f32.gmra.mrb[0].mxu0 %v1686
  %v3188 = vpop.f32.mrb[0].mxu0
  %v3189 = vadd.f32 %v2890, %v3188
  %v3190 = vpop.f32.mrb[0].mxu0
  %3191 = vmatprep.mubr.f32.mxu0 0.0
  %3192 = vmatmul.mubr.f32.gmra.mrb[0].mxu0 %v1687
  %v3193 = vpop.f32.mrb[0].mxu0
  %v3194 = vadd.f32 %v2897, %v3193
  %v3195 = vpop.f32.mrb[0].mxu0
  %3196 = vmatprep.mubr.f32.mxu0 0.0
  %3197 = vmatmul.mubr.f32.gmra.mrb[0].mxu0 %v1688
  %v3198 = vpop.f32.mrb[0].mxu0
  %v3199 = vadd.f32 %v2904, %v3198
  %v3200 = vpop.f32.mrb[0].mxu0
  %3201 = vmatprep.mubr.f32.mxu0 0.0
  %3202 = vmatmul.mubr.f32.gmra.mrb[0].mxu0 %v1689
  %v3203 = vpop.f32.mrb[0].mxu0
  %v3204 = vadd.f32 %v2911, %v3203
  %v3205 = vpop.f32.mrb[0].mxu0
  %3206 = vmatprep.mubr.f32.mxu0 0.0
  %3207 = vmatmul.mubr.f32.gmra.mrb[0].mxu0 %v1690
  %v3208 = vpop.f32.mrb[0].mxu0
  %v3209 = vadd.f32 %v2918, %v3208
  %v3210 = vpop.f32.mrb[0].mxu0
  %3211 = vmatprep.mubr.f32.mxu0 0.0
  %3212 = vmatmul.mubr.f32.gmra.mrb[0].mxu0 %v1691
  %v3213 = vpop.f32.mrb[0].mxu0
  %v3214 = vadd.f32 %v2925, %v3213
  %v3215 = vpop.f32.mrb[0].mxu0
  %3216 = vmatprep.mubr.f32.mxu0 0.0
  %3217 = vmatmul.mubr.f32.gmra.mrb[0].mxu0 %v1692
  %v3218 = vpop.f32.mrb[0].mxu0
  %v3219 = vadd.f32 %v2932, %v3218
  %v3220 = vpop.f32.mrb[0].mxu0
  %3221 = vmatprep.mubr.f32.mxu0 0.0
  %3222 = vmatmul.mubr.f32.gmra.mrb[0].mxu0 %v1693
  %v3223 = vpop.f32.mrb[0].mxu0
  %v3224 = vadd.f32 %v2939, %v3223
  %v3225 = vpop.f32.mrb[0].mxu0
  %3226 = vmatprep.mubr.f32.mxu0 0.0
  %3227 = vmatmul.mubr.f32.gmra.mrb[0].mxu0 %v1694
  %v3228 = vpop.f32.mrb[0].mxu0
  %v3229 = vadd.f32 %v2946, %v3228
  %v3230 = vpop.f32.mrb[0].mxu0
  %3231 = vmatprep.mubr.f32.mxu0 0.0
  %3232 = vmatmul.mubr.f32.gmra.mrb[0].mxu0 %v1695
  %v3233 = vpop.f32.mrb[0].mxu0
  %v3234 = vadd.f32 %v2953, %v3233
  %v3235 = vpop.f32.mrb[0].mxu0
  %3236 = vmatprep.mubr.f32.mxu0 0.0
  %3237 = vmatmul.mubr.f32.gmra.mrb[0].mxu0 %v1696
  %v3238 = vpop.f32.mrb[0].mxu0
  %v3239 = vadd.f32 %v2960, %v3238
  %v3240 = vpop.f32.mrb[0].mxu0
  %3241 = vmatprep.mubr.f32.mxu0 0.0
  %3242 = vmatmul.mubr.f32.gmra.mrb[0].mxu0 %v1697
  %v3243 = vpop.f32.mrb[0].mxu0
  %v3244 = vadd.f32 %v2967, %v3243
  %v3245 = vpop.f32.mrb[0].mxu0
  %3246 = vmatprep.mubr.f32.mxu0 0.0
  %3247 = vmatmul.mubr.f32.gmra.mrb[0].mxu0 %v1698
  %v3248 = vpop.f32.mrb[0].mxu0
  %v3249 = vadd.f32 %v2974, %v3248
  %v3250 = vpop.f32.mrb[0].mxu0
  %3251 = vmatprep.mubr.f32.mxu0 0.0
  %3252 = vmatmul.mubr.f32.gmra.mrb[0].mxu0 %v1699
  %v3253 = vpop.f32.mrb[0].mxu0
  %v3254 = vadd.f32 %v2981, %v3253
  %v3255 = vpop.f32.mrb[0].mxu0
  %3256 = vdwg.mxu0
  %3257 = vmatprep.subr.mxu0 0.0
  %v3258 = vand.u32 %v1700, 4294901760
  %3259 = vmatpush1.msra.mxu0 %v3258
  %3260 = vmatprep.subr.mxu0 0.0
  %v3261 = vand.u32 %v1701, 4294901760
  %3262 = vmatpush1.msra.mxu0 %v3261
  %3263 = vmatprep.subr.mxu0 0.0
  %v3264 = vand.u32 %v1702, 4294901760
  %3265 = vmatpush1.msra.mxu0 %v3264
  %3266 = vmatprep.subr.mxu0 0.0
  %v3267 = vand.u32 %v1703, 4294901760
  %3268 = vmatpush1.msra.mxu0 %v3267
  %3269 = vmatprep.subr.mxu0 0.0
  %v3270 = vand.u32 %v1704, 4294901760
  %3271 = vmatpush1.msra.mxu0 %v3270
  %3272 = vmatprep.subr.mxu0 0.0
  %v3273 = vand.u32 %v1705, 4294901760
  %3274 = vmatpush1.msra.mxu0 %v3273
  %3275 = vmatprep.subr.mxu0 0.0
  %v3276 = vand.u32 %v1706, 4294901760
  %3277 = vmatpush1.msra.mxu0 %v3276
  %3278 = vmatprep.subr.mxu0 0.0
  %v3279 = vand.u32 %v1707, 4294901760
  %3280 = vmatpush1.msra.mxu0 %v3279
  %3281 = vmatprep.subr.mxu0 0.0
  %v3282 = vand.u32 %v1708, 4294901760
  %3283 = vmatpush1.msra.mxu0 %v3282
  %3284 = vmatprep.subr.mxu0 0.0
  %v3285 = vand.u32 %v1709, 4294901760
  %3286 = vmatpush1.msra.mxu0 %v3285
  %3287 = vmatprep.subr.mxu0 0.0
  %v3288 = vand.u32 %v1710, 4294901760
  %3289 = vmatpush1.msra.mxu0 %v3288
  %3290 = vmatprep.subr.mxu0 0.0
  %v3291 = vand.u32 %v1711, 4294901760
  %3292 = vmatpush1.msra.mxu0 %v3291
  %3293 = vmatprep.subr.mxu0 0.0
  %v3294 = vand.u32 %v1712, 4294901760
  %3295 = vmatpush1.msra.mxu0 %v3294
  %3296 = vmatprep.subr.mxu0 0.0
  %v3297 = vand.u32 %v1713, 4294901760
  %3298 = vmatpush1.msra.mxu0 %v3297
  %3299 = vmatprep.subr.mxu0 0.0
  %v3300 = vand.u32 %v1714, 4294901760
  %3301 = vmatpush1.msra.mxu0 %v3300
  %3302 = vmatprep.subr.mxu0 0.0
  %v3303 = vand.u32 %v1715, 4294901760
  %3304 = vmatpush1.msra.mxu0 %v3303
  %3305 = vmatprep.subr.mxu0 0.0
  %3306 = vmatpush1.msra.mxu0 0.0
  %3307 = vmatprep.subr.mxu0 0.0
  %3308 = vmatpush1.msra.mxu0 0.0
  %3309 = vmatprep.subr.mxu0 0.0
  %3310 = vmatpush1.msra.mxu0 0.0
  %3311 = vmatprep.subr.mxu0 0.0
  %3312 = vmatpush1.msra.mxu0 0.0
  %3313 = vmatprep.subr.mxu0 0.0
  %3314 = vmatpush1.msra.mxu0 0.0
  %3315 = vmatprep.subr.mxu0 0.0
  %3316 = vmatpush1.msra.mxu0 0.0
  %3317 = vmatprep.subr.mxu0 0.0
  %3318 = vmatpush1.msra.mxu0 0.0
  %3319 = vmatprep.subr.mxu0 0.0
  %3320 = vmatpush1.msra.mxu0 0.0
  %3321 = vmatprep.subr.mxu0 0.0
  %3322 = vmatpush1.msra.mxu0 0.0
  %3323 = vmatprep.subr.mxu0 0.0
  %3324 = vmatpush1.msra.mxu0 0.0
  %3325 = vmatprep.subr.mxu0 0.0
  %3326 = vmatpush1.msra.mxu0 0.0
  %3327 = vmatprep.subr.mxu0 0.0
  %3328 = vmatpush1.msra.mxu0 0.0
  %3329 = vmatprep.subr.mxu0 0.0
  %3330 = vmatpush1.msra.mxu0 0.0
  %3331 = vmatprep.subr.mxu0 0.0
  %3332 = vmatpush1.msra.mxu0 0.0
  %3333 = vmatprep.subr.mxu0 0.0
  %3334 = vmatpush1.msra.mxu0 0.0
  %3335 = vmatprep.subr.mxu0 0.0
  %3336 = vmatpush1.msra.mxu0 0.0
  %3337 = vmatprep.mubr.f32.mxu0 0.0
  %3338 = vmatmul.mubr.f32.gmra.mrb[0].mxu0 %v1668
  %v3339 = vpop.f32.mrb[0].mxu0
  %v3340 = vadd.f32 %v3099, %v3339
  %v3341 = vpop.f32.mrb[0].mxu0
  %3342 = vmatprep.mubr.f32.mxu0 0.0
  %3343 = vmatmul.mubr.f32.gmra.mrb[0].mxu0 %v1669
  %v3344 = vpop.f32.mrb[0].mxu0
  %v3345 = vadd.f32 %v3104, %v3344
  %v3346 = vpop.f32.mrb[0].mxu0
  %3347 = vmatprep.mubr.f32.mxu0 0.0
  %3348 = vmatmul.mubr.f32.gmra.mrb[0].mxu0 %v1670
  %v3349 = vpop.f32.mrb[0].mxu0
  %v3350 = vadd.f32 %v3109, %v3349
  %v3351 = vpop.f32.mrb[0].mxu0
  %3352 = vmatprep.mubr.f32.mxu0 0.0
  %3353 = vmatmul.mubr.f32.gmra.mrb[0].mxu0 %v1671
  %v3354 = vpop.f32.mrb[0].mxu0
  %v3355 = vadd.f32 %v3114, %v3354
  %v3356 = vpop.f32.mrb[0].mxu0
  %3357 = vmatprep.mubr.f32.mxu0 0.0
  %3358 = vmatmul.mubr.f32.gmra.mrb[0].mxu0 %v1672
  %v3359 = vpop.f32.mrb[0].mxu0
  %v3360 = vadd.f32 %v3119, %v3359
  %v3361 = vpop.f32.mrb[0].mxu0
  %3362 = vmatprep.mubr.f32.mxu0 0.0
  %3363 = vmatmul.mubr.f32.gmra.mrb[0].mxu0 %v1673
  %v3364 = vpop.f32.mrb[0].mxu0
  %v3365 = vadd.f32 %v3124, %v3364
  %v3366 = vpop.f32.mrb[0].mxu0
  %3367 = vmatprep.mubr.f32.mxu0 0.0
  %3368 = vmatmul.mubr.f32.gmra.mrb[0].mxu0 %v1674
  %v3369 = vpop.f32.mrb[0].mxu0
  %v3370 = vadd.f32 %v3129, %v3369
  %v3371 = vpop.f32.mrb[0].mxu0
  %3372 = vmatprep.mubr.f32.mxu0 0.0
  %3373 = vmatmul.mubr.f32.gmra.mrb[0].mxu0 %v1675
  %v3374 = vpop.f32.mrb[0].mxu0
  %v3375 = vadd.f32 %v3134, %v3374
  %v3376 = vpop.f32.mrb[0].mxu0
  %3377 = vmatprep.mubr.f32.mxu0 0.0
  %3378 = vmatmul.mubr.f32.gmra.mrb[0].mxu0 %v1676
  %v3379 = vpop.f32.mrb[0].mxu0
  %v3380 = vadd.f32 %v3139, %v3379
  %v3381 = vpop.f32.mrb[0].mxu0
  %3382 = vmatprep.mubr.f32.mxu0 0.0
  %3383 = vmatmul.mubr.f32.gmra.mrb[0].mxu0 %v1677
  %v3384 = vpop.f32.mrb[0].mxu0
  %v3385 = vadd.f32 %v3144, %v3384
  %v3386 = vpop.f32.mrb[0].mxu0
  %3387 = vmatprep.mubr.f32.mxu0 0.0
  %3388 = vmatmul.mubr.f32.gmra.mrb[0].mxu0 %v1678
  %v3389 = vpop.f32.mrb[0].mxu0
  %v3390 = vadd.f32 %v3149, %v3389
  %v3391 = vpop.f32.mrb[0].mxu0
  %3392 = vmatprep.mubr.f32.mxu0 0.0
  %3393 = vmatmul.mubr.f32.gmra.mrb[0].mxu0 %v1679
  %v3394 = vpop.f32.mrb[0].mxu0
  %v3395 = vadd.f32 %v3154, %v3394
  %v3396 = vpop.f32.mrb[0].mxu0
  %3397 = vmatprep.mubr.f32.mxu0 0.0
  %3398 = vmatmul.mubr.f32.gmra.mrb[0].mxu0 %v1680
  %v3399 = vpop.f32.mrb[0].mxu0
  %v3400 = vadd.f32 %v3159, %v3399
  %v3401 = vpop.f32.mrb[0].mxu0
  %3402 = vmatprep.mubr.f32.mxu0 0.0
  %3403 = vmatmul.mubr.f32.gmra.mrb[0].mxu0 %v1681
  %v3404 = vpop.f32.mrb[0].mxu0
  %v3405 = vadd.f32 %v3164, %v3404
  %v3406 = vpop.f32.mrb[0].mxu0
  %3407 = vmatprep.mubr.f32.mxu0 0.0
  %3408 = vmatmul.mubr.f32.gmra.mrb[0].mxu0 %v1682
  %v3409 = vpop.f32.mrb[0].mxu0
  %v3410 = vadd.f32 %v3169, %v3409
  %v3411 = vpop.f32.mrb[0].mxu0
  %3412 = vmatprep.mubr.f32.mxu0 0.0
  %3413 = vmatmul.mubr.f32.gmra.mrb[0].mxu0 %v1683
  %v3414 = vpop.f32.mrb[0].mxu0
  %v3415 = vadd.f32 %v3174, %v3414
  %v3416 = vpop.f32.mrb[0].mxu0
  %3417 = vmatprep.mubr.f32.mxu0 0.0
  %3418 = vmatmul.mubr.f32.gmra.mrb[0].mxu0 %v1684
  %v3419 = vpop.f32.mrb[0].mxu0
  %v3420 = vadd.f32 %v3179, %v3419
  %v3421 = vpop.f32.mrb[0].mxu0
  %3422 = vmatprep.mubr.f32.mxu0 0.0
  %3423 = vmatmul.mubr.f32.gmra.mrb[0].mxu0 %v1685
  %v3424 = vpop.f32.mrb[0].mxu0
  %v3425 = vadd.f32 %v3184, %v3424
  %v3426 = vpop.f32.mrb[0].mxu0
  %3427 = vmatprep.mubr.f32.mxu0 0.0
  %3428 = vmatmul.mubr.f32.gmra.mrb[0].mxu0 %v1686
  %v3429 = vpop.f32.mrb[0].mxu0
  %v3430 = vadd.f32 %v3189, %v3429
  %v3431 = vpop.f32.mrb[0].mxu0
  %3432 = vmatprep.mubr.f32.mxu0 0.0
  %3433 = vmatmul.mubr.f32.gmra.mrb[0].mxu0 %v1687
  %v3434 = vpop.f32.mrb[0].mxu0
  %v3435 = vadd.f32 %v3194, %v3434
  %v3436 = vpop.f32.mrb[0].mxu0
  %3437 = vmatprep.mubr.f32.mxu0 0.0
  %3438 = vmatmul.mubr.f32.gmra.mrb[0].mxu0 %v1688
  %v3439 = vpop.f32.mrb[0].mxu0
  %v3440 = vadd.f32 %v3199, %v3439
  %v3441 = vpop.f32.mrb[0].mxu0
  %3442 = vmatprep.mubr.f32.mxu0 0.0
  %3443 = vmatmul.mubr.f32.gmra.mrb[0].mxu0 %v1689
  %v3444 = vpop.f32.mrb[0].mxu0
  %v3445 = vadd.f32 %v3204, %v3444
  %v3446 = vpop.f32.mrb[0].mxu0
  %3447 = vmatprep.mubr.f32.mxu0 0.0
  %3448 = vmatmul.mubr.f32.gmra.mrb[0].mxu0 %v1690
  %v3449 = vpop.f32.mrb[0].mxu0
  %v3450 = vadd.f32 %v3209, %v3449
  %v3451 = vpop.f32.mrb[0].mxu0
  %3452 = vmatprep.mubr.f32.mxu0 0.0
  %3453 = vmatmul.mubr.f32.gmra.mrb[0].mxu0 %v1691
  %v3454 = vpop.f32.mrb[0].mxu0
  %v3455 = vadd.f32 %v3214, %v3454
  %v3456 = vpop.f32.mrb[0].mxu0
  %3457 = vmatprep.mubr.f32.mxu0 0.0
  %3458 = vmatmul.mubr.f32.gmra.mrb[0].mxu0 %v1692
  %v3459 = vpop.f32.mrb[0].mxu0
  %v3460 = vadd.f32 %v3219, %v3459
  %v3461 = vpop.f32.mrb[0].mxu0
  %3462 = vmatprep.mubr.f32.mxu0 0.0
  %3463 = vmatmul.mubr.f32.gmra.mrb[0].mxu0 %v1693
  %v3464 = vpop.f32.mrb[0].mxu0
  %v3465 = vadd.f32 %v3224, %v3464
  %v3466 = vpop.f32.mrb[0].mxu0
  %3467 = vmatprep.mubr.f32.mxu0 0.0
  %3468 = vmatmul.mubr.f32.gmra.mrb[0].mxu0 %v1694
  %v3469 = vpop.f32.mrb[0].mxu0
  %v3470 = vadd.f32 %v3229, %v3469
  %v3471 = vpop.f32.mrb[0].mxu0
  %3472 = vmatprep.mubr.f32.mxu0 0.0
  %3473 = vmatmul.mubr.f32.gmra.mrb[0].mxu0 %v1695
  %v3474 = vpop.f32.mrb[0].mxu0
  %v3475 = vadd.f32 %v3234, %v3474
  %v3476 = vpop.f32.mrb[0].mxu0
  %3477 = vmatprep.mubr.f32.mxu0 0.0
  %3478 = vmatmul.mubr.f32.gmra.mrb[0].mxu0 %v1696
  %v3479 = vpop.f32.mrb[0].mxu0
  %v3480 = vadd.f32 %v3239, %v3479
  %v3481 = vpop.f32.mrb[0].mxu0
  %3482 = vmatprep.mubr.f32.mxu0 0.0
  %3483 = vmatmul.mubr.f32.gmra.mrb[0].mxu0 %v1697
  %v3484 = vpop.f32.mrb[0].mxu0
  %v3485 = vadd.f32 %v3244, %v3484
  %v3486 = vpop.f32.mrb[0].mxu0
  %3487 = vmatprep.mubr.f32.mxu0 0.0
  %3488 = vmatmul.mubr.f32.gmra.mrb[0].mxu0 %v1698
  %v3489 = vpop.f32.mrb[0].mxu0
  %v3490 = vadd.f32 %v3249, %v3489
  %v3491 = vpop.f32.mrb[0].mxu0
  %3492 = vmatprep.mubr.f32.mxu0 0.0
  %3493 = vmatmul.mubr.f32.gmra.mrb[0].mxu0 %v1699
  %v3494 = vpop.f32.mrb[0].mxu0
  %v3495 = vadd.f32 %v3254, %v3494
  %v3496 = vpop.f32.mrb[0].mxu0
  %3497 = vdwg.mxu0
  %3498 = vst [vmem:[%s4] sm:$0xff] %v3340
  %3499 = vst [vmem:[%s4 + $0x8] sm:$0xff] %v3345
  %3500 = vst [vmem:[%s4 + $0x10] sm:$0xff] %v3350
  %3501 = vst [vmem:[%s4 + $0x18] sm:$0xff] %v3355
  %3502 = vst [vmem:[%s4 + $0x20] sm:$0xff] %v3360
  %3503 = vst [vmem:[%s4 + $0x28] sm:$0xff] %v3365
  %3504 = vst [vmem:[%s4 + $0x30] sm:$0xff] %v3370
  %3505 = vst [vmem:[%s4 + $0x38] sm:$0xff] %v3375
  %3506 = vst [vmem:[%s4 + $0x40] sm:$0xff] %v3380
  %3507 = vst [vmem:[%s4 + $0x48] sm:$0xff] %v3385
  %3508 = vst [vmem:[%s4 + $0x50] sm:$0xff] %v3390
  %3509 = vst [vmem:[%s4 + $0x58] sm:$0xff] %v3395
  %3510 = vst [vmem:[%s4 + $0x60] sm:$0xff] %v3400
  %3511 = vst [vmem:[%s4 + $0x68] sm:$0xff] %v3405
  %3512 = vst [vmem:[%s4 + $0x70] sm:$0xff] %v3410
  %3513 = vst [vmem:[%s4 + $0x78] sm:$0xff] %v3415
  %3514 = vst [vmem:[%s4 + $0x80] sm:$0xff] %v3420
  %3515 = vst [vmem:[%s4 + $0x88] sm:$0xff] %v3425
  %3516 = vst [vmem:[%s4 + $0x90] sm:$0xff] %v3430
  %3517 = vst [vmem:[%s4 + $0x98] sm:$0xff] %v3435
  %3518 = vst [vmem:[%s4 + $0xa0] sm:$0xff] %v3440
  %3519 = vst [vmem:[%s4 + $0xa8] sm:$0xff] %v3445
  %3520 = vst [vmem:[%s4 + $0xb0] sm:$0xff] %v3450
  %3521 = vst [vmem:[%s4 + $0xb8] sm:$0xff] %v3455
  %3522 = vst [vmem:[%s4 + $0xc0] sm:$0xff] %v3460
  %3523 = vst [vmem:[%s4 + $0xc8] sm:$0xff] %v3465
  %3524 = vst [vmem:[%s4 + $0xd0] sm:$0xff] %v3470
  %3525 = vst [vmem:[%s4 + $0xd8] sm:$0xff] %v3475
  %3526 = vst [vmem:[%s4 + $0xe0] sm:$0xff] %v3480
  %3527 = vst [vmem:[%s4 + $0xe8] sm:$0xff] %v3485
  %3528 = vst [vmem:[%s4 + $0xf0] sm:$0xff] %v3490
  %3529 = vst [vmem:[%s4 + $0xf8] sm:$0xff] %v3495
  // Predicated region
  $region14: #{eges_forward.1} parent=0 // pred_check
    _
  $region15: #{eges_forward.1} parent=0 // pred_check_branch
    %3531 = sbr.rel (0) target = $region17
  $region16: #{eges_forward.1} parent=0 // pred_region
    _
  $region17: #{eges_forward.1} parent=0 // pred_fallthru
    _
  // Predicated region
  $region18: #{eges_forward.1} parent=0 // pred_check
    _
  $region19: #{eges_forward.1} parent=0 // pred_check_branch
    %3533 = sbr.rel (0) target = $region21
  $region20: #{eges_forward.1} parent=0 // pred_region
    _
  $region21: #{eges_forward.1} parent=0 // pred_fallthru
    _
  // Predicated region
  $region22: #{eges_forward.1} parent=0 // pred_check
    _
  $region23: #{eges_forward.1} parent=0 // pred_check_branch
    %3535 = sbr.rel (0) target = $region25
  $region24: #{eges_forward.1} parent=0 // pred_region
    _
  $region25: #{eges_forward.1} parent=0 // pred_fallthru
    _
  // Predicated region
  $region26: #{eges_forward.1} parent=0 // pred_check
    _
  $region27: #{eges_forward.1} parent=0 // pred_check_branch
    %3537 = sbr.rel (0) target = $region29
  $region28: #{eges_forward.1} parent=0 // pred_region
    _
  $region29: #{eges_forward.1} parent=0 // pred_fallthru
    _

</llo_original>
